<compile_context>
chip_gen: v5e
topology: v5e:2x2
jax: 0.10.0
libtpu: 0.0.40
codegen_flags: <defaults>
</compile_context>

<pallas_src>
import functools

import jax
import jax.numpy as jnp
from jax import lax
from jax.experimental import pallas as pl
from jax.experimental.pallas import tpu as pltpu


def _round_up(x, m):
    return ((x + m - 1) // m) * m


def _vmem_physical_bytes():
    """Generation-aware VMEM capacity (v5e/v6e: 128 MiB, v7x per-TC: 64 MiB).

    Falls back to the most conservative figure if the query is unavailable.
    """
    try:
        info = pltpu.get_tpu_info()
        cap = getattr(info, "vmem_capacity_bytes", None)
        if cap:
            return int(cap)
    except Exception:
        pass
    return 64 * 1024 * 1024


def _skipgram_fused_kernel(
        # scalar-prefetch (SMEM) index refs, flattened & padded by the wrapper
        u_idx_ref, v_idx_ref, au_idx_ref, av_idx_ref,
        # HBM-resident embedding tables (memory_space=pl.ANY)
        u_tbl, v_tbl, au_tbl, av_tbl,
        # output block: (1, 1, 128); lane 0 = primary sum, lane 1 = aux sum
        out_ref,
        # scratch: gather staging buffers + DMA semaphores (0=primary, 1=aux)
        u_buf, v_buf, au_buf, av_buf, sems,
        *, batch, tile_b, np1_p, np1_a, window):
    t = pl.program_id(0)
    base = t * tile_b

    # ---------------- fused gather: per-row HBM->VMEM DMAs ----------------
    def _issue_row(r):
        g = base + r                                   # indices are padded -> always in range
        pltpu.make_async_copy(u_tbl.at[pl.ds(u_idx_ref[g], 1), :],
                              u_buf.at[pl.ds(r, 1), :], sems.at[0]).start()
        for j in range(np1_p):                         # static unroll, np1 is small
            pltpu.make_async_copy(
                v_tbl.at[pl.ds(v_idx_ref[g * np1_p + j], 1), :],
                v_buf.at[pl.ds(j * tile_b + r, 1), :], sems.at[0]).start()
        pltpu.make_async_copy(au_tbl.at[pl.ds(au_idx_ref[g], 1), :],
                              au_buf.at[pl.ds(r, 1), :], sems.at[1]).start()
        for j in range(np1_a):
            pltpu.make_async_copy(
                av_tbl.at[pl.ds(av_idx_ref[g * np1_a + j], 1), :],
                av_buf.at[pl.ds(j * tile_b + r, 1), :], sems.at[1]).start()

    def _wait_row():
        # Every copy in a stream moves exactly one (1, D) table row, so one
        # same-shaped dummy descriptor per issued copy drains the semaphore by
        # the right byte count (descriptor identity does not matter).
        pltpu.make_async_copy(u_tbl.at[pl.ds(0, 1), :],
                              u_buf.at[pl.ds(0, 1), :], sems.at[0]).wait()
        for _ in range(np1_p):
            pltpu.make_async_copy(v_tbl.at[pl.ds(0, 1), :],
                                  v_buf.at[pl.ds(0, 1), :], sems.at[0]).wait()
        pltpu.make_async_copy(au_tbl.at[pl.ds(0, 1), :],
                              au_buf.at[pl.ds(0, 1), :], sems.at[1]).wait()
        for _ in range(np1_a):
            pltpu.make_async_copy(av_tbl.at[pl.ds(0, 1), :],
                                  av_buf.at[pl.ds(0, 1), :], sems.at[1]).wait()

    w = max(1, min(window, tile_b))                    # rows kept in flight

    def _prologue(r, carry):
        _issue_row(r)
        return carry
    lax.fori_loop(0, w, _prologue, 0)

    def _steady(r, carry):
        _issue_row(r + w)                              # keep the DMA window full
        _wait_row()                                    # retire one row's worth
        return carry
    lax.fori_loop(0, tile_b - w, _steady, 0)

    def _epilogue(r, carry):
        _wait_row()
        return carry
    lax.fori_loop(0, w, _epilogue, 0)
    # TODO(synk): double-buffer the gather buffers across grid steps so the
    #   next tile's DMAs overlap this tile's compute.

    # ---------------- compute: fused dot + clip + softplus + sum ----------------
    row_in_tile = lax.broadcasted_iota(jnp.int32, (tile_b, 1), 0)
    valid = (base + row_in_tile) < batch               # masks the ragged last tile

    def _stream_loss(u_b, v_b, np1):
        u = u_b[...].astype(jnp.float32)                                   # (TB, D)
        acc = jnp.zeros((tile_b, 1), jnp.float32)
        for j in range(np1):                                               # static unroll
            vj = v_b[pl.ds(j * tile_b, tile_b), :].astype(jnp.float32)     # (TB, D)
            logit = jnp.sum(vj * u, axis=-1, keepdims=True)                # (TB, 1)
            logit = jnp.clip(logit, -10.0, 10.0)
            # j == 0 is the positive sample: -logsigmoid(x)  = softplus(-x)
            # j >= 1 are negatives:          -logsigmoid(-x) = softplus(+x)
            signed = -logit if j == 0 else logit
            acc = acc + jnp.log1p(jnp.exp(signed))                         # |signed| <= 10
        return jnp.sum(jnp.where(valid, acc, 0.0))

    primary = _stream_loss(u_buf, v_buf, np1_p)
    aux = _stream_loss(au_buf, av_buf, np1_a)

    lane = lax.broadcasted_iota(jnp.int32, (1, 1, 128), 2)
    out_ref[...] = jnp.where(lane == 0, primary,
                             jnp.where(lane == 1, aux, 0.0))


def skipgram_pair_loss(u_table, v_table, aux_u_table, aux_v_table,
                       pos_u, pos_v, neg_v, aux_pos_u, aux_pos_v, aux_neg_v,
                       *, max_tile_b=1024, dma_window_rows=8):
    """Returns (primary_loss, aux_loss); each is the batch mean of
    -logsigmoid(u.v_pos) - sum_n logsigmoid(-u.v_neg_n), with +/-10 clipping.

    The embedding gather is fused into the kernel (tables stay in HBM)."""
    assert u_table.dtype == v_table.dtype == aux_u_table.dtype == aux_v_table.dtype
    V, D = u_table.shape
    assert v_table.shape[1] == D and aux_u_table.shape[1] == D and aux_v_table.shape[1] == D
    B = pos_u.shape[0]
    np1_p = 1 + neg_v.shape[1]
    np1_a = 1 + aux_neg_v.shape[1]

    # ---- tile-size choice from PADDED VMEM bytes, generation-aware budget ----
    itemsize = jnp.dtype(u_table.dtype).itemsize
    lanes = _round_up(D, 128)                       # lane padding when D < 128 / not 128-multiple
    sub = 16 if itemsize == 2 else 8                # bf16 packs rows in sublane pairs
    phys = _vmem_physical_bytes()
    budget = (phys * 3) // 5                        # ~60%: headroom for IO blocks / temporaries
    bytes_per_batch_row = itemsize * lanes * (np1_p + 1 + np1_a + 1)
    tb = max(sub, budget // max(bytes_per_batch_row, 1))
    tb = min(tb, max(max_tile_b, sub))
    tb = max(sub, (tb // sub) * sub)
    tile_b = min(tb, _round_up(B, sub))             # never larger than the padded batch
    num_tiles = pl.cdiv(B, tile_b)
    bp = num_tiles * tile_b

    scratch_bytes = itemsize * lanes * tile_b * (np1_p + 1 + np1_a + 1)
    vmem_limit = min(int(phys * 9 // 10),
                     max(32 * 1024 * 1024, scratch_bytes + (8 << 20)))

    # ---- flattened, padded index arrays (SMEM scalar prefetch) ----
    # TODO(synk): for very large B, chunk the batch over multiple pallas_calls
    #   so the 1-D index arrays stay within the SMEM ceiling.
    def _pad_flat(idx, n):
        idx = jnp.asarray(idx, jnp.int32).reshape(-1)
        return jnp.pad(idx, (0, n - idx.shape[0]))

    u_idx = _pad_flat(pos_u, bp)
    au_idx = _pad_flat(aux_pos_u, bp)
    v_idx = _pad_flat(jnp.concatenate([jnp.asarray(pos_v)[:, None],
                                       jnp.asarray(neg_v)], axis=1), bp * np1_p)
    av_idx = _pad_flat(jnp.concatenate([jnp.asarray(aux_pos_v)[:, None],
                                        jnp.asarray(aux_neg_v)], axis=1), bp * np1_a)

    kernel = functools.partial(_skipgram_fused_kernel, batch=B, tile_b=tile_b,
                               np1_p=np1_p, np1_a=np1_a, window=dma_window_rows)

    grid_spec = pltpu.PrefetchScalarGridSpec(
        num_scalar_prefetch=4,
        grid=(num_tiles,),
        in_specs=[pl.BlockSpec(memory_space=pl.ANY)] * 4,   # tables stay in HBM
        out_specs=pl.BlockSpec((1, 1, 128),
                               lambda t, ui, vi, aui, avi: (t, 0, 0)),
        scratch_shapes=[
            pltpu.VMEM((tile_b, D), u_table.dtype),              # u rows
            pltpu.VMEM((np1_p * tile_b, D), v_table.dtype),       # pos+neg rows, flat & dense
            pltpu.VMEM((tile_b, D), aux_u_table.dtype),
            pltpu.VMEM((np1_a * tile_b, D), aux_v_table.dtype),
            pltpu.SemaphoreType.DMA((2,)),                         # 0 = primary, 1 = aux
        ])

    gathered_rows = B * (np1_p + 1 + np1_a + 1)
    cost = pl.CostEstimate(
        flops=int(4 * B * D * (np1_p + np1_a)),
        transcendentals=int(2 * B * (np1_p + np1_a)),
        bytes_accessed=int(gathered_rows * D * itemsize
                           + 4 * (2 * bp + bp * (np1_p + np1_a))
                           + num_tiles * 128 * 4))

    partials = pl.pallas_call(
        kernel,
        out_shape=jax.ShapeDtypeStruct((num_tiles, 1, 128), jnp.float32),
        grid_spec=grid_spec,
        compiler_params=pltpu.CompilerParams(
            # Tiles are independent -> shardable across TensorCores (v7x dual-TC).
            dimension_semantics=("parallel",),
            vmem_limit_bytes=int(vmem_limit)),
        cost_estimate=cost,
    )(u_idx, v_idx, au_idx, av_idx, u_table, v_table, aux_u_table, aux_v_table)

    sums = jnp.sum(partials[:, 0, :2], axis=0)      # (primary_sum, aux_sum)
    return sums[0] / B, sums[1] / B


class SkipGramModelJAX:
    """JAX/Pallas port of the torch SkipGramModel forward pass."""

    def __init__(self, vocab_size, aux_vocab_size, emb_dimension,
                 aux_emb_dimension, aux_ratio, revgrad=False, key=None):
        self.vocab_size = vocab_size
        self.emb_dimension = emb_dimension
        self.aux_vocab_size = aux_vocab_size
        self.aux_emb_dimension = aux_emb_dimension
        self.aux_ratio = aux_ratio
        self.revgrad = revgrad

        if key is None:
            key = jax.random.PRNGKey(0)
        k1, k2 = jax.random.split(key)
        initrange = 1.0 / emb_dimension
        aux_initrange = 1.0 / aux_emb_dimension
        # Matches the torch init exactly: u tables uniform, v tables zero.
        self.u_embeddings = jax.random.uniform(
            k1, (vocab_size, emb_dimension), jnp.float32, -initrange, initrange)
        self.v_embeddings = jnp.zeros((vocab_size, emb_dimension), jnp.float32)
        self.aux_u_embeddings = jax.random.uniform(
            k2, (aux_vocab_size, emb_dimension), jnp.float32,
            -aux_initrange, aux_initrange)
        self.aux_v_embeddings = jnp.zeros((aux_vocab_size, emb_dimension),
                                          jnp.float32)

    def forward(self, pos_u, pos_v, neg_v, aux_pos_u, aux_pos_v, aux_neg_v):
        # TODO(synk): grad_reverse (revgrad) only affects the backward pass; the
        #   forward is identity, so nothing to do here.
        return skipgram_pair_loss(
            self.u_embeddings, self.v_embeddings,
            self.aux_u_embeddings, self.aux_v_embeddings,
            pos_u, pos_v, neg_v, aux_pos_u, aux_pos_v, aux_neg_v)


def _reference_loss(emb_u, emb_v, emb_neg_v):
    """Pure-JAX mirror of the torch forward (per loss stream)."""
    score = jnp.sum(emb_u * emb_v, axis=1)
    score = jnp.clip(score, -10.0, 10.0)
    score = -jax.nn.log_sigmoid(score)
    neg = jnp.einsum("bnd,bd->bn", emb_neg_v, emb_u)
    neg = jnp.clip(neg, -10.0, 10.0)
    neg = -jnp.sum(jax.nn.log_sigmoid(-neg), axis=1)
    return jnp.mean(score + neg)


if __name__ == "__main__":
    key = jax.random.PRNGKey(0)
    (k_model, k_pu, k_pv, k_nv, k_apu, k_apv, k_anv,
     k_t1, k_t2, k_t3, k_t4, k_i1, k_i2, k_i3, k_i4, k_i5, k_i6) = (
        jax.random.split(key, 17))

    vocab_size, aux_vocab_size = 64, 32
    emb_dim, aux_emb_dim = 32, 16          # aux_emb_dim only sets the init range
    aux_ratio = 0.5
    B, N = 8, 8                            # batch, negatives per positive

    # ---- check 1: the module itself (torch-matching init: v tables are zero) ----
    model = SkipGramModelJAX(vocab_size, aux_vocab_size, emb_dim, aux_emb_dim,
                             aux_ratio, revgrad=False, key=k_model)
    pos_u = jax.random.randint(k_pu, (B,), 0, vocab_size)
    pos_v = jax.random.randint(k_pv, (B,), 0, vocab_size)
    neg_v = jax.random.randint(k_nv, (B, N), 0, vocab_size)
    aux_pos_u = jax.random.randint(k_apu, (B,), 0, aux_vocab_size)
    aux_pos_v = jax.random.randint(k_apv, (B,), 0, aux_vocab_size)
    aux_neg_v = jax.random.randint(k_anv, (B, N), 0, aux_vocab_size)

    primary_x, aux_x = model.forward(pos_u, pos_v, neg_v,
                                     aux_pos_u, aux_pos_v, aux_neg_v)
    primary_x = jax.block_until_ready(primary_x)
    aux_x = jax.block_until_ready(aux_x)

    ref_primary = _reference_loss(model.u_embeddings[pos_u],
                                  model.v_embeddings[pos_v],
                                  model.v_embeddings[neg_v])
    ref_aux = _reference_loss(model.aux_u_embeddings[aux_pos_u],
                              model.aux_v_embeddings[aux_pos_v],
                              model.aux_v_embeddings[aux_neg_v])
    assert jnp.allclose(primary_x, ref_primary, atol=1e-4, rtol=1e-4), (
        primary_x, ref_primary)
    assert jnp.allclose(aux_x, ref_aux, atol=1e-4, rtol=1e-4), (aux_x, ref_aux)

    # ---- check 2: non-trivial numerics, multi-tile + ragged tail, N_p != N_a ----
    B2, N2p, N2a = 20, 5, 3
    u_tbl = jax.random.normal(k_t1, (vocab_size, emb_dim), jnp.float32) * 0.3
    v_tbl = jax.random.normal(k_t2, (vocab_size, emb_dim), jnp.float32) * 0.3
    au_tbl = jax.random.normal(k_t3, (aux_vocab_size, emb_dim), jnp.float32) * 0.3
    av_tbl = jax.random.normal(k_t4, (aux_vocab_size, emb_dim), jnp.float32) * 0.3
    pu2 = jax.random.randint(k_i1, (B2,), 0, vocab_size)
    pv2 = jax.random.randint(k_i2, (B2,), 0, vocab_size)
    nv2 = jax.random.randint(k_i3, (B2, N2p), 0, vocab_size)
    apu2 = jax.random.randint(k_i4, (B2,), 0, aux_vocab_size)
    apv2 = jax.random.randint(k_i5, (B2,), 0, aux_vocab_size)
    anv2 = jax.random.randint(k_i6, (B2, N2a), 0, aux_vocab_size)

    p2, a2 = skipgram_pair_loss(u_tbl, v_tbl, au_tbl, av_tbl,
                                pu2, pv2, nv2, apu2, apv2, anv2,
                                max_tile_b=8)          # forces 3 tiles, ragged tail
    p2, a2 = jax.block_until_ready(p2), jax.block_until_ready(a2)
    ref_p2 = _reference_loss(u_tbl[pu2], v_tbl[pv2], v_tbl[nv2])
    ref_a2 = _reference_loss(au_tbl[apu2], av_tbl[apv2], av_tbl[anv2])
    assert jnp.allclose(p2, ref_p2, atol=1e-4, rtol=1e-4), (p2, ref_p2)
    assert jnp.allclose(a2, ref_a2, atol=1e-4, rtol=1e-4), (a2, ref_a2)

    # ---- check 3: bf16 table transfer path (halves gather bytes; f32 compute) ----
    u_b, v_b = u_tbl.astype(jnp.bfloat16), v_tbl.astype(jnp.bfloat16)
    au_b, av_b = au_tbl.astype(jnp.bfloat16), av_tbl.astype(jnp.bfloat16)
    p3, a3 = skipgram_pair_loss(u_b, v_b, au_b, av_b,
                                pu2, pv2, nv2, apu2, apv2, anv2)
    p3, a3 = jax.block_until_ready(p3), jax.block_until_ready(a3)
    ref_p3 = _reference_loss(u_b[pu2].astype(jnp.float32),
                             v_b[pv2].astype(jnp.float32),
                             v_b[nv2].astype(jnp.float32))
    ref_a3 = _reference_loss(au_b[apu2].astype(jnp.float32),
                             av_b[apv2].astype(jnp.float32),
                             av_b[anv2].astype(jnp.float32))
    assert jnp.allclose(p3, ref_p3, atol=1e-3, rtol=1e-3), (p3, ref_p3)
    assert jnp.allclose(a3, ref_a3, atol=1e-3, rtol=1e-3), (a3, ref_a3)

    print("KERNEL_OK")
</pallas_src>

<mosaic_0001>
module attributes {stable_mosaic.version = 11 : i64} {
  func.func @_skipgram_fused_kernel(%arg0: i32, %arg1: memref<8xi32, #tpu.memory_space<smem>>, %arg2: memref<72xi32, #tpu.memory_space<smem>>, %arg3: memref<8xi32, #tpu.memory_space<smem>>, %arg4: memref<72xi32, #tpu.memory_space<smem>>, %arg5: memref<64x32xf32, #tpu.memory_space<any>>, %arg6: memref<64x32xf32, #tpu.memory_space<any>>, %arg7: memref<32x32xf32, #tpu.memory_space<any>>, %arg8: memref<32x32xf32, #tpu.memory_space<any>>, %arg9: memref<1x1x128xf32, #tpu.memory_space<vmem>>, %arg10: memref<8x32xf32, #tpu.memory_space<vmem>>, %arg11: memref<72x32xf32, #tpu.memory_space<vmem>>, %arg12: memref<8x32xf32, #tpu.memory_space<vmem>>, %arg13: memref<72x32xf32, #tpu.memory_space<vmem>>, %arg14: memref<2x!tpu.dma_semaphore, #tpu.memory_space<semaphore_mem>>) attributes {dimension_semantics = [#tpu.dimension_semantics<parallel>], iteration_bounds = array<i64: 1>, scalar_prefetch = 4 : i64, scratch_operands = 5 : i64, tpu.core_type = #tpu.core_type<tc>, window_params = [{}, {}, {}, {}, {transform_indices = @transform_4, window_bounds = array<i64: 1, 1, 128>}]} {
    %c8_i32 = arith.constant 8 : i32
    %0 = arith.muli %arg0, %c8_i32 : i32
    %c0_i32 = arith.constant 0 : i32
    %c8_i32_0 = arith.constant 8 : i32
    %1 = arith.addi %c0_i32, %c8_i32_0 : i32
    %c1_i32 = arith.constant 1 : i32
    scf.for %arg15 = %c0_i32 to %1 step %c1_i32  : i32 {
      %238 = arith.addi %0, %arg15 : i32
      %239 = arith.index_cast %238 : i32 to index
      %240 = memref.load %arg1[%239] : memref<8xi32, #tpu.memory_space<smem>>
      %c0_i32_108 = arith.constant 0 : i32
      %c0_i32_109 = arith.constant 0 : i32
      %241 = tpu.memref_slice %arg5[%240, %c0_i32_109] : memref<64x32xf32, #tpu.memory_space<any>> -> memref<1x32xf32, #tpu.memory_space<any>>
      %c0_i32_110 = arith.constant 0 : i32
      %242 = tpu.memref_slice %arg10[%arg15, %c0_i32_110] : memref<8x32xf32, #tpu.memory_space<vmem>> -> memref<1x32xf32, #tpu.memory_space<vmem>>
      %243 = tpu.memref_slice %arg14[%c0_i32_108] : memref<2x!tpu.dma_semaphore, #tpu.memory_space<semaphore_mem>> -> memref<1x!tpu.dma_semaphore, #tpu.memory_space<semaphore_mem>>
      %244 = tpu.memref_squeeze %243 : memref<1x!tpu.dma_semaphore, #tpu.memory_space<semaphore_mem>> -> memref<!tpu.dma_semaphore, #tpu.memory_space<semaphore_mem>>
      tpu.enqueue_dma source(%241 : memref<1x32xf32, #tpu.memory_space<any>>) target(%242 : memref<1x32xf32, #tpu.memory_space<vmem>>) target_semaphore(%244 : memref<!tpu.dma_semaphore, #tpu.memory_space<semaphore_mem>>)
      %c9_i32 = arith.constant 9 : i32
      %245 = arith.muli %238, %c9_i32 : i32
      %c0_i32_111 = arith.constant 0 : i32
      %246 = arith.addi %245, %c0_i32_111 : i32
      %247 = arith.index_cast %246 : i32 to index
      %248 = memref.load %arg2[%247] : memref<72xi32, #tpu.memory_space<smem>>
      %c0_i32_112 = arith.constant 0 : i32
      %249 = arith.addi %c0_i32_112, %arg15 : i32
      %c0_i32_113 = arith.constant 0 : i32
      %c0_i32_114 = arith.constant 0 : i32
      %250 = tpu.memref_slice %arg6[%248, %c0_i32_114] : memref<64x32xf32, #tpu.memory_space<any>> -> memref<1x32xf32, #tpu.memory_space<any>>
      %c0_i32_115 = arith.constant 0 : i32
      %251 = tpu.memref_slice %arg11[%249, %c0_i32_115] : memref<72x32xf32, #tpu.memory_space<vmem>> -> memref<1x32xf32, #tpu.memory_space<vmem>>
      %252 = tpu.memref_slice %arg14[%c0_i32_113] : memref<2x!tpu.dma_semaphore, #tpu.memory_space<semaphore_mem>> -> memref<1x!tpu.dma_semaphore, #tpu.memory_space<semaphore_mem>>
      %253 = tpu.memref_squeeze %252 : memref<1x!tpu.dma_semaphore, #tpu.memory_space<semaphore_mem>> -> memref<!tpu.dma_semaphore, #tpu.memory_space<semaphore_mem>>
      tpu.enqueue_dma source(%250 : memref<1x32xf32, #tpu.memory_space<any>>) target(%251 : memref<1x32xf32, #tpu.memory_space<vmem>>) target_semaphore(%253 : memref<!tpu.dma_semaphore, #tpu.memory_space<semaphore_mem>>)
      %c9_i32_116 = arith.constant 9 : i32
      %254 = arith.muli %238, %c9_i32_116 : i32
      %c1_i32_117 = arith.constant 1 : i32
      %255 = arith.addi %254, %c1_i32_117 : i32
      %256 = arith.index_cast %255 : i32 to index
      %257 = memref.load %arg2[%256] : memref<72xi32, #tpu.memory_space<smem>>
      %c8_i32_118 = arith.constant 8 : i32
      %258 = arith.addi %c8_i32_118, %arg15 : i32
      %c0_i32_119 = arith.constant 0 : i32
      %c0_i32_120 = arith.constant 0 : i32
      %259 = tpu.memref_slice %arg6[%257, %c0_i32_120] : memref<64x32xf32, #tpu.memory_space<any>> -> memref<1x32xf32, #tpu.memory_space<any>>
      %c0_i32_121 = arith.constant 0 : i32
      %260 = tpu.memref_slice %arg11[%258, %c0_i32_121] : memref<72x32xf32, #tpu.memory_space<vmem>> -> memref<1x32xf32, #tpu.memory_space<vmem>>
      %261 = tpu.memref_slice %arg14[%c0_i32_119] : memref<2x!tpu.dma_semaphore, #tpu.memory_space<semaphore_mem>> -> memref<1x!tpu.dma_semaphore, #tpu.memory_space<semaphore_mem>>
      %262 = tpu.memref_squeeze %261 : memref<1x!tpu.dma_semaphore, #tpu.memory_space<semaphore_mem>> -> memref<!tpu.dma_semaphore, #tpu.memory_space<semaphore_mem>>
      tpu.enqueue_dma source(%259 : memref<1x32xf32, #tpu.memory_space<any>>) target(%260 : memref<1x32xf32, #tpu.memory_space<vmem>>) target_semaphore(%262 : memref<!tpu.dma_semaphore, #tpu.memory_space<semaphore_mem>>)
      %c9_i32_122 = arith.constant 9 : i32
      %263 = arith.muli %238, %c9_i32_122 : i32
      %c2_i32 = arith.constant 2 : i32
      %264 = arith.addi %263, %c2_i32 : i32
      %265 = arith.index_cast %264 : i32 to index
      %266 = memref.load %arg2[%265] : memref<72xi32, #tpu.memory_space<smem>>
      %c16_i32 = arith.constant 16 : i32
      %267 = arith.addi %c16_i32, %arg15 : i32
      %c0_i32_123 = arith.constant 0 : i32
      %c0_i32_124 = arith.constant 0 : i32
      %268 = tpu.memref_slice %arg6[%266, %c0_i32_124] : memref<64x32xf32, #tpu.memory_space<any>> -> memref<1x32xf32, #tpu.memory_space<any>>
      %c0_i32_125 = arith.constant 0 : i32
      %269 = tpu.memref_slice %arg11[%267, %c0_i32_125] : memref<72x32xf32, #tpu.memory_space<vmem>> -> memref<1x32xf32, #tpu.memory_space<vmem>>
      %270 = tpu.memref_slice %arg14[%c0_i32_123] : memref<2x!tpu.dma_semaphore, #tpu.memory_space<semaphore_mem>> -> memref<1x!tpu.dma_semaphore, #tpu.memory_space<semaphore_mem>>
      %271 = tpu.memref_squeeze %270 : memref<1x!tpu.dma_semaphore, #tpu.memory_space<semaphore_mem>> -> memref<!tpu.dma_semaphore, #tpu.memory_space<semaphore_mem>>
      tpu.enqueue_dma source(%268 : memref<1x32xf32, #tpu.memory_space<any>>) target(%269 : memref<1x32xf32, #tpu.memory_space<vmem>>) target_semaphore(%271 : memref<!tpu.dma_semaphore, #tpu.memory_space<semaphore_mem>>)
      %c9_i32_126 = arith.constant 9 : i32
      %272 = arith.muli %238, %c9_i32_126 : i32
      %c3_i32 = arith.constant 3 : i32
      %273 = arith.addi %272, %c3_i32 : i32
      %274 = arith.index_cast %273 : i32 to index
      %275 = memref.load %arg2[%274] : memref<72xi32, #tpu.memory_space<smem>>
      %c24_i32 = arith.constant 24 : i32
      %276 = arith.addi %c24_i32, %arg15 : i32
      %c0_i32_127 = arith.constant 0 : i32
      %c0_i32_128 = arith.constant 0 : i32
      %277 = tpu.memref_slice %arg6[%275, %c0_i32_128] : memref<64x32xf32, #tpu.memory_space<any>> -> memref<1x32xf32, #tpu.memory_space<any>>
      %c0_i32_129 = arith.constant 0 : i32
      %278 = tpu.memref_slice %arg11[%276, %c0_i32_129] : memref<72x32xf32, #tpu.memory_space<vmem>> -> memref<1x32xf32, #tpu.memory_space<vmem>>
      %279 = tpu.memref_slice %arg14[%c0_i32_127] : memref<2x!tpu.dma_semaphore, #tpu.memory_space<semaphore_mem>> -> memref<1x!tpu.dma_semaphore, #tpu.memory_space<semaphore_mem>>
      %280 = tpu.memref_squeeze %279 : memref<1x!tpu.dma_semaphore, #tpu.memory_space<semaphore_mem>> -> memref<!tpu.dma_semaphore, #tpu.memory_space<semaphore_mem>>
      tpu.enqueue_dma source(%277 : memref<1x32xf32, #tpu.memory_space<any>>) target(%278 : memref<1x32xf32, #tpu.memory_space<vmem>>) target_semaphore(%280 : memref<!tpu.dma_semaphore, #tpu.memory_space<semaphore_mem>>)
      %c9_i32_130 = arith.constant 9 : i32
      %281 = arith.muli %238, %c9_i32_130 : i32
      %c4_i32 = arith.constant 4 : i32
      %282 = arith.addi %281, %c4_i32 : i32
      %283 = arith.index_cast %282 : i32 to index
      %284 = memref.load %arg2[%283] : memref<72xi32, #tpu.memory_space<smem>>
      %c32_i32 = arith.constant 32 : i32
      %285 = arith.addi %c32_i32, %arg15 : i32
      %c0_i32_131 = arith.constant 0 : i32
      %c0_i32_132 = arith.constant 0 : i32
      %286 = tpu.memref_slice %arg6[%284, %c0_i32_132] : memref<64x32xf32, #tpu.memory_space<any>> -> memref<1x32xf32, #tpu.memory_space<any>>
      %c0_i32_133 = arith.constant 0 : i32
      %287 = tpu.memref_slice %arg11[%285, %c0_i32_133] : memref<72x32xf32, #tpu.memory_space<vmem>> -> memref<1x32xf32, #tpu.memory_space<vmem>>
      %288 = tpu.memref_slice %arg14[%c0_i32_131] : memref<2x!tpu.dma_semaphore, #tpu.memory_space<semaphore_mem>> -> memref<1x!tpu.dma_semaphore, #tpu.memory_space<semaphore_mem>>
      %289 = tpu.memref_squeeze %288 : memref<1x!tpu.dma_semaphore, #tpu.memory_space<semaphore_mem>> -> memref<!tpu.dma_semaphore, #tpu.memory_space<semaphore_mem>>
      tpu.enqueue_dma source(%286 : memref<1x32xf32, #tpu.memory_space<any>>) target(%287 : memref<1x32xf32, #tpu.memory_space<vmem>>) target_semaphore(%289 : memref<!tpu.dma_semaphore, #tpu.memory_space<semaphore_mem>>)
      %c9_i32_134 = arith.constant 9 : i32
      %290 = arith.muli %238, %c9_i32_134 : i32
      %c5_i32 = arith.constant 5 : i32
      %291 = arith.addi %290, %c5_i32 : i32
      %292 = arith.index_cast %291 : i32 to index
      %293 = memref.load %arg2[%292] : memref<72xi32, #tpu.memory_space<smem>>
      %c40_i32 = arith.constant 40 : i32
      %294 = arith.addi %c40_i32, %arg15 : i32
      %c0_i32_135 = arith.constant 0 : i32
      %c0_i32_136 = arith.constant 0 : i32
      %295 = tpu.memref_slice %arg6[%293, %c0_i32_136] : memref<64x32xf32, #tpu.memory_space<any>> -> memref<1x32xf32, #tpu.memory_space<any>>
      %c0_i32_137 = arith.constant 0 : i32
      %296 = tpu.memref_slice %arg11[%294, %c0_i32_137] : memref<72x32xf32, #tpu.memory_space<vmem>> -> memref<1x32xf32, #tpu.memory_space<vmem>>
      %297 = tpu.memref_slice %arg14[%c0_i32_135] : memref<2x!tpu.dma_semaphore, #tpu.memory_space<semaphore_mem>> -> memref<1x!tpu.dma_semaphore, #tpu.memory_space<semaphore_mem>>
      %298 = tpu.memref_squeeze %297 : memref<1x!tpu.dma_semaphore, #tpu.memory_space<semaphore_mem>> -> memref<!tpu.dma_semaphore, #tpu.memory_space<semaphore_mem>>
      tpu.enqueue_dma source(%295 : memref<1x32xf32, #tpu.memory_space<any>>) target(%296 : memref<1x32xf32, #tpu.memory_space<vmem>>) target_semaphore(%298 : memref<!tpu.dma_semaphore, #tpu.memory_space<semaphore_mem>>)
      %c9_i32_138 = arith.constant 9 : i32
      %299 = arith.muli %238, %c9_i32_138 : i32
      %c6_i32 = arith.constant 6 : i32
      %300 = arith.addi %299, %c6_i32 : i32
      %301 = arith.index_cast %300 : i32 to index
      %302 = memref.load %arg2[%301] : memref<72xi32, #tpu.memory_space<smem>>
      %c48_i32 = arith.constant 48 : i32
      %303 = arith.addi %c48_i32, %arg15 : i32
      %c0_i32_139 = arith.constant 0 : i32
      %c0_i32_140 = arith.constant 0 : i32
      %304 = tpu.memref_slice %arg6[%302, %c0_i32_140] : memref<64x32xf32, #tpu.memory_space<any>> -> memref<1x32xf32, #tpu.memory_space<any>>
      %c0_i32_141 = arith.constant 0 : i32
      %305 = tpu.memref_slice %arg11[%303, %c0_i32_141] : memref<72x32xf32, #tpu.memory_space<vmem>> -> memref<1x32xf32, #tpu.memory_space<vmem>>
      %306 = tpu.memref_slice %arg14[%c0_i32_139] : memref<2x!tpu.dma_semaphore, #tpu.memory_space<semaphore_mem>> -> memref<1x!tpu.dma_semaphore, #tpu.memory_space<semaphore_mem>>
      %307 = tpu.memref_squeeze %306 : memref<1x!tpu.dma_semaphore, #tpu.memory_space<semaphore_mem>> -> memref<!tpu.dma_semaphore, #tpu.memory_space<semaphore_mem>>
      tpu.enqueue_dma source(%304 : memref<1x32xf32, #tpu.memory_space<any>>) target(%305 : memref<1x32xf32, #tpu.memory_space<vmem>>) target_semaphore(%307 : memref<!tpu.dma_semaphore, #tpu.memory_space<semaphore_mem>>)
      %c9_i32_142 = arith.constant 9 : i32
      %308 = arith.muli %238, %c9_i32_142 : i32
      %c7_i32 = arith.constant 7 : i32
      %309 = arith.addi %308, %c7_i32 : i32
      %310 = arith.index_cast %309 : i32 to index
      %311 = memref.load %arg2[%310] : memref<72xi32, #tpu.memory_space<smem>>
      %c56_i32 = arith.constant 56 : i32
      %312 = arith.addi %c56_i32, %arg15 : i32
      %c0_i32_143 = arith.constant 0 : i32
      %c0_i32_144 = arith.constant 0 : i32
      %313 = tpu.memref_slice %arg6[%311, %c0_i32_144] : memref<64x32xf32, #tpu.memory_space<any>> -> memref<1x32xf32, #tpu.memory_space<any>>
      %c0_i32_145 = arith.constant 0 : i32
      %314 = tpu.memref_slice %arg11[%312, %c0_i32_145] : memref<72x32xf32, #tpu.memory_space<vmem>> -> memref<1x32xf32, #tpu.memory_space<vmem>>
      %315 = tpu.memref_slice %arg14[%c0_i32_143] : memref<2x!tpu.dma_semaphore, #tpu.memory_space<semaphore_mem>> -> memref<1x!tpu.dma_semaphore, #tpu.memory_space<semaphore_mem>>
      %316 = tpu.memref_squeeze %315 : memref<1x!tpu.dma_semaphore, #tpu.memory_space<semaphore_mem>> -> memref<!tpu.dma_semaphore, #tpu.memory_space<semaphore_mem>>
      tpu.enqueue_dma source(%313 : memref<1x32xf32, #tpu.memory_space<any>>) target(%314 : memref<1x32xf32, #tpu.memory_space<vmem>>) target_semaphore(%316 : memref<!tpu.dma_semaphore, #tpu.memory_space<semaphore_mem>>)
      %c9_i32_146 = arith.constant 9 : i32
      %317 = arith.muli %238, %c9_i32_146 : i32
      %c8_i32_147 = arith.constant 8 : i32
      %318 = arith.addi %317, %c8_i32_147 : i32
      %319 = arith.index_cast %318 : i32 to index
      %320 = memref.load %arg2[%319] : memref<72xi32, #tpu.memory_space<smem>>
      %c64_i32 = arith.constant 64 : i32
      %321 = arith.addi %c64_i32, %arg15 : i32
      %c0_i32_148 = arith.constant 0 : i32
      %c0_i32_149 = arith.constant 0 : i32
      %322 = tpu.memref_slice %arg6[%320, %c0_i32_149] : memref<64x32xf32, #tpu.memory_space<any>> -> memref<1x32xf32, #tpu.memory_space<any>>
      %c0_i32_150 = arith.constant 0 : i32
      %323 = tpu.memref_slice %arg11[%321, %c0_i32_150] : memref<72x32xf32, #tpu.memory_space<vmem>> -> memref<1x32xf32, #tpu.memory_space<vmem>>
      %324 = tpu.memref_slice %arg14[%c0_i32_148] : memref<2x!tpu.dma_semaphore, #tpu.memory_space<semaphore_mem>> -> memref<1x!tpu.dma_semaphore, #tpu.memory_space<semaphore_mem>>
      %325 = tpu.memref_squeeze %324 : memref<1x!tpu.dma_semaphore, #tpu.memory_space<semaphore_mem>> -> memref<!tpu.dma_semaphore, #tpu.memory_space<semaphore_mem>>
      tpu.enqueue_dma source(%322 : memref<1x32xf32, #tpu.memory_space<any>>) target(%323 : memref<1x32xf32, #tpu.memory_space<vmem>>) target_semaphore(%325 : memref<!tpu.dma_semaphore, #tpu.memory_space<semaphore_mem>>)
      %326 = arith.index_cast %238 : i32 to index
      %327 = memref.load %arg3[%326] : memref<8xi32, #tpu.memory_space<smem>>
      %c1_i32_151 = arith.constant 1 : i32
      %c0_i32_152 = arith.constant 0 : i32
      %328 = tpu.memref_slice %arg7[%327, %c0_i32_152] : memref<32x32xf32, #tpu.memory_space<any>> -> memref<1x32xf32, #tpu.memory_space<any>>
      %c0_i32_153 = arith.constant 0 : i32
      %329 = tpu.memref_slice %arg12[%arg15, %c0_i32_153] : memref<8x32xf32, #tpu.memory_space<vmem>> -> memref<1x32xf32, #tpu.memory_space<vmem>>
      %330 = tpu.memref_slice %arg14[%c1_i32_151] : memref<2x!tpu.dma_semaphore, #tpu.memory_space<semaphore_mem>> -> memref<1x!tpu.dma_semaphore, #tpu.memory_space<semaphore_mem>>
      %331 = tpu.memref_squeeze %330 : memref<1x!tpu.dma_semaphore, #tpu.memory_space<semaphore_mem>> -> memref<!tpu.dma_semaphore, #tpu.memory_space<semaphore_mem>>
      tpu.enqueue_dma source(%328 : memref<1x32xf32, #tpu.memory_space<any>>) target(%329 : memref<1x32xf32, #tpu.memory_space<vmem>>) target_semaphore(%331 : memref<!tpu.dma_semaphore, #tpu.memory_space<semaphore_mem>>)
      %c9_i32_154 = arith.constant 9 : i32
      %332 = arith.muli %238, %c9_i32_154 : i32
      %c0_i32_155 = arith.constant 0 : i32
      %333 = arith.addi %332, %c0_i32_155 : i32
      %334 = arith.index_cast %333 : i32 to index
      %335 = memref.load %arg4[%334] : memref<72xi32, #tpu.memory_space<smem>>
      %c0_i32_156 = arith.constant 0 : i32
      %336 = arith.addi %c0_i32_156, %arg15 : i32
      %c1_i32_157 = arith.constant 1 : i32
      %c0_i32_158 = arith.constant 0 : i32
      %337 = tpu.memref_slice %arg8[%335, %c0_i32_158] : memref<32x32xf32, #tpu.memory_space<any>> -> memref<1x32xf32, #tpu.memory_space<any>>
      %c0_i32_159 = arith.constant 0 : i32
      %338 = tpu.memref_slice %arg13[%336, %c0_i32_159] : memref<72x32xf32, #tpu.memory_space<vmem>> -> memref<1x32xf32, #tpu.memory_space<vmem>>
      %339 = tpu.memref_slice %arg14[%c1_i32_157] : memref<2x!tpu.dma_semaphore, #tpu.memory_space<semaphore_mem>> -> memref<1x!tpu.dma_semaphore, #tpu.memory_space<semaphore_mem>>
      %340 = tpu.memref_squeeze %339 : memref<1x!tpu.dma_semaphore, #tpu.memory_space<semaphore_mem>> -> memref<!tpu.dma_semaphore, #tpu.memory_space<semaphore_mem>>
      tpu.enqueue_dma source(%337 : memref<1x32xf32, #tpu.memory_space<any>>) target(%338 : memref<1x32xf32, #tpu.memory_space<vmem>>) target_semaphore(%340 : memref<!tpu.dma_semaphore, #tpu.memory_space<semaphore_mem>>)
      %c9_i32_160 = arith.constant 9 : i32
      %341 = arith.muli %238, %c9_i32_160 : i32
      %c1_i32_161 = arith.constant 1 : i32
      %342 = arith.addi %341, %c1_i32_161 : i32
      %343 = arith.index_cast %342 : i32 to index
      %344 = memref.load %arg4[%343] : memref<72xi32, #tpu.memory_space<smem>>
      %c8_i32_162 = arith.constant 8 : i32
      %345 = arith.addi %c8_i32_162, %arg15 : i32
      %c1_i32_163 = arith.constant 1 : i32
      %c0_i32_164 = arith.constant 0 : i32
      %346 = tpu.memref_slice %arg8[%344, %c0_i32_164] : memref<32x32xf32, #tpu.memory_space<any>> -> memref<1x32xf32, #tpu.memory_space<any>>
      %c0_i32_165 = arith.constant 0 : i32
      %347 = tpu.memref_slice %arg13[%345, %c0_i32_165] : memref<72x32xf32, #tpu.memory_space<vmem>> -> memref<1x32xf32, #tpu.memory_space<vmem>>
      %348 = tpu.memref_slice %arg14[%c1_i32_163] : memref<2x!tpu.dma_semaphore, #tpu.memory_space<semaphore_mem>> -> memref<1x!tpu.dma_semaphore, #tpu.memory_space<semaphore_mem>>
      %349 = tpu.memref_squeeze %348 : memref<1x!tpu.dma_semaphore, #tpu.memory_space<semaphore_mem>> -> memref<!tpu.dma_semaphore, #tpu.memory_space<semaphore_mem>>
      tpu.enqueue_dma source(%346 : memref<1x32xf32, #tpu.memory_space<any>>) target(%347 : memref<1x32xf32, #tpu.memory_space<vmem>>) target_semaphore(%349 : memref<!tpu.dma_semaphore, #tpu.memory_space<semaphore_mem>>)
      %c9_i32_166 = arith.constant 9 : i32
      %350 = arith.muli %238, %c9_i32_166 : i32
      %c2_i32_167 = arith.constant 2 : i32
      %351 = arith.addi %350, %c2_i32_167 : i32
      %352 = arith.index_cast %351 : i32 to index
      %353 = memref.load %arg4[%352] : memref<72xi32, #tpu.memory_space<smem>>
      %c16_i32_168 = arith.constant 16 : i32
      %354 = arith.addi %c16_i32_168, %arg15 : i32
      %c1_i32_169 = arith.constant 1 : i32
      %c0_i32_170 = arith.constant 0 : i32
      %355 = tpu.memref_slice %arg8[%353, %c0_i32_170] : memref<32x32xf32, #tpu.memory_space<any>> -> memref<1x32xf32, #tpu.memory_space<any>>
      %c0_i32_171 = arith.constant 0 : i32
      %356 = tpu.memref_slice %arg13[%354, %c0_i32_171] : memref<72x32xf32, #tpu.memory_space<vmem>> -> memref<1x32xf32, #tpu.memory_space<vmem>>
      %357 = tpu.memref_slice %arg14[%c1_i32_169] : memref<2x!tpu.dma_semaphore, #tpu.memory_space<semaphore_mem>> -> memref<1x!tpu.dma_semaphore, #tpu.memory_space<semaphore_mem>>
      %358 = tpu.memref_squeeze %357 : memref<1x!tpu.dma_semaphore, #tpu.memory_space<semaphore_mem>> -> memref<!tpu.dma_semaphore, #tpu.memory_space<semaphore_mem>>
      tpu.enqueue_dma source(%355 : memref<1x32xf32, #tpu.memory_space<any>>) target(%356 : memref<1x32xf32, #tpu.memory_space<vmem>>) target_semaphore(%358 : memref<!tpu.dma_semaphore, #tpu.memory_space<semaphore_mem>>)
      %c9_i32_172 = arith.constant 9 : i32
      %359 = arith.muli %238, %c9_i32_172 : i32
      %c3_i32_173 = arith.constant 3 : i32
      %360 = arith.addi %359, %c3_i32_173 : i32
      %361 = arith.index_cast %360 : i32 to index
      %362 = memref.load %arg4[%361] : memref<72xi32, #tpu.memory_space<smem>>
      %c24_i32_174 = arith.constant 24 : i32
      %363 = arith.addi %c24_i32_174, %arg15 : i32
      %c1_i32_175 = arith.constant 1 : i32
      %c0_i32_176 = arith.constant 0 : i32
      %364 = tpu.memref_slice %arg8[%362, %c0_i32_176] : memref<32x32xf32, #tpu.memory_space<any>> -> memref<1x32xf32, #tpu.memory_space<any>>
      %c0_i32_177 = arith.constant 0 : i32
      %365 = tpu.memref_slice %arg13[%363, %c0_i32_177] : memref<72x32xf32, #tpu.memory_space<vmem>> -> memref<1x32xf32, #tpu.memory_space<vmem>>
      %366 = tpu.memref_slice %arg14[%c1_i32_175] : memref<2x!tpu.dma_semaphore, #tpu.memory_space<semaphore_mem>> -> memref<1x!tpu.dma_semaphore, #tpu.memory_space<semaphore_mem>>
      %367 = tpu.memref_squeeze %366 : memref<1x!tpu.dma_semaphore, #tpu.memory_space<semaphore_mem>> -> memref<!tpu.dma_semaphore, #tpu.memory_space<semaphore_mem>>
      tpu.enqueue_dma source(%364 : memref<1x32xf32, #tpu.memory_space<any>>) target(%365 : memref<1x32xf32, #tpu.memory_space<vmem>>) target_semaphore(%367 : memref<!tpu.dma_semaphore, #tpu.memory_space<semaphore_mem>>)
      %c9_i32_178 = arith.constant 9 : i32
      %368 = arith.muli %238, %c9_i32_178 : i32
      %c4_i32_179 = arith.constant 4 : i32
      %369 = arith.addi %368, %c4_i32_179 : i32
      %370 = arith.index_cast %369 : i32 to index
      %371 = memref.load %arg4[%370] : memref<72xi32, #tpu.memory_space<smem>>
      %c32_i32_180 = arith.constant 32 : i32
      %372 = arith.addi %c32_i32_180, %arg15 : i32
      %c1_i32_181 = arith.constant 1 : i32
      %c0_i32_182 = arith.constant 0 : i32
      %373 = tpu.memref_slice %arg8[%371, %c0_i32_182] : memref<32x32xf32, #tpu.memory_space<any>> -> memref<1x32xf32, #tpu.memory_space<any>>
      %c0_i32_183 = arith.constant 0 : i32
      %374 = tpu.memref_slice %arg13[%372, %c0_i32_183] : memref<72x32xf32, #tpu.memory_space<vmem>> -> memref<1x32xf32, #tpu.memory_space<vmem>>
      %375 = tpu.memref_slice %arg14[%c1_i32_181] : memref<2x!tpu.dma_semaphore, #tpu.memory_space<semaphore_mem>> -> memref<1x!tpu.dma_semaphore, #tpu.memory_space<semaphore_mem>>
      %376 = tpu.memref_squeeze %375 : memref<1x!tpu.dma_semaphore, #tpu.memory_space<semaphore_mem>> -> memref<!tpu.dma_semaphore, #tpu.memory_space<semaphore_mem>>
      tpu.enqueue_dma source(%373 : memref<1x32xf32, #tpu.memory_space<any>>) target(%374 : memref<1x32xf32, #tpu.memory_space<vmem>>) target_semaphore(%376 : memref<!tpu.dma_semaphore, #tpu.memory_space<semaphore_mem>>)
      %c9_i32_184 = arith.constant 9 : i32
      %377 = arith.muli %238, %c9_i32_184 : i32
      %c5_i32_185 = arith.constant 5 : i32
      %378 = arith.addi %377, %c5_i32_185 : i32
      %379 = arith.index_cast %378 : i32 to index
      %380 = memref.load %arg4[%379] : memref<72xi32, #tpu.memory_space<smem>>
      %c40_i32_186 = arith.constant 40 : i32
      %381 = arith.addi %c40_i32_186, %arg15 : i32
      %c1_i32_187 = arith.constant 1 : i32
      %c0_i32_188 = arith.constant 0 : i32
      %382 = tpu.memref_slice %arg8[%380, %c0_i32_188] : memref<32x32xf32, #tpu.memory_space<any>> -> memref<1x32xf32, #tpu.memory_space<any>>
      %c0_i32_189 = arith.constant 0 : i32
      %383 = tpu.memref_slice %arg13[%381, %c0_i32_189] : memref<72x32xf32, #tpu.memory_space<vmem>> -> memref<1x32xf32, #tpu.memory_space<vmem>>
      %384 = tpu.memref_slice %arg14[%c1_i32_187] : memref<2x!tpu.dma_semaphore, #tpu.memory_space<semaphore_mem>> -> memref<1x!tpu.dma_semaphore, #tpu.memory_space<semaphore_mem>>
      %385 = tpu.memref_squeeze %384 : memref<1x!tpu.dma_semaphore, #tpu.memory_space<semaphore_mem>> -> memref<!tpu.dma_semaphore, #tpu.memory_space<semaphore_mem>>
      tpu.enqueue_dma source(%382 : memref<1x32xf32, #tpu.memory_space<any>>) target(%383 : memref<1x32xf32, #tpu.memory_space<vmem>>) target_semaphore(%385 : memref<!tpu.dma_semaphore, #tpu.memory_space<semaphore_mem>>)
      %c9_i32_190 = arith.constant 9 : i32
      %386 = arith.muli %238, %c9_i32_190 : i32
      %c6_i32_191 = arith.constant 6 : i32
      %387 = arith.addi %386, %c6_i32_191 : i32
      %388 = arith.index_cast %387 : i32 to index
      %389 = memref.load %arg4[%388] : memref<72xi32, #tpu.memory_space<smem>>
      %c48_i32_192 = arith.constant 48 : i32
      %390 = arith.addi %c48_i32_192, %arg15 : i32
      %c1_i32_193 = arith.constant 1 : i32
      %c0_i32_194 = arith.constant 0 : i32
      %391 = tpu.memref_slice %arg8[%389, %c0_i32_194] : memref<32x32xf32, #tpu.memory_space<any>> -> memref<1x32xf32, #tpu.memory_space<any>>
      %c0_i32_195 = arith.constant 0 : i32
      %392 = tpu.memref_slice %arg13[%390, %c0_i32_195] : memref<72x32xf32, #tpu.memory_space<vmem>> -> memref<1x32xf32, #tpu.memory_space<vmem>>
      %393 = tpu.memref_slice %arg14[%c1_i32_193] : memref<2x!tpu.dma_semaphore, #tpu.memory_space<semaphore_mem>> -> memref<1x!tpu.dma_semaphore, #tpu.memory_space<semaphore_mem>>
      %394 = tpu.memref_squeeze %393 : memref<1x!tpu.dma_semaphore, #tpu.memory_space<semaphore_mem>> -> memref<!tpu.dma_semaphore, #tpu.memory_space<semaphore_mem>>
      tpu.enqueue_dma source(%391 : memref<1x32xf32, #tpu.memory_space<any>>) target(%392 : memref<1x32xf32, #tpu.memory_space<vmem>>) target_semaphore(%394 : memref<!tpu.dma_semaphore, #tpu.memory_space<semaphore_mem>>)
      %c9_i32_196 = arith.constant 9 : i32
      %395 = arith.muli %238, %c9_i32_196 : i32
      %c7_i32_197 = arith.constant 7 : i32
      %396 = arith.addi %395, %c7_i32_197 : i32
      %397 = arith.index_cast %396 : i32 to index
      %398 = memref.load %arg4[%397] : memref<72xi32, #tpu.memory_space<smem>>
      %c56_i32_198 = arith.constant 56 : i32
      %399 = arith.addi %c56_i32_198, %arg15 : i32
      %c1_i32_199 = arith.constant 1 : i32
      %c0_i32_200 = arith.constant 0 : i32
      %400 = tpu.memref_slice %arg8[%398, %c0_i32_200] : memref<32x32xf32, #tpu.memory_space<any>> -> memref<1x32xf32, #tpu.memory_space<any>>
      %c0_i32_201 = arith.constant 0 : i32
      %401 = tpu.memref_slice %arg13[%399, %c0_i32_201] : memref<72x32xf32, #tpu.memory_space<vmem>> -> memref<1x32xf32, #tpu.memory_space<vmem>>
      %402 = tpu.memref_slice %arg14[%c1_i32_199] : memref<2x!tpu.dma_semaphore, #tpu.memory_space<semaphore_mem>> -> memref<1x!tpu.dma_semaphore, #tpu.memory_space<semaphore_mem>>
      %403 = tpu.memref_squeeze %402 : memref<1x!tpu.dma_semaphore, #tpu.memory_space<semaphore_mem>> -> memref<!tpu.dma_semaphore, #tpu.memory_space<semaphore_mem>>
      tpu.enqueue_dma source(%400 : memref<1x32xf32, #tpu.memory_space<any>>) target(%401 : memref<1x32xf32, #tpu.memory_space<vmem>>) target_semaphore(%403 : memref<!tpu.dma_semaphore, #tpu.memory_space<semaphore_mem>>)
      %c9_i32_202 = arith.constant 9 : i32
      %404 = arith.muli %238, %c9_i32_202 : i32
      %c8_i32_203 = arith.constant 8 : i32
      %405 = arith.addi %404, %c8_i32_203 : i32
      %406 = arith.index_cast %405 : i32 to index
      %407 = memref.load %arg4[%406] : memref<72xi32, #tpu.memory_space<smem>>
      %c64_i32_204 = arith.constant 64 : i32
      %408 = arith.addi %c64_i32_204, %arg15 : i32
      %c1_i32_205 = arith.constant 1 : i32
      %c0_i32_206 = arith.constant 0 : i32
      %409 = tpu.memref_slice %arg8[%407, %c0_i32_206] : memref<32x32xf32, #tpu.memory_space<any>> -> memref<1x32xf32, #tpu.memory_space<any>>
      %c0_i32_207 = arith.constant 0 : i32
      %410 = tpu.memref_slice %arg13[%408, %c0_i32_207] : memref<72x32xf32, #tpu.memory_space<vmem>> -> memref<1x32xf32, #tpu.memory_space<vmem>>
      %411 = tpu.memref_slice %arg14[%c1_i32_205] : memref<2x!tpu.dma_semaphore, #tpu.memory_space<semaphore_mem>> -> memref<1x!tpu.dma_semaphore, #tpu.memory_space<semaphore_mem>>
      %412 = tpu.memref_squeeze %411 : memref<1x!tpu.dma_semaphore, #tpu.memory_space<semaphore_mem>> -> memref<!tpu.dma_semaphore, #tpu.memory_space<semaphore_mem>>
      tpu.enqueue_dma source(%409 : memref<1x32xf32, #tpu.memory_space<any>>) target(%410 : memref<1x32xf32, #tpu.memory_space<vmem>>) target_semaphore(%412 : memref<!tpu.dma_semaphore, #tpu.memory_space<semaphore_mem>>)
    }
    %c8_i32_1 = arith.constant 8 : i32
    %c0_i32_2 = arith.constant 0 : i32
    %c0_i32_3 = arith.constant 0 : i32
    %2 = arith.addi %c0_i32_2, %c0_i32_3 : i32
    %c1_i32_4 = arith.constant 1 : i32
    scf.for %arg15 = %c0_i32_2 to %2 step %c1_i32_4  : i32 {
      %c8_i32_108 = arith.constant 8 : i32
      %238 = arith.addi %arg15, %c8_i32_108 : i32
      %239 = arith.addi %0, %238 : i32
      %240 = arith.index_cast %239 : i32 to index
      %241 = memref.load %arg1[%240] : memref<8xi32, #tpu.memory_space<smem>>
      %c0_i32_109 = arith.constant 0 : i32
      %c0_i32_110 = arith.constant 0 : i32
      %242 = tpu.memref_slice %arg5[%241, %c0_i32_110] : memref<64x32xf32, #tpu.memory_space<any>> -> memref<1x32xf32, #tpu.memory_space<any>>
      %c0_i32_111 = arith.constant 0 : i32
      %243 = tpu.memref_slice %arg10[%238, %c0_i32_111] : memref<8x32xf32, #tpu.memory_space<vmem>> -> memref<1x32xf32, #tpu.memory_space<vmem>>
      %244 = tpu.memref_slice %arg14[%c0_i32_109] : memref<2x!tpu.dma_semaphore, #tpu.memory_space<semaphore_mem>> -> memref<1x!tpu.dma_semaphore, #tpu.memory_space<semaphore_mem>>
      %245 = tpu.memref_squeeze %244 : memref<1x!tpu.dma_semaphore, #tpu.memory_space<semaphore_mem>> -> memref<!tpu.dma_semaphore, #tpu.memory_space<semaphore_mem>>
      tpu.enqueue_dma source(%242 : memref<1x32xf32, #tpu.memory_space<any>>) target(%243 : memref<1x32xf32, #tpu.memory_space<vmem>>) target_semaphore(%245 : memref<!tpu.dma_semaphore, #tpu.memory_space<semaphore_mem>>)
      %c9_i32 = arith.constant 9 : i32
      %246 = arith.muli %239, %c9_i32 : i32
      %c0_i32_112 = arith.constant 0 : i32
      %247 = arith.addi %246, %c0_i32_112 : i32
      %248 = arith.index_cast %247 : i32 to index
      %249 = memref.load %arg2[%248] : memref<72xi32, #tpu.memory_space<smem>>
      %c0_i32_113 = arith.constant 0 : i32
      %250 = arith.addi %c0_i32_113, %238 : i32
      %c0_i32_114 = arith.constant 0 : i32
      %c0_i32_115 = arith.constant 0 : i32
      %251 = tpu.memref_slice %arg6[%249, %c0_i32_115] : memref<64x32xf32, #tpu.memory_space<any>> -> memref<1x32xf32, #tpu.memory_space<any>>
      %c0_i32_116 = arith.constant 0 : i32
      %252 = tpu.memref_slice %arg11[%250, %c0_i32_116] : memref<72x32xf32, #tpu.memory_space<vmem>> -> memref<1x32xf32, #tpu.memory_space<vmem>>
      %253 = tpu.memref_slice %arg14[%c0_i32_114] : memref<2x!tpu.dma_semaphore, #tpu.memory_space<semaphore_mem>> -> memref<1x!tpu.dma_semaphore, #tpu.memory_space<semaphore_mem>>
      %254 = tpu.memref_squeeze %253 : memref<1x!tpu.dma_semaphore, #tpu.memory_space<semaphore_mem>> -> memref<!tpu.dma_semaphore, #tpu.memory_space<semaphore_mem>>
      tpu.enqueue_dma source(%251 : memref<1x32xf32, #tpu.memory_space<any>>) target(%252 : memref<1x32xf32, #tpu.memory_space<vmem>>) target_semaphore(%254 : memref<!tpu.dma_semaphore, #tpu.memory_space<semaphore_mem>>)
      %c9_i32_117 = arith.constant 9 : i32
      %255 = arith.muli %239, %c9_i32_117 : i32
      %c1_i32_118 = arith.constant 1 : i32
      %256 = arith.addi %255, %c1_i32_118 : i32
      %257 = arith.index_cast %256 : i32 to index
      %258 = memref.load %arg2[%257] : memref<72xi32, #tpu.memory_space<smem>>
      %c8_i32_119 = arith.constant 8 : i32
      %259 = arith.addi %c8_i32_119, %238 : i32
      %c0_i32_120 = arith.constant 0 : i32
      %c0_i32_121 = arith.constant 0 : i32
      %260 = tpu.memref_slice %arg6[%258, %c0_i32_121] : memref<64x32xf32, #tpu.memory_space<any>> -> memref<1x32xf32, #tpu.memory_space<any>>
      %c0_i32_122 = arith.constant 0 : i32
      %261 = tpu.memref_slice %arg11[%259, %c0_i32_122] : memref<72x32xf32, #tpu.memory_space<vmem>> -> memref<1x32xf32, #tpu.memory_space<vmem>>
      %262 = tpu.memref_slice %arg14[%c0_i32_120] : memref<2x!tpu.dma_semaphore, #tpu.memory_space<semaphore_mem>> -> memref<1x!tpu.dma_semaphore, #tpu.memory_space<semaphore_mem>>
      %263 = tpu.memref_squeeze %262 : memref<1x!tpu.dma_semaphore, #tpu.memory_space<semaphore_mem>> -> memref<!tpu.dma_semaphore, #tpu.memory_space<semaphore_mem>>
      tpu.enqueue_dma source(%260 : memref<1x32xf32, #tpu.memory_space<any>>) target(%261 : memref<1x32xf32, #tpu.memory_space<vmem>>) target_semaphore(%263 : memref<!tpu.dma_semaphore, #tpu.memory_space<semaphore_mem>>)
      %c9_i32_123 = arith.constant 9 : i32
      %264 = arith.muli %239, %c9_i32_123 : i32
      %c2_i32 = arith.constant 2 : i32
      %265 = arith.addi %264, %c2_i32 : i32
      %266 = arith.index_cast %265 : i32 to index
      %267 = memref.load %arg2[%266] : memref<72xi32, #tpu.memory_space<smem>>
      %c16_i32 = arith.constant 16 : i32
      %268 = arith.addi %c16_i32, %238 : i32
      %c0_i32_124 = arith.constant 0 : i32
      %c0_i32_125 = arith.constant 0 : i32
      %269 = tpu.memref_slice %arg6[%267, %c0_i32_125] : memref<64x32xf32, #tpu.memory_space<any>> -> memref<1x32xf32, #tpu.memory_space<any>>
      %c0_i32_126 = arith.constant 0 : i32
      %270 = tpu.memref_slice %arg11[%268, %c0_i32_126] : memref<72x32xf32, #tpu.memory_space<vmem>> -> memref<1x32xf32, #tpu.memory_space<vmem>>
      %271 = tpu.memref_slice %arg14[%c0_i32_124] : memref<2x!tpu.dma_semaphore, #tpu.memory_space<semaphore_mem>> -> memref<1x!tpu.dma_semaphore, #tpu.memory_space<semaphore_mem>>
      %272 = tpu.memref_squeeze %271 : memref<1x!tpu.dma_semaphore, #tpu.memory_space<semaphore_mem>> -> memref<!tpu.dma_semaphore, #tpu.memory_space<semaphore_mem>>
      tpu.enqueue_dma source(%269 : memref<1x32xf32, #tpu.memory_space<any>>) target(%270 : memref<1x32xf32, #tpu.memory_space<vmem>>) target_semaphore(%272 : memref<!tpu.dma_semaphore, #tpu.memory_space<semaphore_mem>>)
      %c9_i32_127 = arith.constant 9 : i32
      %273 = arith.muli %239, %c9_i32_127 : i32
      %c3_i32 = arith.constant 3 : i32
      %274 = arith.addi %273, %c3_i32 : i32
      %275 = arith.index_cast %274 : i32 to index
      %276 = memref.load %arg2[%275] : memref<72xi32, #tpu.memory_space<smem>>
      %c24_i32 = arith.constant 24 : i32
      %277 = arith.addi %c24_i32, %238 : i32
      %c0_i32_128 = arith.constant 0 : i32
      %c0_i32_129 = arith.constant 0 : i32
      %278 = tpu.memref_slice %arg6[%276, %c0_i32_129] : memref<64x32xf32, #tpu.memory_space<any>> -> memref<1x32xf32, #tpu.memory_space<any>>
      %c0_i32_130 = arith.constant 0 : i32
      %279 = tpu.memref_slice %arg11[%277, %c0_i32_130] : memref<72x32xf32, #tpu.memory_space<vmem>> -> memref<1x32xf32, #tpu.memory_space<vmem>>
      %280 = tpu.memref_slice %arg14[%c0_i32_128] : memref<2x!tpu.dma_semaphore, #tpu.memory_space<semaphore_mem>> -> memref<1x!tpu.dma_semaphore, #tpu.memory_space<semaphore_mem>>
      %281 = tpu.memref_squeeze %280 : memref<1x!tpu.dma_semaphore, #tpu.memory_space<semaphore_mem>> -> memref<!tpu.dma_semaphore, #tpu.memory_space<semaphore_mem>>
      tpu.enqueue_dma source(%278 : memref<1x32xf32, #tpu.memory_space<any>>) target(%279 : memref<1x32xf32, #tpu.memory_space<vmem>>) target_semaphore(%281 : memref<!tpu.dma_semaphore, #tpu.memory_space<semaphore_mem>>)
      %c9_i32_131 = arith.constant 9 : i32
      %282 = arith.muli %239, %c9_i32_131 : i32
      %c4_i32 = arith.constant 4 : i32
      %283 = arith.addi %282, %c4_i32 : i32
      %284 = arith.index_cast %283 : i32 to index
      %285 = memref.load %arg2[%284] : memref<72xi32, #tpu.memory_space<smem>>
      %c32_i32 = arith.constant 32 : i32
      %286 = arith.addi %c32_i32, %238 : i32
      %c0_i32_132 = arith.constant 0 : i32
      %c0_i32_133 = arith.constant 0 : i32
      %287 = tpu.memref_slice %arg6[%285, %c0_i32_133] : memref<64x32xf32, #tpu.memory_space<any>> -> memref<1x32xf32, #tpu.memory_space<any>>
      %c0_i32_134 = arith.constant 0 : i32
      %288 = tpu.memref_slice %arg11[%286, %c0_i32_134] : memref<72x32xf32, #tpu.memory_space<vmem>> -> memref<1x32xf32, #tpu.memory_space<vmem>>
      %289 = tpu.memref_slice %arg14[%c0_i32_132] : memref<2x!tpu.dma_semaphore, #tpu.memory_space<semaphore_mem>> -> memref<1x!tpu.dma_semaphore, #tpu.memory_space<semaphore_mem>>
      %290 = tpu.memref_squeeze %289 : memref<1x!tpu.dma_semaphore, #tpu.memory_space<semaphore_mem>> -> memref<!tpu.dma_semaphore, #tpu.memory_space<semaphore_mem>>
      tpu.enqueue_dma source(%287 : memref<1x32xf32, #tpu.memory_space<any>>) target(%288 : memref<1x32xf32, #tpu.memory_space<vmem>>) target_semaphore(%290 : memref<!tpu.dma_semaphore, #tpu.memory_space<semaphore_mem>>)
      %c9_i32_135 = arith.constant 9 : i32
      %291 = arith.muli %239, %c9_i32_135 : i32
      %c5_i32 = arith.constant 5 : i32
      %292 = arith.addi %291, %c5_i32 : i32
      %293 = arith.index_cast %292 : i32 to index
      %294 = memref.load %arg2[%293] : memref<72xi32, #tpu.memory_space<smem>>
      %c40_i32 = arith.constant 40 : i32
      %295 = arith.addi %c40_i32, %238 : i32
      %c0_i32_136 = arith.constant 0 : i32
      %c0_i32_137 = arith.constant 0 : i32
      %296 = tpu.memref_slice %arg6[%294, %c0_i32_137] : memref<64x32xf32, #tpu.memory_space<any>> -> memref<1x32xf32, #tpu.memory_space<any>>
      %c0_i32_138 = arith.constant 0 : i32
      %297 = tpu.memref_slice %arg11[%295, %c0_i32_138] : memref<72x32xf32, #tpu.memory_space<vmem>> -> memref<1x32xf32, #tpu.memory_space<vmem>>
      %298 = tpu.memref_slice %arg14[%c0_i32_136] : memref<2x!tpu.dma_semaphore, #tpu.memory_space<semaphore_mem>> -> memref<1x!tpu.dma_semaphore, #tpu.memory_space<semaphore_mem>>
      %299 = tpu.memref_squeeze %298 : memref<1x!tpu.dma_semaphore, #tpu.memory_space<semaphore_mem>> -> memref<!tpu.dma_semaphore, #tpu.memory_space<semaphore_mem>>
      tpu.enqueue_dma source(%296 : memref<1x32xf32, #tpu.memory_space<any>>) target(%297 : memref<1x32xf32, #tpu.memory_space<vmem>>) target_semaphore(%299 : memref<!tpu.dma_semaphore, #tpu.memory_space<semaphore_mem>>)
      %c9_i32_139 = arith.constant 9 : i32
      %300 = arith.muli %239, %c9_i32_139 : i32
      %c6_i32 = arith.constant 6 : i32
      %301 = arith.addi %300, %c6_i32 : i32
      %302 = arith.index_cast %301 : i32 to index
      %303 = memref.load %arg2[%302] : memref<72xi32, #tpu.memory_space<smem>>
      %c48_i32 = arith.constant 48 : i32
      %304 = arith.addi %c48_i32, %238 : i32
      %c0_i32_140 = arith.constant 0 : i32
      %c0_i32_141 = arith.constant 0 : i32
      %305 = tpu.memref_slice %arg6[%303, %c0_i32_141] : memref<64x32xf32, #tpu.memory_space<any>> -> memref<1x32xf32, #tpu.memory_space<any>>
      %c0_i32_142 = arith.constant 0 : i32
      %306 = tpu.memref_slice %arg11[%304, %c0_i32_142] : memref<72x32xf32, #tpu.memory_space<vmem>> -> memref<1x32xf32, #tpu.memory_space<vmem>>
      %307 = tpu.memref_slice %arg14[%c0_i32_140] : memref<2x!tpu.dma_semaphore, #tpu.memory_space<semaphore_mem>> -> memref<1x!tpu.dma_semaphore, #tpu.memory_space<semaphore_mem>>
      %308 = tpu.memref_squeeze %307 : memref<1x!tpu.dma_semaphore, #tpu.memory_space<semaphore_mem>> -> memref<!tpu.dma_semaphore, #tpu.memory_space<semaphore_mem>>
      tpu.enqueue_dma source(%305 : memref<1x32xf32, #tpu.memory_space<any>>) target(%306 : memref<1x32xf32, #tpu.memory_space<vmem>>) target_semaphore(%308 : memref<!tpu.dma_semaphore, #tpu.memory_space<semaphore_mem>>)
      %c9_i32_143 = arith.constant 9 : i32
      %309 = arith.muli %239, %c9_i32_143 : i32
      %c7_i32 = arith.constant 7 : i32
      %310 = arith.addi %309, %c7_i32 : i32
      %311 = arith.index_cast %310 : i32 to index
      %312 = memref.load %arg2[%311] : memref<72xi32, #tpu.memory_space<smem>>
      %c56_i32 = arith.constant 56 : i32
      %313 = arith.addi %c56_i32, %238 : i32
      %c0_i32_144 = arith.constant 0 : i32
      %c0_i32_145 = arith.constant 0 : i32
      %314 = tpu.memref_slice %arg6[%312, %c0_i32_145] : memref<64x32xf32, #tpu.memory_space<any>> -> memref<1x32xf32, #tpu.memory_space<any>>
      %c0_i32_146 = arith.constant 0 : i32
      %315 = tpu.memref_slice %arg11[%313, %c0_i32_146] : memref<72x32xf32, #tpu.memory_space<vmem>> -> memref<1x32xf32, #tpu.memory_space<vmem>>
      %316 = tpu.memref_slice %arg14[%c0_i32_144] : memref<2x!tpu.dma_semaphore, #tpu.memory_space<semaphore_mem>> -> memref<1x!tpu.dma_semaphore, #tpu.memory_space<semaphore_mem>>
      %317 = tpu.memref_squeeze %316 : memref<1x!tpu.dma_semaphore, #tpu.memory_space<semaphore_mem>> -> memref<!tpu.dma_semaphore, #tpu.memory_space<semaphore_mem>>
      tpu.enqueue_dma source(%314 : memref<1x32xf32, #tpu.memory_space<any>>) target(%315 : memref<1x32xf32, #tpu.memory_space<vmem>>) target_semaphore(%317 : memref<!tpu.dma_semaphore, #tpu.memory_space<semaphore_mem>>)
      %c9_i32_147 = arith.constant 9 : i32
      %318 = arith.muli %239, %c9_i32_147 : i32
      %c8_i32_148 = arith.constant 8 : i32
      %319 = arith.addi %318, %c8_i32_148 : i32
      %320 = arith.index_cast %319 : i32 to index
      %321 = memref.load %arg2[%320] : memref<72xi32, #tpu.memory_space<smem>>
      %c64_i32 = arith.constant 64 : i32
      %322 = arith.addi %c64_i32, %238 : i32
      %c0_i32_149 = arith.constant 0 : i32
      %c0_i32_150 = arith.constant 0 : i32
      %323 = tpu.memref_slice %arg6[%321, %c0_i32_150] : memref<64x32xf32, #tpu.memory_space<any>> -> memref<1x32xf32, #tpu.memory_space<any>>
      %c0_i32_151 = arith.constant 0 : i32
      %324 = tpu.memref_slice %arg11[%322, %c0_i32_151] : memref<72x32xf32, #tpu.memory_space<vmem>> -> memref<1x32xf32, #tpu.memory_space<vmem>>
      %325 = tpu.memref_slice %arg14[%c0_i32_149] : memref<2x!tpu.dma_semaphore, #tpu.memory_space<semaphore_mem>> -> memref<1x!tpu.dma_semaphore, #tpu.memory_space<semaphore_mem>>
      %326 = tpu.memref_squeeze %325 : memref<1x!tpu.dma_semaphore, #tpu.memory_space<semaphore_mem>> -> memref<!tpu.dma_semaphore, #tpu.memory_space<semaphore_mem>>
      tpu.enqueue_dma source(%323 : memref<1x32xf32, #tpu.memory_space<any>>) target(%324 : memref<1x32xf32, #tpu.memory_space<vmem>>) target_semaphore(%326 : memref<!tpu.dma_semaphore, #tpu.memory_space<semaphore_mem>>)
      %327 = arith.index_cast %239 : i32 to index
      %328 = memref.load %arg3[%327] : memref<8xi32, #tpu.memory_space<smem>>
      %c1_i32_152 = arith.constant 1 : i32
      %c0_i32_153 = arith.constant 0 : i32
      %329 = tpu.memref_slice %arg7[%328, %c0_i32_153] : memref<32x32xf32, #tpu.memory_space<any>> -> memref<1x32xf32, #tpu.memory_space<any>>
      %c0_i32_154 = arith.constant 0 : i32
      %330 = tpu.memref_slice %arg12[%238, %c0_i32_154] : memref<8x32xf32, #tpu.memory_space<vmem>> -> memref<1x32xf32, #tpu.memory_space<vmem>>
      %331 = tpu.memref_slice %arg14[%c1_i32_152] : memref<2x!tpu.dma_semaphore, #tpu.memory_space<semaphore_mem>> -> memref<1x!tpu.dma_semaphore, #tpu.memory_space<semaphore_mem>>
      %332 = tpu.memref_squeeze %331 : memref<1x!tpu.dma_semaphore, #tpu.memory_space<semaphore_mem>> -> memref<!tpu.dma_semaphore, #tpu.memory_space<semaphore_mem>>
      tpu.enqueue_dma source(%329 : memref<1x32xf32, #tpu.memory_space<any>>) target(%330 : memref<1x32xf32, #tpu.memory_space<vmem>>) target_semaphore(%332 : memref<!tpu.dma_semaphore, #tpu.memory_space<semaphore_mem>>)
      %c9_i32_155 = arith.constant 9 : i32
      %333 = arith.muli %239, %c9_i32_155 : i32
      %c0_i32_156 = arith.constant 0 : i32
      %334 = arith.addi %333, %c0_i32_156 : i32
      %335 = arith.index_cast %334 : i32 to index
      %336 = memref.load %arg4[%335] : memref<72xi32, #tpu.memory_space<smem>>
      %c0_i32_157 = arith.constant 0 : i32
      %337 = arith.addi %c0_i32_157, %238 : i32
      %c1_i32_158 = arith.constant 1 : i32
      %c0_i32_159 = arith.constant 0 : i32
      %338 = tpu.memref_slice %arg8[%336, %c0_i32_159] : memref<32x32xf32, #tpu.memory_space<any>> -> memref<1x32xf32, #tpu.memory_space<any>>
      %c0_i32_160 = arith.constant 0 : i32
      %339 = tpu.memref_slice %arg13[%337, %c0_i32_160] : memref<72x32xf32, #tpu.memory_space<vmem>> -> memref<1x32xf32, #tpu.memory_space<vmem>>
      %340 = tpu.memref_slice %arg14[%c1_i32_158] : memref<2x!tpu.dma_semaphore, #tpu.memory_space<semaphore_mem>> -> memref<1x!tpu.dma_semaphore, #tpu.memory_space<semaphore_mem>>
      %341 = tpu.memref_squeeze %340 : memref<1x!tpu.dma_semaphore, #tpu.memory_space<semaphore_mem>> -> memref<!tpu.dma_semaphore, #tpu.memory_space<semaphore_mem>>
      tpu.enqueue_dma source(%338 : memref<1x32xf32, #tpu.memory_space<any>>) target(%339 : memref<1x32xf32, #tpu.memory_space<vmem>>) target_semaphore(%341 : memref<!tpu.dma_semaphore, #tpu.memory_space<semaphore_mem>>)
      %c9_i32_161 = arith.constant 9 : i32
      %342 = arith.muli %239, %c9_i32_161 : i32
      %c1_i32_162 = arith.constant 1 : i32
      %343 = arith.addi %342, %c1_i32_162 : i32
      %344 = arith.index_cast %343 : i32 to index
      %345 = memref.load %arg4[%344] : memref<72xi32, #tpu.memory_space<smem>>
      %c8_i32_163 = arith.constant 8 : i32
      %346 = arith.addi %c8_i32_163, %238 : i32
      %c1_i32_164 = arith.constant 1 : i32
      %c0_i32_165 = arith.constant 0 : i32
      %347 = tpu.memref_slice %arg8[%345, %c0_i32_165] : memref<32x32xf32, #tpu.memory_space<any>> -> memref<1x32xf32, #tpu.memory_space<any>>
      %c0_i32_166 = arith.constant 0 : i32
      %348 = tpu.memref_slice %arg13[%346, %c0_i32_166] : memref<72x32xf32, #tpu.memory_space<vmem>> -> memref<1x32xf32, #tpu.memory_space<vmem>>
      %349 = tpu.memref_slice %arg14[%c1_i32_164] : memref<2x!tpu.dma_semaphore, #tpu.memory_space<semaphore_mem>> -> memref<1x!tpu.dma_semaphore, #tpu.memory_space<semaphore_mem>>
      %350 = tpu.memref_squeeze %349 : memref<1x!tpu.dma_semaphore, #tpu.memory_space<semaphore_mem>> -> memref<!tpu.dma_semaphore, #tpu.memory_space<semaphore_mem>>
      tpu.enqueue_dma source(%347 : memref<1x32xf32, #tpu.memory_space<any>>) target(%348 : memref<1x32xf32, #tpu.memory_space<vmem>>) target_semaphore(%350 : memref<!tpu.dma_semaphore, #tpu.memory_space<semaphore_mem>>)
      %c9_i32_167 = arith.constant 9 : i32
      %351 = arith.muli %239, %c9_i32_167 : i32
      %c2_i32_168 = arith.constant 2 : i32
      %352 = arith.addi %351, %c2_i32_168 : i32
      %353 = arith.index_cast %352 : i32 to index
      %354 = memref.load %arg4[%353] : memref<72xi32, #tpu.memory_space<smem>>
      %c16_i32_169 = arith.constant 16 : i32
      %355 = arith.addi %c16_i32_169, %238 : i32
      %c1_i32_170 = arith.constant 1 : i32
      %c0_i32_171 = arith.constant 0 : i32
      %356 = tpu.memref_slice %arg8[%354, %c0_i32_171] : memref<32x32xf32, #tpu.memory_space<any>> -> memref<1x32xf32, #tpu.memory_space<any>>
      %c0_i32_172 = arith.constant 0 : i32
      %357 = tpu.memref_slice %arg13[%355, %c0_i32_172] : memref<72x32xf32, #tpu.memory_space<vmem>> -> memref<1x32xf32, #tpu.memory_space<vmem>>
      %358 = tpu.memref_slice %arg14[%c1_i32_170] : memref<2x!tpu.dma_semaphore, #tpu.memory_space<semaphore_mem>> -> memref<1x!tpu.dma_semaphore, #tpu.memory_space<semaphore_mem>>
      %359 = tpu.memref_squeeze %358 : memref<1x!tpu.dma_semaphore, #tpu.memory_space<semaphore_mem>> -> memref<!tpu.dma_semaphore, #tpu.memory_space<semaphore_mem>>
      tpu.enqueue_dma source(%356 : memref<1x32xf32, #tpu.memory_space<any>>) target(%357 : memref<1x32xf32, #tpu.memory_space<vmem>>) target_semaphore(%359 : memref<!tpu.dma_semaphore, #tpu.memory_space<semaphore_mem>>)
      %c9_i32_173 = arith.constant 9 : i32
      %360 = arith.muli %239, %c9_i32_173 : i32
      %c3_i32_174 = arith.constant 3 : i32
      %361 = arith.addi %360, %c3_i32_174 : i32
      %362 = arith.index_cast %361 : i32 to index
      %363 = memref.load %arg4[%362] : memref<72xi32, #tpu.memory_space<smem>>
      %c24_i32_175 = arith.constant 24 : i32
      %364 = arith.addi %c24_i32_175, %238 : i32
      %c1_i32_176 = arith.constant 1 : i32
      %c0_i32_177 = arith.constant 0 : i32
      %365 = tpu.memref_slice %arg8[%363, %c0_i32_177] : memref<32x32xf32, #tpu.memory_space<any>> -> memref<1x32xf32, #tpu.memory_space<any>>
      %c0_i32_178 = arith.constant 0 : i32
      %366 = tpu.memref_slice %arg13[%364, %c0_i32_178] : memref<72x32xf32, #tpu.memory_space<vmem>> -> memref<1x32xf32, #tpu.memory_space<vmem>>
      %367 = tpu.memref_slice %arg14[%c1_i32_176] : memref<2x!tpu.dma_semaphore, #tpu.memory_space<semaphore_mem>> -> memref<1x!tpu.dma_semaphore, #tpu.memory_space<semaphore_mem>>
      %368 = tpu.memref_squeeze %367 : memref<1x!tpu.dma_semaphore, #tpu.memory_space<semaphore_mem>> -> memref<!tpu.dma_semaphore, #tpu.memory_space<semaphore_mem>>
      tpu.enqueue_dma source(%365 : memref<1x32xf32, #tpu.memory_space<any>>) target(%366 : memref<1x32xf32, #tpu.memory_space<vmem>>) target_semaphore(%368 : memref<!tpu.dma_semaphore, #tpu.memory_space<semaphore_mem>>)
      %c9_i32_179 = arith.constant 9 : i32
      %369 = arith.muli %239, %c9_i32_179 : i32
      %c4_i32_180 = arith.constant 4 : i32
      %370 = arith.addi %369, %c4_i32_180 : i32
      %371 = arith.index_cast %370 : i32 to index
      %372 = memref.load %arg4[%371] : memref<72xi32, #tpu.memory_space<smem>>
      %c32_i32_181 = arith.constant 32 : i32
      %373 = arith.addi %c32_i32_181, %238 : i32
      %c1_i32_182 = arith.constant 1 : i32
      %c0_i32_183 = arith.constant 0 : i32
      %374 = tpu.memref_slice %arg8[%372, %c0_i32_183] : memref<32x32xf32, #tpu.memory_space<any>> -> memref<1x32xf32, #tpu.memory_space<any>>
      %c0_i32_184 = arith.constant 0 : i32
      %375 = tpu.memref_slice %arg13[%373, %c0_i32_184] : memref<72x32xf32, #tpu.memory_space<vmem>> -> memref<1x32xf32, #tpu.memory_space<vmem>>
      %376 = tpu.memref_slice %arg14[%c1_i32_182] : memref<2x!tpu.dma_semaphore, #tpu.memory_space<semaphore_mem>> -> memref<1x!tpu.dma_semaphore, #tpu.memory_space<semaphore_mem>>
      %377 = tpu.memref_squeeze %376 : memref<1x!tpu.dma_semaphore, #tpu.memory_space<semaphore_mem>> -> memref<!tpu.dma_semaphore, #tpu.memory_space<semaphore_mem>>
      tpu.enqueue_dma source(%374 : memref<1x32xf32, #tpu.memory_space<any>>) target(%375 : memref<1x32xf32, #tpu.memory_space<vmem>>) target_semaphore(%377 : memref<!tpu.dma_semaphore, #tpu.memory_space<semaphore_mem>>)
      %c9_i32_185 = arith.constant 9 : i32
      %378 = arith.muli %239, %c9_i32_185 : i32
      %c5_i32_186 = arith.constant 5 : i32
      %379 = arith.addi %378, %c5_i32_186 : i32
      %380 = arith.index_cast %379 : i32 to index
      %381 = memref.load %arg4[%380] : memref<72xi32, #tpu.memory_space<smem>>
      %c40_i32_187 = arith.constant 40 : i32
      %382 = arith.addi %c40_i32_187, %238 : i32
      %c1_i32_188 = arith.constant 1 : i32
      %c0_i32_189 = arith.constant 0 : i32
      %383 = tpu.memref_slice %arg8[%381, %c0_i32_189] : memref<32x32xf32, #tpu.memory_space<any>> -> memref<1x32xf32, #tpu.memory_space<any>>
      %c0_i32_190 = arith.constant 0 : i32
      %384 = tpu.memref_slice %arg13[%382, %c0_i32_190] : memref<72x32xf32, #tpu.memory_space<vmem>> -> memref<1x32xf32, #tpu.memory_space<vmem>>
      %385 = tpu.memref_slice %arg14[%c1_i32_188] : memref<2x!tpu.dma_semaphore, #tpu.memory_space<semaphore_mem>> -> memref<1x!tpu.dma_semaphore, #tpu.memory_space<semaphore_mem>>
      %386 = tpu.memref_squeeze %385 : memref<1x!tpu.dma_semaphore, #tpu.memory_space<semaphore_mem>> -> memref<!tpu.dma_semaphore, #tpu.memory_space<semaphore_mem>>
      tpu.enqueue_dma source(%383 : memref<1x32xf32, #tpu.memory_space<any>>) target(%384 : memref<1x32xf32, #tpu.memory_space<vmem>>) target_semaphore(%386 : memref<!tpu.dma_semaphore, #tpu.memory_space<semaphore_mem>>)
      %c9_i32_191 = arith.constant 9 : i32
      %387 = arith.muli %239, %c9_i32_191 : i32
      %c6_i32_192 = arith.constant 6 : i32
      %388 = arith.addi %387, %c6_i32_192 : i32
      %389 = arith.index_cast %388 : i32 to index
      %390 = memref.load %arg4[%389] : memref<72xi32, #tpu.memory_space<smem>>
      %c48_i32_193 = arith.constant 48 : i32
      %391 = arith.addi %c48_i32_193, %238 : i32
      %c1_i32_194 = arith.constant 1 : i32
      %c0_i32_195 = arith.constant 0 : i32
      %392 = tpu.memref_slice %arg8[%390, %c0_i32_195] : memref<32x32xf32, #tpu.memory_space<any>> -> memref<1x32xf32, #tpu.memory_space<any>>
      %c0_i32_196 = arith.constant 0 : i32
      %393 = tpu.memref_slice %arg13[%391, %c0_i32_196] : memref<72x32xf32, #tpu.memory_space<vmem>> -> memref<1x32xf32, #tpu.memory_space<vmem>>
      %394 = tpu.memref_slice %arg14[%c1_i32_194] : memref<2x!tpu.dma_semaphore, #tpu.memory_space<semaphore_mem>> -> memref<1x!tpu.dma_semaphore, #tpu.memory_space<semaphore_mem>>
      %395 = tpu.memref_squeeze %394 : memref<1x!tpu.dma_semaphore, #tpu.memory_space<semaphore_mem>> -> memref<!tpu.dma_semaphore, #tpu.memory_space<semaphore_mem>>
      tpu.enqueue_dma source(%392 : memref<1x32xf32, #tpu.memory_space<any>>) target(%393 : memref<1x32xf32, #tpu.memory_space<vmem>>) target_semaphore(%395 : memref<!tpu.dma_semaphore, #tpu.memory_space<semaphore_mem>>)
      %c9_i32_197 = arith.constant 9 : i32
      %396 = arith.muli %239, %c9_i32_197 : i32
      %c7_i32_198 = arith.constant 7 : i32
      %397 = arith.addi %396, %c7_i32_198 : i32
      %398 = arith.index_cast %397 : i32 to index
      %399 = memref.load %arg4[%398] : memref<72xi32, #tpu.memory_space<smem>>
      %c56_i32_199 = arith.constant 56 : i32
      %400 = arith.addi %c56_i32_199, %238 : i32
      %c1_i32_200 = arith.constant 1 : i32
      %c0_i32_201 = arith.constant 0 : i32
      %401 = tpu.memref_slice %arg8[%399, %c0_i32_201] : memref<32x32xf32, #tpu.memory_space<any>> -> memref<1x32xf32, #tpu.memory_space<any>>
      %c0_i32_202 = arith.constant 0 : i32
      %402 = tpu.memref_slice %arg13[%400, %c0_i32_202] : memref<72x32xf32, #tpu.memory_space<vmem>> -> memref<1x32xf32, #tpu.memory_space<vmem>>
      %403 = tpu.memref_slice %arg14[%c1_i32_200] : memref<2x!tpu.dma_semaphore, #tpu.memory_space<semaphore_mem>> -> memref<1x!tpu.dma_semaphore, #tpu.memory_space<semaphore_mem>>
      %404 = tpu.memref_squeeze %403 : memref<1x!tpu.dma_semaphore, #tpu.memory_space<semaphore_mem>> -> memref<!tpu.dma_semaphore, #tpu.memory_space<semaphore_mem>>
      tpu.enqueue_dma source(%401 : memref<1x32xf32, #tpu.memory_space<any>>) target(%402 : memref<1x32xf32, #tpu.memory_space<vmem>>) target_semaphore(%404 : memref<!tpu.dma_semaphore, #tpu.memory_space<semaphore_mem>>)
      %c9_i32_203 = arith.constant 9 : i32
      %405 = arith.muli %239, %c9_i32_203 : i32
      %c8_i32_204 = arith.constant 8 : i32
      %406 = arith.addi %405, %c8_i32_204 : i32
      %407 = arith.index_cast %406 : i32 to index
      %408 = memref.load %arg4[%407] : memref<72xi32, #tpu.memory_space<smem>>
      %c64_i32_205 = arith.constant 64 : i32
      %409 = arith.addi %c64_i32_205, %238 : i32
      %c1_i32_206 = arith.constant 1 : i32
      %c0_i32_207 = arith.constant 0 : i32
      %410 = tpu.memref_slice %arg8[%408, %c0_i32_207] : memref<32x32xf32, #tpu.memory_space<any>> -> memref<1x32xf32, #tpu.memory_space<any>>
      %c0_i32_208 = arith.constant 0 : i32
      %411 = tpu.memref_slice %arg13[%409, %c0_i32_208] : memref<72x32xf32, #tpu.memory_space<vmem>> -> memref<1x32xf32, #tpu.memory_space<vmem>>
      %412 = tpu.memref_slice %arg14[%c1_i32_206] : memref<2x!tpu.dma_semaphore, #tpu.memory_space<semaphore_mem>> -> memref<1x!tpu.dma_semaphore, #tpu.memory_space<semaphore_mem>>
      %413 = tpu.memref_squeeze %412 : memref<1x!tpu.dma_semaphore, #tpu.memory_space<semaphore_mem>> -> memref<!tpu.dma_semaphore, #tpu.memory_space<semaphore_mem>>
      tpu.enqueue_dma source(%410 : memref<1x32xf32, #tpu.memory_space<any>>) target(%411 : memref<1x32xf32, #tpu.memory_space<vmem>>) target_semaphore(%413 : memref<!tpu.dma_semaphore, #tpu.memory_space<semaphore_mem>>)
      %c0_i32_209 = arith.constant 0 : i32
      %c0_i32_210 = arith.constant 0 : i32
      %c0_i32_211 = arith.constant 0 : i32
      %414 = tpu.memref_slice %arg5[%c0_i32_210, %c0_i32_211] : memref<64x32xf32, #tpu.memory_space<any>> -> memref<1x32xf32, #tpu.memory_space<any>>
      %c0_i32_212 = arith.constant 0 : i32
      %c0_i32_213 = arith.constant 0 : i32
      %415 = tpu.memref_slice %arg10[%c0_i32_212, %c0_i32_213] : memref<8x32xf32, #tpu.memory_space<vmem>> -> memref<1x32xf32, #tpu.memory_space<vmem>>
      %416 = tpu.memref_slice %arg14[%c0_i32_209] : memref<2x!tpu.dma_semaphore, #tpu.memory_space<semaphore_mem>> -> memref<1x!tpu.dma_semaphore, #tpu.memory_space<semaphore_mem>>
      %417 = tpu.memref_squeeze %416 : memref<1x!tpu.dma_semaphore, #tpu.memory_space<semaphore_mem>> -> memref<!tpu.dma_semaphore, #tpu.memory_space<semaphore_mem>>
      tpu.wait_dma2 semaphore(%417 : memref<!tpu.dma_semaphore, #tpu.memory_space<semaphore_mem>>) src(%414 : memref<1x32xf32, #tpu.memory_space<any>>) dst(%415 : memref<1x32xf32, #tpu.memory_space<vmem>>)
      %c0_i32_214 = arith.constant 0 : i32
      %c0_i32_215 = arith.constant 0 : i32
      %c0_i32_216 = arith.constant 0 : i32
      %418 = tpu.memref_slice %arg6[%c0_i32_215, %c0_i32_216] : memref<64x32xf32, #tpu.memory_space<any>> -> memref<1x32xf32, #tpu.memory_space<any>>
      %c0_i32_217 = arith.constant 0 : i32
      %c0_i32_218 = arith.constant 0 : i32
      %419 = tpu.memref_slice %arg11[%c0_i32_217, %c0_i32_218] : memref<72x32xf32, #tpu.memory_space<vmem>> -> memref<1x32xf32, #tpu.memory_space<vmem>>
      %420 = tpu.memref_slice %arg14[%c0_i32_214] : memref<2x!tpu.dma_semaphore, #tpu.memory_space<semaphore_mem>> -> memref<1x!tpu.dma_semaphore, #tpu.memory_space<semaphore_mem>>
      %421 = tpu.memref_squeeze %420 : memref<1x!tpu.dma_semaphore, #tpu.memory_space<semaphore_mem>> -> memref<!tpu.dma_semaphore, #tpu.memory_space<semaphore_mem>>
      tpu.wait_dma2 semaphore(%421 : memref<!tpu.dma_semaphore, #tpu.memory_space<semaphore_mem>>) src(%418 : memref<1x32xf32, #tpu.memory_space<any>>) dst(%419 : memref<1x32xf32, #tpu.memory_space<vmem>>)
      %c0_i32_219 = arith.constant 0 : i32
      %c0_i32_220 = arith.constant 0 : i32
      %c0_i32_221 = arith.constant 0 : i32
      %422 = tpu.memref_slice %arg6[%c0_i32_220, %c0_i32_221] : memref<64x32xf32, #tpu.memory_space<any>> -> memref<1x32xf32, #tpu.memory_space<any>>
      %c0_i32_222 = arith.constant 0 : i32
      %c0_i32_223 = arith.constant 0 : i32
      %423 = tpu.memref_slice %arg11[%c0_i32_222, %c0_i32_223] : memref<72x32xf32, #tpu.memory_space<vmem>> -> memref<1x32xf32, #tpu.memory_space<vmem>>
      %424 = tpu.memref_slice %arg14[%c0_i32_219] : memref<2x!tpu.dma_semaphore, #tpu.memory_space<semaphore_mem>> -> memref<1x!tpu.dma_semaphore, #tpu.memory_space<semaphore_mem>>
      %425 = tpu.memref_squeeze %424 : memref<1x!tpu.dma_semaphore, #tpu.memory_space<semaphore_mem>> -> memref<!tpu.dma_semaphore, #tpu.memory_space<semaphore_mem>>
      tpu.wait_dma2 semaphore(%425 : memref<!tpu.dma_semaphore, #tpu.memory_space<semaphore_mem>>) src(%422 : memref<1x32xf32, #tpu.memory_space<any>>) dst(%423 : memref<1x32xf32, #tpu.memory_space<vmem>>)
      %c0_i32_224 = arith.constant 0 : i32
      %c0_i32_225 = arith.constant 0 : i32
      %c0_i32_226 = arith.constant 0 : i32
      %426 = tpu.memref_slice %arg6[%c0_i32_225, %c0_i32_226] : memref<64x32xf32, #tpu.memory_space<any>> -> memref<1x32xf32, #tpu.memory_space<any>>
      %c0_i32_227 = arith.constant 0 : i32
      %c0_i32_228 = arith.constant 0 : i32
      %427 = tpu.memref_slice %arg11[%c0_i32_227, %c0_i32_228] : memref<72x32xf32, #tpu.memory_space<vmem>> -> memref<1x32xf32, #tpu.memory_space<vmem>>
      %428 = tpu.memref_slice %arg14[%c0_i32_224] : memref<2x!tpu.dma_semaphore, #tpu.memory_space<semaphore_mem>> -> memref<1x!tpu.dma_semaphore, #tpu.memory_space<semaphore_mem>>
      %429 = tpu.memref_squeeze %428 : memref<1x!tpu.dma_semaphore, #tpu.memory_space<semaphore_mem>> -> memref<!tpu.dma_semaphore, #tpu.memory_space<semaphore_mem>>
      tpu.wait_dma2 semaphore(%429 : memref<!tpu.dma_semaphore, #tpu.memory_space<semaphore_mem>>) src(%426 : memref<1x32xf32, #tpu.memory_space<any>>) dst(%427 : memref<1x32xf32, #tpu.memory_space<vmem>>)
      %c0_i32_229 = arith.constant 0 : i32
      %c0_i32_230 = arith.constant 0 : i32
      %c0_i32_231 = arith.constant 0 : i32
      %430 = tpu.memref_slice %arg6[%c0_i32_230, %c0_i32_231] : memref<64x32xf32, #tpu.memory_space<any>> -> memref<1x32xf32, #tpu.memory_space<any>>
      %c0_i32_232 = arith.constant 0 : i32
      %c0_i32_233 = arith.constant 0 : i32
      %431 = tpu.memref_slice %arg11[%c0_i32_232, %c0_i32_233] : memref<72x32xf32, #tpu.memory_space<vmem>> -> memref<1x32xf32, #tpu.memory_space<vmem>>
      %432 = tpu.memref_slice %arg14[%c0_i32_229] : memref<2x!tpu.dma_semaphore, #tpu.memory_space<semaphore_mem>> -> memref<1x!tpu.dma_semaphore, #tpu.memory_space<semaphore_mem>>
      %433 = tpu.memref_squeeze %432 : memref<1x!tpu.dma_semaphore, #tpu.memory_space<semaphore_mem>> -> memref<!tpu.dma_semaphore, #tpu.memory_space<semaphore_mem>>
      tpu.wait_dma2 semaphore(%433 : memref<!tpu.dma_semaphore, #tpu.memory_space<semaphore_mem>>) src(%430 : memref<1x32xf32, #tpu.memory_space<any>>) dst(%431 : memref<1x32xf32, #tpu.memory_space<vmem>>)
      %c0_i32_234 = arith.constant 0 : i32
      %c0_i32_235 = arith.constant 0 : i32
      %c0_i32_236 = arith.constant 0 : i32
      %434 = tpu.memref_slice %arg6[%c0_i32_235, %c0_i32_236] : memref<64x32xf32, #tpu.memory_space<any>> -> memref<1x32xf32, #tpu.memory_space<any>>
      %c0_i32_237 = arith.constant 0 : i32
      %c0_i32_238 = arith.constant 0 : i32
      %435 = tpu.memref_slice %arg11[%c0_i32_237, %c0_i32_238] : memref<72x32xf32, #tpu.memory_space<vmem>> -> memref<1x32xf32, #tpu.memory_space<vmem>>
      %436 = tpu.memref_slice %arg14[%c0_i32_234] : memref<2x!tpu.dma_semaphore, #tpu.memory_space<semaphore_mem>> -> memref<1x!tpu.dma_semaphore, #tpu.memory_space<semaphore_mem>>
      %437 = tpu.memref_squeeze %436 : memref<1x!tpu.dma_semaphore, #tpu.memory_space<semaphore_mem>> -> memref<!tpu.dma_semaphore, #tpu.memory_space<semaphore_mem>>
      tpu.wait_dma2 semaphore(%437 : memref<!tpu.dma_semaphore, #tpu.memory_space<semaphore_mem>>) src(%434 : memref<1x32xf32, #tpu.memory_space<any>>) dst(%435 : memref<1x32xf32, #tpu.memory_space<vmem>>)
      %c0_i32_239 = arith.constant 0 : i32
      %c0_i32_240 = arith.constant 0 : i32
      %c0_i32_241 = arith.constant 0 : i32
      %438 = tpu.memref_slice %arg6[%c0_i32_240, %c0_i32_241] : memref<64x32xf32, #tpu.memory_space<any>> -> memref<1x32xf32, #tpu.memory_space<any>>
      %c0_i32_242 = arith.constant 0 : i32
      %c0_i32_243 = arith.constant 0 : i32
      %439 = tpu.memref_slice %arg11[%c0_i32_242, %c0_i32_243] : memref<72x32xf32, #tpu.memory_space<vmem>> -> memref<1x32xf32, #tpu.memory_space<vmem>>
      %440 = tpu.memref_slice %arg14[%c0_i32_239] : memref<2x!tpu.dma_semaphore, #tpu.memory_space<semaphore_mem>> -> memref<1x!tpu.dma_semaphore, #tpu.memory_space<semaphore_mem>>
      %441 = tpu.memref_squeeze %440 : memref<1x!tpu.dma_semaphore, #tpu.memory_space<semaphore_mem>> -> memref<!tpu.dma_semaphore, #tpu.memory_space<semaphore_mem>>
      tpu.wait_dma2 semaphore(%441 : memref<!tpu.dma_semaphore, #tpu.memory_space<semaphore_mem>>) src(%438 : memref<1x32xf32, #tpu.memory_space<any>>) dst(%439 : memref<1x32xf32, #tpu.memory_space<vmem>>)
      %c0_i32_244 = arith.constant 0 : i32
      %c0_i32_245 = arith.constant 0 : i32
      %c0_i32_246 = arith.constant 0 : i32
      %442 = tpu.memref_slice %arg6[%c0_i32_245, %c0_i32_246] : memref<64x32xf32, #tpu.memory_space<any>> -> memref<1x32xf32, #tpu.memory_space<any>>
      %c0_i32_247 = arith.constant 0 : i32
      %c0_i32_248 = arith.constant 0 : i32
      %443 = tpu.memref_slice %arg11[%c0_i32_247, %c0_i32_248] : memref<72x32xf32, #tpu.memory_space<vmem>> -> memref<1x32xf32, #tpu.memory_space<vmem>>
      %444 = tpu.memref_slice %arg14[%c0_i32_244] : memref<2x!tpu.dma_semaphore, #tpu.memory_space<semaphore_mem>> -> memref<1x!tpu.dma_semaphore, #tpu.memory_space<semaphore_mem>>
      %445 = tpu.memref_squeeze %444 : memref<1x!tpu.dma_semaphore, #tpu.memory_space<semaphore_mem>> -> memref<!tpu.dma_semaphore, #tpu.memory_space<semaphore_mem>>
      tpu.wait_dma2 semaphore(%445 : memref<!tpu.dma_semaphore, #tpu.memory_space<semaphore_mem>>) src(%442 : memref<1x32xf32, #tpu.memory_space<any>>) dst(%443 : memref<1x32xf32, #tpu.memory_space<vmem>>)
      %c0_i32_249 = arith.constant 0 : i32
      %c0_i32_250 = arith.constant 0 : i32
      %c0_i32_251 = arith.constant 0 : i32
      %446 = tpu.memref_slice %arg6[%c0_i32_250, %c0_i32_251] : memref<64x32xf32, #tpu.memory_space<any>> -> memref<1x32xf32, #tpu.memory_space<any>>
      %c0_i32_252 = arith.constant 0 : i32
      %c0_i32_253 = arith.constant 0 : i32
      %447 = tpu.memref_slice %arg11[%c0_i32_252, %c0_i32_253] : memref<72x32xf32, #tpu.memory_space<vmem>> -> memref<1x32xf32, #tpu.memory_space<vmem>>
      %448 = tpu.memref_slice %arg14[%c0_i32_249] : memref<2x!tpu.dma_semaphore, #tpu.memory_space<semaphore_mem>> -> memref<1x!tpu.dma_semaphore, #tpu.memory_space<semaphore_mem>>
      %449 = tpu.memref_squeeze %448 : memref<1x!tpu.dma_semaphore, #tpu.memory_space<semaphore_mem>> -> memref<!tpu.dma_semaphore, #tpu.memory_space<semaphore_mem>>
      tpu.wait_dma2 semaphore(%449 : memref<!tpu.dma_semaphore, #tpu.memory_space<semaphore_mem>>) src(%446 : memref<1x32xf32, #tpu.memory_space<any>>) dst(%447 : memref<1x32xf32, #tpu.memory_space<vmem>>)
      %c0_i32_254 = arith.constant 0 : i32
      %c0_i32_255 = arith.constant 0 : i32
      %c0_i32_256 = arith.constant 0 : i32
      %450 = tpu.memref_slice %arg6[%c0_i32_255, %c0_i32_256] : memref<64x32xf32, #tpu.memory_space<any>> -> memref<1x32xf32, #tpu.memory_space<any>>
      %c0_i32_257 = arith.constant 0 : i32
      %c0_i32_258 = arith.constant 0 : i32
      %451 = tpu.memref_slice %arg11[%c0_i32_257, %c0_i32_258] : memref<72x32xf32, #tpu.memory_space<vmem>> -> memref<1x32xf32, #tpu.memory_space<vmem>>
      %452 = tpu.memref_slice %arg14[%c0_i32_254] : memref<2x!tpu.dma_semaphore, #tpu.memory_space<semaphore_mem>> -> memref<1x!tpu.dma_semaphore, #tpu.memory_space<semaphore_mem>>
      %453 = tpu.memref_squeeze %452 : memref<1x!tpu.dma_semaphore, #tpu.memory_space<semaphore_mem>> -> memref<!tpu.dma_semaphore, #tpu.memory_space<semaphore_mem>>
      tpu.wait_dma2 semaphore(%453 : memref<!tpu.dma_semaphore, #tpu.memory_space<semaphore_mem>>) src(%450 : memref<1x32xf32, #tpu.memory_space<any>>) dst(%451 : memref<1x32xf32, #tpu.memory_space<vmem>>)
      %c1_i32_259 = arith.constant 1 : i32
      %c0_i32_260 = arith.constant 0 : i32
      %c0_i32_261 = arith.constant 0 : i32
      %454 = tpu.memref_slice %arg7[%c0_i32_260, %c0_i32_261] : memref<32x32xf32, #tpu.memory_space<any>> -> memref<1x32xf32, #tpu.memory_space<any>>
      %c0_i32_262 = arith.constant 0 : i32
      %c0_i32_263 = arith.constant 0 : i32
      %455 = tpu.memref_slice %arg12[%c0_i32_262, %c0_i32_263] : memref<8x32xf32, #tpu.memory_space<vmem>> -> memref<1x32xf32, #tpu.memory_space<vmem>>
      %456 = tpu.memref_slice %arg14[%c1_i32_259] : memref<2x!tpu.dma_semaphore, #tpu.memory_space<semaphore_mem>> -> memref<1x!tpu.dma_semaphore, #tpu.memory_space<semaphore_mem>>
      %457 = tpu.memref_squeeze %456 : memref<1x!tpu.dma_semaphore, #tpu.memory_space<semaphore_mem>> -> memref<!tpu.dma_semaphore, #tpu.memory_space<semaphore_mem>>
      tpu.wait_dma2 semaphore(%457 : memref<!tpu.dma_semaphore, #tpu.memory_space<semaphore_mem>>) src(%454 : memref<1x32xf32, #tpu.memory_space<any>>) dst(%455 : memref<1x32xf32, #tpu.memory_space<vmem>>)
      %c1_i32_264 = arith.constant 1 : i32
      %c0_i32_265 = arith.constant 0 : i32
      %c0_i32_266 = arith.constant 0 : i32
      %458 = tpu.memref_slice %arg8[%c0_i32_265, %c0_i32_266] : memref<32x32xf32, #tpu.memory_space<any>> -> memref<1x32xf32, #tpu.memory_space<any>>
      %c0_i32_267 = arith.constant 0 : i32
      %c0_i32_268 = arith.constant 0 : i32
      %459 = tpu.memref_slice %arg13[%c0_i32_267, %c0_i32_268] : memref<72x32xf32, #tpu.memory_space<vmem>> -> memref<1x32xf32, #tpu.memory_space<vmem>>
      %460 = tpu.memref_slice %arg14[%c1_i32_264] : memref<2x!tpu.dma_semaphore, #tpu.memory_space<semaphore_mem>> -> memref<1x!tpu.dma_semaphore, #tpu.memory_space<semaphore_mem>>
      %461 = tpu.memref_squeeze %460 : memref<1x!tpu.dma_semaphore, #tpu.memory_space<semaphore_mem>> -> memref<!tpu.dma_semaphore, #tpu.memory_space<semaphore_mem>>
      tpu.wait_dma2 semaphore(%461 : memref<!tpu.dma_semaphore, #tpu.memory_space<semaphore_mem>>) src(%458 : memref<1x32xf32, #tpu.memory_space<any>>) dst(%459 : memref<1x32xf32, #tpu.memory_space<vmem>>)
      %c1_i32_269 = arith.constant 1 : i32
      %c0_i32_270 = arith.constant 0 : i32
      %c0_i32_271 = arith.constant 0 : i32
      %462 = tpu.memref_slice %arg8[%c0_i32_270, %c0_i32_271] : memref<32x32xf32, #tpu.memory_space<any>> -> memref<1x32xf32, #tpu.memory_space<any>>
      %c0_i32_272 = arith.constant 0 : i32
      %c0_i32_273 = arith.constant 0 : i32
      %463 = tpu.memref_slice %arg13[%c0_i32_272, %c0_i32_273] : memref<72x32xf32, #tpu.memory_space<vmem>> -> memref<1x32xf32, #tpu.memory_space<vmem>>
      %464 = tpu.memref_slice %arg14[%c1_i32_269] : memref<2x!tpu.dma_semaphore, #tpu.memory_space<semaphore_mem>> -> memref<1x!tpu.dma_semaphore, #tpu.memory_space<semaphore_mem>>
      %465 = tpu.memref_squeeze %464 : memref<1x!tpu.dma_semaphore, #tpu.memory_space<semaphore_mem>> -> memref<!tpu.dma_semaphore, #tpu.memory_space<semaphore_mem>>
      tpu.wait_dma2 semaphore(%465 : memref<!tpu.dma_semaphore, #tpu.memory_space<semaphore_mem>>) src(%462 : memref<1x32xf32, #tpu.memory_space<any>>) dst(%463 : memref<1x32xf32, #tpu.memory_space<vmem>>)
      %c1_i32_274 = arith.constant 1 : i32
      %c0_i32_275 = arith.constant 0 : i32
      %c0_i32_276 = arith.constant 0 : i32
      %466 = tpu.memref_slice %arg8[%c0_i32_275, %c0_i32_276] : memref<32x32xf32, #tpu.memory_space<any>> -> memref<1x32xf32, #tpu.memory_space<any>>
      %c0_i32_277 = arith.constant 0 : i32
      %c0_i32_278 = arith.constant 0 : i32
      %467 = tpu.memref_slice %arg13[%c0_i32_277, %c0_i32_278] : memref<72x32xf32, #tpu.memory_space<vmem>> -> memref<1x32xf32, #tpu.memory_space<vmem>>
      %468 = tpu.memref_slice %arg14[%c1_i32_274] : memref<2x!tpu.dma_semaphore, #tpu.memory_space<semaphore_mem>> -> memref<1x!tpu.dma_semaphore, #tpu.memory_space<semaphore_mem>>
      %469 = tpu.memref_squeeze %468 : memref<1x!tpu.dma_semaphore, #tpu.memory_space<semaphore_mem>> -> memref<!tpu.dma_semaphore, #tpu.memory_space<semaphore_mem>>
      tpu.wait_dma2 semaphore(%469 : memref<!tpu.dma_semaphore, #tpu.memory_space<semaphore_mem>>) src(%466 : memref<1x32xf32, #tpu.memory_space<any>>) dst(%467 : memref<1x32xf32, #tpu.memory_space<vmem>>)
      %c1_i32_279 = arith.constant 1 : i32
      %c0_i32_280 = arith.constant 0 : i32
      %c0_i32_281 = arith.constant 0 : i32
      %470 = tpu.memref_slice %arg8[%c0_i32_280, %c0_i32_281] : memref<32x32xf32, #tpu.memory_space<any>> -> memref<1x32xf32, #tpu.memory_space<any>>
      %c0_i32_282 = arith.constant 0 : i32
      %c0_i32_283 = arith.constant 0 : i32
      %471 = tpu.memref_slice %arg13[%c0_i32_282, %c0_i32_283] : memref<72x32xf32, #tpu.memory_space<vmem>> -> memref<1x32xf32, #tpu.memory_space<vmem>>
      %472 = tpu.memref_slice %arg14[%c1_i32_279] : memref<2x!tpu.dma_semaphore, #tpu.memory_space<semaphore_mem>> -> memref<1x!tpu.dma_semaphore, #tpu.memory_space<semaphore_mem>>
      %473 = tpu.memref_squeeze %472 : memref<1x!tpu.dma_semaphore, #tpu.memory_space<semaphore_mem>> -> memref<!tpu.dma_semaphore, #tpu.memory_space<semaphore_mem>>
      tpu.wait_dma2 semaphore(%473 : memref<!tpu.dma_semaphore, #tpu.memory_space<semaphore_mem>>) src(%470 : memref<1x32xf32, #tpu.memory_space<any>>) dst(%471 : memref<1x32xf32, #tpu.memory_space<vmem>>)
      %c1_i32_284 = arith.constant 1 : i32
      %c0_i32_285 = arith.constant 0 : i32
      %c0_i32_286 = arith.constant 0 : i32
      %474 = tpu.memref_slice %arg8[%c0_i32_285, %c0_i32_286] : memref<32x32xf32, #tpu.memory_space<any>> -> memref<1x32xf32, #tpu.memory_space<any>>
      %c0_i32_287 = arith.constant 0 : i32
      %c0_i32_288 = arith.constant 0 : i32
      %475 = tpu.memref_slice %arg13[%c0_i32_287, %c0_i32_288] : memref<72x32xf32, #tpu.memory_space<vmem>> -> memref<1x32xf32, #tpu.memory_space<vmem>>
      %476 = tpu.memref_slice %arg14[%c1_i32_284] : memref<2x!tpu.dma_semaphore, #tpu.memory_space<semaphore_mem>> -> memref<1x!tpu.dma_semaphore, #tpu.memory_space<semaphore_mem>>
      %477 = tpu.memref_squeeze %476 : memref<1x!tpu.dma_semaphore, #tpu.memory_space<semaphore_mem>> -> memref<!tpu.dma_semaphore, #tpu.memory_space<semaphore_mem>>
      tpu.wait_dma2 semaphore(%477 : memref<!tpu.dma_semaphore, #tpu.memory_space<semaphore_mem>>) src(%474 : memref<1x32xf32, #tpu.memory_space<any>>) dst(%475 : memref<1x32xf32, #tpu.memory_space<vmem>>)
      %c1_i32_289 = arith.constant 1 : i32
      %c0_i32_290 = arith.constant 0 : i32
      %c0_i32_291 = arith.constant 0 : i32
      %478 = tpu.memref_slice %arg8[%c0_i32_290, %c0_i32_291] : memref<32x32xf32, #tpu.memory_space<any>> -> memref<1x32xf32, #tpu.memory_space<any>>
      %c0_i32_292 = arith.constant 0 : i32
      %c0_i32_293 = arith.constant 0 : i32
      %479 = tpu.memref_slice %arg13[%c0_i32_292, %c0_i32_293] : memref<72x32xf32, #tpu.memory_space<vmem>> -> memref<1x32xf32, #tpu.memory_space<vmem>>
      %480 = tpu.memref_slice %arg14[%c1_i32_289] : memref<2x!tpu.dma_semaphore, #tpu.memory_space<semaphore_mem>> -> memref<1x!tpu.dma_semaphore, #tpu.memory_space<semaphore_mem>>
      %481 = tpu.memref_squeeze %480 : memref<1x!tpu.dma_semaphore, #tpu.memory_space<semaphore_mem>> -> memref<!tpu.dma_semaphore, #tpu.memory_space<semaphore_mem>>
      tpu.wait_dma2 semaphore(%481 : memref<!tpu.dma_semaphore, #tpu.memory_space<semaphore_mem>>) src(%478 : memref<1x32xf32, #tpu.memory_space<any>>) dst(%479 : memref<1x32xf32, #tpu.memory_space<vmem>>)
      %c1_i32_294 = arith.constant 1 : i32
      %c0_i32_295 = arith.constant 0 : i32
      %c0_i32_296 = arith.constant 0 : i32
      %482 = tpu.memref_slice %arg8[%c0_i32_295, %c0_i32_296] : memref<32x32xf32, #tpu.memory_space<any>> -> memref<1x32xf32, #tpu.memory_space<any>>
      %c0_i32_297 = arith.constant 0 : i32
      %c0_i32_298 = arith.constant 0 : i32
      %483 = tpu.memref_slice %arg13[%c0_i32_297, %c0_i32_298] : memref<72x32xf32, #tpu.memory_space<vmem>> -> memref<1x32xf32, #tpu.memory_space<vmem>>
      %484 = tpu.memref_slice %arg14[%c1_i32_294] : memref<2x!tpu.dma_semaphore, #tpu.memory_space<semaphore_mem>> -> memref<1x!tpu.dma_semaphore, #tpu.memory_space<semaphore_mem>>
      %485 = tpu.memref_squeeze %484 : memref<1x!tpu.dma_semaphore, #tpu.memory_space<semaphore_mem>> -> memref<!tpu.dma_semaphore, #tpu.memory_space<semaphore_mem>>
      tpu.wait_dma2 semaphore(%485 : memref<!tpu.dma_semaphore, #tpu.memory_space<semaphore_mem>>) src(%482 : memref<1x32xf32, #tpu.memory_space<any>>) dst(%483 : memref<1x32xf32, #tpu.memory_space<vmem>>)
      %c1_i32_299 = arith.constant 1 : i32
      %c0_i32_300 = arith.constant 0 : i32
      %c0_i32_301 = arith.constant 0 : i32
      %486 = tpu.memref_slice %arg8[%c0_i32_300, %c0_i32_301] : memref<32x32xf32, #tpu.memory_space<any>> -> memref<1x32xf32, #tpu.memory_space<any>>
      %c0_i32_302 = arith.constant 0 : i32
      %c0_i32_303 = arith.constant 0 : i32
      %487 = tpu.memref_slice %arg13[%c0_i32_302, %c0_i32_303] : memref<72x32xf32, #tpu.memory_space<vmem>> -> memref<1x32xf32, #tpu.memory_space<vmem>>
      %488 = tpu.memref_slice %arg14[%c1_i32_299] : memref<2x!tpu.dma_semaphore, #tpu.memory_space<semaphore_mem>> -> memref<1x!tpu.dma_semaphore, #tpu.memory_space<semaphore_mem>>
      %489 = tpu.memref_squeeze %488 : memref<1x!tpu.dma_semaphore, #tpu.memory_space<semaphore_mem>> -> memref<!tpu.dma_semaphore, #tpu.memory_space<semaphore_mem>>
      tpu.wait_dma2 semaphore(%489 : memref<!tpu.dma_semaphore, #tpu.memory_space<semaphore_mem>>) src(%486 : memref<1x32xf32, #tpu.memory_space<any>>) dst(%487 : memref<1x32xf32, #tpu.memory_space<vmem>>)
      %c1_i32_304 = arith.constant 1 : i32
      %c0_i32_305 = arith.constant 0 : i32
      %c0_i32_306 = arith.constant 0 : i32
      %490 = tpu.memref_slice %arg8[%c0_i32_305, %c0_i32_306] : memref<32x32xf32, #tpu.memory_space<any>> -> memref<1x32xf32, #tpu.memory_space<any>>
      %c0_i32_307 = arith.constant 0 : i32
      %c0_i32_308 = arith.constant 0 : i32
      %491 = tpu.memref_slice %arg13[%c0_i32_307, %c0_i32_308] : memref<72x32xf32, #tpu.memory_space<vmem>> -> memref<1x32xf32, #tpu.memory_space<vmem>>
      %492 = tpu.memref_slice %arg14[%c1_i32_304] : memref<2x!tpu.dma_semaphore, #tpu.memory_space<semaphore_mem>> -> memref<1x!tpu.dma_semaphore, #tpu.memory_space<semaphore_mem>>
      %493 = tpu.memref_squeeze %492 : memref<1x!tpu.dma_semaphore, #tpu.memory_space<semaphore_mem>> -> memref<!tpu.dma_semaphore, #tpu.memory_space<semaphore_mem>>
      tpu.wait_dma2 semaphore(%493 : memref<!tpu.dma_semaphore, #tpu.memory_space<semaphore_mem>>) src(%490 : memref<1x32xf32, #tpu.memory_space<any>>) dst(%491 : memref<1x32xf32, #tpu.memory_space<vmem>>)
    }
    %c0_i32_5 = arith.constant 0 : i32
    %c0_i32_6 = arith.constant 0 : i32
    %c8_i32_7 = arith.constant 8 : i32
    %3 = arith.addi %c0_i32_6, %c8_i32_7 : i32
    %c1_i32_8 = arith.constant 1 : i32
    scf.for %arg15 = %c0_i32_6 to %3 step %c1_i32_8  : i32 {
      %c0_i32_108 = arith.constant 0 : i32
      %c0_i32_109 = arith.constant 0 : i32
      %c0_i32_110 = arith.constant 0 : i32
      %238 = tpu.memref_slice %arg5[%c0_i32_109, %c0_i32_110] : memref<64x32xf32, #tpu.memory_space<any>> -> memref<1x32xf32, #tpu.memory_space<any>>
      %c0_i32_111 = arith.constant 0 : i32
      %c0_i32_112 = arith.constant 0 : i32
      %239 = tpu.memref_slice %arg10[%c0_i32_111, %c0_i32_112] : memref<8x32xf32, #tpu.memory_space<vmem>> -> memref<1x32xf32, #tpu.memory_space<vmem>>
      %240 = tpu.memref_slice %arg14[%c0_i32_108] : memref<2x!tpu.dma_semaphore, #tpu.memory_space<semaphore_mem>> -> memref<1x!tpu.dma_semaphore, #tpu.memory_space<semaphore_mem>>
      %241 = tpu.memref_squeeze %240 : memref<1x!tpu.dma_semaphore, #tpu.memory_space<semaphore_mem>> -> memref<!tpu.dma_semaphore, #tpu.memory_space<semaphore_mem>>
      tpu.wait_dma2 semaphore(%241 : memref<!tpu.dma_semaphore, #tpu.memory_space<semaphore_mem>>) src(%238 : memref<1x32xf32, #tpu.memory_space<any>>) dst(%239 : memref<1x32xf32, #tpu.memory_space<vmem>>)
      %c0_i32_113 = arith.constant 0 : i32
      %c0_i32_114 = arith.constant 0 : i32
      %c0_i32_115 = arith.constant 0 : i32
      %242 = tpu.memref_slice %arg6[%c0_i32_114, %c0_i32_115] : memref<64x32xf32, #tpu.memory_space<any>> -> memref<1x32xf32, #tpu.memory_space<any>>
      %c0_i32_116 = arith.constant 0 : i32
      %c0_i32_117 = arith.constant 0 : i32
      %243 = tpu.memref_slice %arg11[%c0_i32_116, %c0_i32_117] : memref<72x32xf32, #tpu.memory_space<vmem>> -> memref<1x32xf32, #tpu.memory_space<vmem>>
      %244 = tpu.memref_slice %arg14[%c0_i32_113] : memref<2x!tpu.dma_semaphore, #tpu.memory_space<semaphore_mem>> -> memref<1x!tpu.dma_semaphore, #tpu.memory_space<semaphore_mem>>
      %245 = tpu.memref_squeeze %244 : memref<1x!tpu.dma_semaphore, #tpu.memory_space<semaphore_mem>> -> memref<!tpu.dma_semaphore, #tpu.memory_space<semaphore_mem>>
      tpu.wait_dma2 semaphore(%245 : memref<!tpu.dma_semaphore, #tpu.memory_space<semaphore_mem>>) src(%242 : memref<1x32xf32, #tpu.memory_space<any>>) dst(%243 : memref<1x32xf32, #tpu.memory_space<vmem>>)
      %c0_i32_118 = arith.constant 0 : i32
      %c0_i32_119 = arith.constant 0 : i32
      %c0_i32_120 = arith.constant 0 : i32
      %246 = tpu.memref_slice %arg6[%c0_i32_119, %c0_i32_120] : memref<64x32xf32, #tpu.memory_space<any>> -> memref<1x32xf32, #tpu.memory_space<any>>
      %c0_i32_121 = arith.constant 0 : i32
      %c0_i32_122 = arith.constant 0 : i32
      %247 = tpu.memref_slice %arg11[%c0_i32_121, %c0_i32_122] : memref<72x32xf32, #tpu.memory_space<vmem>> -> memref<1x32xf32, #tpu.memory_space<vmem>>
      %248 = tpu.memref_slice %arg14[%c0_i32_118] : memref<2x!tpu.dma_semaphore, #tpu.memory_space<semaphore_mem>> -> memref<1x!tpu.dma_semaphore, #tpu.memory_space<semaphore_mem>>
      %249 = tpu.memref_squeeze %248 : memref<1x!tpu.dma_semaphore, #tpu.memory_space<semaphore_mem>> -> memref<!tpu.dma_semaphore, #tpu.memory_space<semaphore_mem>>
      tpu.wait_dma2 semaphore(%249 : memref<!tpu.dma_semaphore, #tpu.memory_space<semaphore_mem>>) src(%246 : memref<1x32xf32, #tpu.memory_space<any>>) dst(%247 : memref<1x32xf32, #tpu.memory_space<vmem>>)
      %c0_i32_123 = arith.constant 0 : i32
      %c0_i32_124 = arith.constant 0 : i32
      %c0_i32_125 = arith.constant 0 : i32
      %250 = tpu.memref_slice %arg6[%c0_i32_124, %c0_i32_125] : memref<64x32xf32, #tpu.memory_space<any>> -> memref<1x32xf32, #tpu.memory_space<any>>
      %c0_i32_126 = arith.constant 0 : i32
      %c0_i32_127 = arith.constant 0 : i32
      %251 = tpu.memref_slice %arg11[%c0_i32_126, %c0_i32_127] : memref<72x32xf32, #tpu.memory_space<vmem>> -> memref<1x32xf32, #tpu.memory_space<vmem>>
      %252 = tpu.memref_slice %arg14[%c0_i32_123] : memref<2x!tpu.dma_semaphore, #tpu.memory_space<semaphore_mem>> -> memref<1x!tpu.dma_semaphore, #tpu.memory_space<semaphore_mem>>
      %253 = tpu.memref_squeeze %252 : memref<1x!tpu.dma_semaphore, #tpu.memory_space<semaphore_mem>> -> memref<!tpu.dma_semaphore, #tpu.memory_space<semaphore_mem>>
      tpu.wait_dma2 semaphore(%253 : memref<!tpu.dma_semaphore, #tpu.memory_space<semaphore_mem>>) src(%250 : memref<1x32xf32, #tpu.memory_space<any>>) dst(%251 : memref<1x32xf32, #tpu.memory_space<vmem>>)
      %c0_i32_128 = arith.constant 0 : i32
      %c0_i32_129 = arith.constant 0 : i32
      %c0_i32_130 = arith.constant 0 : i32
      %254 = tpu.memref_slice %arg6[%c0_i32_129, %c0_i32_130] : memref<64x32xf32, #tpu.memory_space<any>> -> memref<1x32xf32, #tpu.memory_space<any>>
      %c0_i32_131 = arith.constant 0 : i32
      %c0_i32_132 = arith.constant 0 : i32
      %255 = tpu.memref_slice %arg11[%c0_i32_131, %c0_i32_132] : memref<72x32xf32, #tpu.memory_space<vmem>> -> memref<1x32xf32, #tpu.memory_space<vmem>>
      %256 = tpu.memref_slice %arg14[%c0_i32_128] : memref<2x!tpu.dma_semaphore, #tpu.memory_space<semaphore_mem>> -> memref<1x!tpu.dma_semaphore, #tpu.memory_space<semaphore_mem>>
      %257 = tpu.memref_squeeze %256 : memref<1x!tpu.dma_semaphore, #tpu.memory_space<semaphore_mem>> -> memref<!tpu.dma_semaphore, #tpu.memory_space<semaphore_mem>>
      tpu.wait_dma2 semaphore(%257 : memref<!tpu.dma_semaphore, #tpu.memory_space<semaphore_mem>>) src(%254 : memref<1x32xf32, #tpu.memory_space<any>>) dst(%255 : memref<1x32xf32, #tpu.memory_space<vmem>>)
      %c0_i32_133 = arith.constant 0 : i32
      %c0_i32_134 = arith.constant 0 : i32
      %c0_i32_135 = arith.constant 0 : i32
      %258 = tpu.memref_slice %arg6[%c0_i32_134, %c0_i32_135] : memref<64x32xf32, #tpu.memory_space<any>> -> memref<1x32xf32, #tpu.memory_space<any>>
      %c0_i32_136 = arith.constant 0 : i32
      %c0_i32_137 = arith.constant 0 : i32
      %259 = tpu.memref_slice %arg11[%c0_i32_136, %c0_i32_137] : memref<72x32xf32, #tpu.memory_space<vmem>> -> memref<1x32xf32, #tpu.memory_space<vmem>>
      %260 = tpu.memref_slice %arg14[%c0_i32_133] : memref<2x!tpu.dma_semaphore, #tpu.memory_space<semaphore_mem>> -> memref<1x!tpu.dma_semaphore, #tpu.memory_space<semaphore_mem>>
      %261 = tpu.memref_squeeze %260 : memref<1x!tpu.dma_semaphore, #tpu.memory_space<semaphore_mem>> -> memref<!tpu.dma_semaphore, #tpu.memory_space<semaphore_mem>>
      tpu.wait_dma2 semaphore(%261 : memref<!tpu.dma_semaphore, #tpu.memory_space<semaphore_mem>>) src(%258 : memref<1x32xf32, #tpu.memory_space<any>>) dst(%259 : memref<1x32xf32, #tpu.memory_space<vmem>>)
      %c0_i32_138 = arith.constant 0 : i32
      %c0_i32_139 = arith.constant 0 : i32
      %c0_i32_140 = arith.constant 0 : i32
      %262 = tpu.memref_slice %arg6[%c0_i32_139, %c0_i32_140] : memref<64x32xf32, #tpu.memory_space<any>> -> memref<1x32xf32, #tpu.memory_space<any>>
      %c0_i32_141 = arith.constant 0 : i32
      %c0_i32_142 = arith.constant 0 : i32
      %263 = tpu.memref_slice %arg11[%c0_i32_141, %c0_i32_142] : memref<72x32xf32, #tpu.memory_space<vmem>> -> memref<1x32xf32, #tpu.memory_space<vmem>>
      %264 = tpu.memref_slice %arg14[%c0_i32_138] : memref<2x!tpu.dma_semaphore, #tpu.memory_space<semaphore_mem>> -> memref<1x!tpu.dma_semaphore, #tpu.memory_space<semaphore_mem>>
      %265 = tpu.memref_squeeze %264 : memref<1x!tpu.dma_semaphore, #tpu.memory_space<semaphore_mem>> -> memref<!tpu.dma_semaphore, #tpu.memory_space<semaphore_mem>>
      tpu.wait_dma2 semaphore(%265 : memref<!tpu.dma_semaphore, #tpu.memory_space<semaphore_mem>>) src(%262 : memref<1x32xf32, #tpu.memory_space<any>>) dst(%263 : memref<1x32xf32, #tpu.memory_space<vmem>>)
      %c0_i32_143 = arith.constant 0 : i32
      %c0_i32_144 = arith.constant 0 : i32
      %c0_i32_145 = arith.constant 0 : i32
      %266 = tpu.memref_slice %arg6[%c0_i32_144, %c0_i32_145] : memref<64x32xf32, #tpu.memory_space<any>> -> memref<1x32xf32, #tpu.memory_space<any>>
      %c0_i32_146 = arith.constant 0 : i32
      %c0_i32_147 = arith.constant 0 : i32
      %267 = tpu.memref_slice %arg11[%c0_i32_146, %c0_i32_147] : memref<72x32xf32, #tpu.memory_space<vmem>> -> memref<1x32xf32, #tpu.memory_space<vmem>>
      %268 = tpu.memref_slice %arg14[%c0_i32_143] : memref<2x!tpu.dma_semaphore, #tpu.memory_space<semaphore_mem>> -> memref<1x!tpu.dma_semaphore, #tpu.memory_space<semaphore_mem>>
      %269 = tpu.memref_squeeze %268 : memref<1x!tpu.dma_semaphore, #tpu.memory_space<semaphore_mem>> -> memref<!tpu.dma_semaphore, #tpu.memory_space<semaphore_mem>>
      tpu.wait_dma2 semaphore(%269 : memref<!tpu.dma_semaphore, #tpu.memory_space<semaphore_mem>>) src(%266 : memref<1x32xf32, #tpu.memory_space<any>>) dst(%267 : memref<1x32xf32, #tpu.memory_space<vmem>>)
      %c0_i32_148 = arith.constant 0 : i32
      %c0_i32_149 = arith.constant 0 : i32
      %c0_i32_150 = arith.constant 0 : i32
      %270 = tpu.memref_slice %arg6[%c0_i32_149, %c0_i32_150] : memref<64x32xf32, #tpu.memory_space<any>> -> memref<1x32xf32, #tpu.memory_space<any>>
      %c0_i32_151 = arith.constant 0 : i32
      %c0_i32_152 = arith.constant 0 : i32
      %271 = tpu.memref_slice %arg11[%c0_i32_151, %c0_i32_152] : memref<72x32xf32, #tpu.memory_space<vmem>> -> memref<1x32xf32, #tpu.memory_space<vmem>>
      %272 = tpu.memref_slice %arg14[%c0_i32_148] : memref<2x!tpu.dma_semaphore, #tpu.memory_space<semaphore_mem>> -> memref<1x!tpu.dma_semaphore, #tpu.memory_space<semaphore_mem>>
      %273 = tpu.memref_squeeze %272 : memref<1x!tpu.dma_semaphore, #tpu.memory_space<semaphore_mem>> -> memref<!tpu.dma_semaphore, #tpu.memory_space<semaphore_mem>>
      tpu.wait_dma2 semaphore(%273 : memref<!tpu.dma_semaphore, #tpu.memory_space<semaphore_mem>>) src(%270 : memref<1x32xf32, #tpu.memory_space<any>>) dst(%271 : memref<1x32xf32, #tpu.memory_space<vmem>>)
      %c0_i32_153 = arith.constant 0 : i32
      %c0_i32_154 = arith.constant 0 : i32
      %c0_i32_155 = arith.constant 0 : i32
      %274 = tpu.memref_slice %arg6[%c0_i32_154, %c0_i32_155] : memref<64x32xf32, #tpu.memory_space<any>> -> memref<1x32xf32, #tpu.memory_space<any>>
      %c0_i32_156 = arith.constant 0 : i32
      %c0_i32_157 = arith.constant 0 : i32
      %275 = tpu.memref_slice %arg11[%c0_i32_156, %c0_i32_157] : memref<72x32xf32, #tpu.memory_space<vmem>> -> memref<1x32xf32, #tpu.memory_space<vmem>>
      %276 = tpu.memref_slice %arg14[%c0_i32_153] : memref<2x!tpu.dma_semaphore, #tpu.memory_space<semaphore_mem>> -> memref<1x!tpu.dma_semaphore, #tpu.memory_space<semaphore_mem>>
      %277 = tpu.memref_squeeze %276 : memref<1x!tpu.dma_semaphore, #tpu.memory_space<semaphore_mem>> -> memref<!tpu.dma_semaphore, #tpu.memory_space<semaphore_mem>>
      tpu.wait_dma2 semaphore(%277 : memref<!tpu.dma_semaphore, #tpu.memory_space<semaphore_mem>>) src(%274 : memref<1x32xf32, #tpu.memory_space<any>>) dst(%275 : memref<1x32xf32, #tpu.memory_space<vmem>>)
      %c1_i32_158 = arith.constant 1 : i32
      %c0_i32_159 = arith.constant 0 : i32
      %c0_i32_160 = arith.constant 0 : i32
      %278 = tpu.memref_slice %arg7[%c0_i32_159, %c0_i32_160] : memref<32x32xf32, #tpu.memory_space<any>> -> memref<1x32xf32, #tpu.memory_space<any>>
      %c0_i32_161 = arith.constant 0 : i32
      %c0_i32_162 = arith.constant 0 : i32
      %279 = tpu.memref_slice %arg12[%c0_i32_161, %c0_i32_162] : memref<8x32xf32, #tpu.memory_space<vmem>> -> memref<1x32xf32, #tpu.memory_space<vmem>>
      %280 = tpu.memref_slice %arg14[%c1_i32_158] : memref<2x!tpu.dma_semaphore, #tpu.memory_space<semaphore_mem>> -> memref<1x!tpu.dma_semaphore, #tpu.memory_space<semaphore_mem>>
      %281 = tpu.memref_squeeze %280 : memref<1x!tpu.dma_semaphore, #tpu.memory_space<semaphore_mem>> -> memref<!tpu.dma_semaphore, #tpu.memory_space<semaphore_mem>>
      tpu.wait_dma2 semaphore(%281 : memref<!tpu.dma_semaphore, #tpu.memory_space<semaphore_mem>>) src(%278 : memref<1x32xf32, #tpu.memory_space<any>>) dst(%279 : memref<1x32xf32, #tpu.memory_space<vmem>>)
      %c1_i32_163 = arith.constant 1 : i32
      %c0_i32_164 = arith.constant 0 : i32
      %c0_i32_165 = arith.constant 0 : i32
      %282 = tpu.memref_slice %arg8[%c0_i32_164, %c0_i32_165] : memref<32x32xf32, #tpu.memory_space<any>> -> memref<1x32xf32, #tpu.memory_space<any>>
      %c0_i32_166 = arith.constant 0 : i32
      %c0_i32_167 = arith.constant 0 : i32
      %283 = tpu.memref_slice %arg13[%c0_i32_166, %c0_i32_167] : memref<72x32xf32, #tpu.memory_space<vmem>> -> memref<1x32xf32, #tpu.memory_space<vmem>>
      %284 = tpu.memref_slice %arg14[%c1_i32_163] : memref<2x!tpu.dma_semaphore, #tpu.memory_space<semaphore_mem>> -> memref<1x!tpu.dma_semaphore, #tpu.memory_space<semaphore_mem>>
      %285 = tpu.memref_squeeze %284 : memref<1x!tpu.dma_semaphore, #tpu.memory_space<semaphore_mem>> -> memref<!tpu.dma_semaphore, #tpu.memory_space<semaphore_mem>>
      tpu.wait_dma2 semaphore(%285 : memref<!tpu.dma_semaphore, #tpu.memory_space<semaphore_mem>>) src(%282 : memref<1x32xf32, #tpu.memory_space<any>>) dst(%283 : memref<1x32xf32, #tpu.memory_space<vmem>>)
      %c1_i32_168 = arith.constant 1 : i32
      %c0_i32_169 = arith.constant 0 : i32
      %c0_i32_170 = arith.constant 0 : i32
      %286 = tpu.memref_slice %arg8[%c0_i32_169, %c0_i32_170] : memref<32x32xf32, #tpu.memory_space<any>> -> memref<1x32xf32, #tpu.memory_space<any>>
      %c0_i32_171 = arith.constant 0 : i32
      %c0_i32_172 = arith.constant 0 : i32
      %287 = tpu.memref_slice %arg13[%c0_i32_171, %c0_i32_172] : memref<72x32xf32, #tpu.memory_space<vmem>> -> memref<1x32xf32, #tpu.memory_space<vmem>>
      %288 = tpu.memref_slice %arg14[%c1_i32_168] : memref<2x!tpu.dma_semaphore, #tpu.memory_space<semaphore_mem>> -> memref<1x!tpu.dma_semaphore, #tpu.memory_space<semaphore_mem>>
      %289 = tpu.memref_squeeze %288 : memref<1x!tpu.dma_semaphore, #tpu.memory_space<semaphore_mem>> -> memref<!tpu.dma_semaphore, #tpu.memory_space<semaphore_mem>>
      tpu.wait_dma2 semaphore(%289 : memref<!tpu.dma_semaphore, #tpu.memory_space<semaphore_mem>>) src(%286 : memref<1x32xf32, #tpu.memory_space<any>>) dst(%287 : memref<1x32xf32, #tpu.memory_space<vmem>>)
      %c1_i32_173 = arith.constant 1 : i32
      %c0_i32_174 = arith.constant 0 : i32
      %c0_i32_175 = arith.constant 0 : i32
      %290 = tpu.memref_slice %arg8[%c0_i32_174, %c0_i32_175] : memref<32x32xf32, #tpu.memory_space<any>> -> memref<1x32xf32, #tpu.memory_space<any>>
      %c0_i32_176 = arith.constant 0 : i32
      %c0_i32_177 = arith.constant 0 : i32
      %291 = tpu.memref_slice %arg13[%c0_i32_176, %c0_i32_177] : memref<72x32xf32, #tpu.memory_space<vmem>> -> memref<1x32xf32, #tpu.memory_space<vmem>>
      %292 = tpu.memref_slice %arg14[%c1_i32_173] : memref<2x!tpu.dma_semaphore, #tpu.memory_space<semaphore_mem>> -> memref<1x!tpu.dma_semaphore, #tpu.memory_space<semaphore_mem>>
      %293 = tpu.memref_squeeze %292 : memref<1x!tpu.dma_semaphore, #tpu.memory_space<semaphore_mem>> -> memref<!tpu.dma_semaphore, #tpu.memory_space<semaphore_mem>>
      tpu.wait_dma2 semaphore(%293 : memref<!tpu.dma_semaphore, #tpu.memory_space<semaphore_mem>>) src(%290 : memref<1x32xf32, #tpu.memory_space<any>>) dst(%291 : memref<1x32xf32, #tpu.memory_space<vmem>>)
      %c1_i32_178 = arith.constant 1 : i32
      %c0_i32_179 = arith.constant 0 : i32
      %c0_i32_180 = arith.constant 0 : i32
      %294 = tpu.memref_slice %arg8[%c0_i32_179, %c0_i32_180] : memref<32x32xf32, #tpu.memory_space<any>> -> memref<1x32xf32, #tpu.memory_space<any>>
      %c0_i32_181 = arith.constant 0 : i32
      %c0_i32_182 = arith.constant 0 : i32
      %295 = tpu.memref_slice %arg13[%c0_i32_181, %c0_i32_182] : memref<72x32xf32, #tpu.memory_space<vmem>> -> memref<1x32xf32, #tpu.memory_space<vmem>>
      %296 = tpu.memref_slice %arg14[%c1_i32_178] : memref<2x!tpu.dma_semaphore, #tpu.memory_space<semaphore_mem>> -> memref<1x!tpu.dma_semaphore, #tpu.memory_space<semaphore_mem>>
      %297 = tpu.memref_squeeze %296 : memref<1x!tpu.dma_semaphore, #tpu.memory_space<semaphore_mem>> -> memref<!tpu.dma_semaphore, #tpu.memory_space<semaphore_mem>>
      tpu.wait_dma2 semaphore(%297 : memref<!tpu.dma_semaphore, #tpu.memory_space<semaphore_mem>>) src(%294 : memref<1x32xf32, #tpu.memory_space<any>>) dst(%295 : memref<1x32xf32, #tpu.memory_space<vmem>>)
      %c1_i32_183 = arith.constant 1 : i32
      %c0_i32_184 = arith.constant 0 : i32
      %c0_i32_185 = arith.constant 0 : i32
      %298 = tpu.memref_slice %arg8[%c0_i32_184, %c0_i32_185] : memref<32x32xf32, #tpu.memory_space<any>> -> memref<1x32xf32, #tpu.memory_space<any>>
      %c0_i32_186 = arith.constant 0 : i32
      %c0_i32_187 = arith.constant 0 : i32
      %299 = tpu.memref_slice %arg13[%c0_i32_186, %c0_i32_187] : memref<72x32xf32, #tpu.memory_space<vmem>> -> memref<1x32xf32, #tpu.memory_space<vmem>>
      %300 = tpu.memref_slice %arg14[%c1_i32_183] : memref<2x!tpu.dma_semaphore, #tpu.memory_space<semaphore_mem>> -> memref<1x!tpu.dma_semaphore, #tpu.memory_space<semaphore_mem>>
      %301 = tpu.memref_squeeze %300 : memref<1x!tpu.dma_semaphore, #tpu.memory_space<semaphore_mem>> -> memref<!tpu.dma_semaphore, #tpu.memory_space<semaphore_mem>>
      tpu.wait_dma2 semaphore(%301 : memref<!tpu.dma_semaphore, #tpu.memory_space<semaphore_mem>>) src(%298 : memref<1x32xf32, #tpu.memory_space<any>>) dst(%299 : memref<1x32xf32, #tpu.memory_space<vmem>>)
      %c1_i32_188 = arith.constant 1 : i32
      %c0_i32_189 = arith.constant 0 : i32
      %c0_i32_190 = arith.constant 0 : i32
      %302 = tpu.memref_slice %arg8[%c0_i32_189, %c0_i32_190] : memref<32x32xf32, #tpu.memory_space<any>> -> memref<1x32xf32, #tpu.memory_space<any>>
      %c0_i32_191 = arith.constant 0 : i32
      %c0_i32_192 = arith.constant 0 : i32
      %303 = tpu.memref_slice %arg13[%c0_i32_191, %c0_i32_192] : memref<72x32xf32, #tpu.memory_space<vmem>> -> memref<1x32xf32, #tpu.memory_space<vmem>>
      %304 = tpu.memref_slice %arg14[%c1_i32_188] : memref<2x!tpu.dma_semaphore, #tpu.memory_space<semaphore_mem>> -> memref<1x!tpu.dma_semaphore, #tpu.memory_space<semaphore_mem>>
      %305 = tpu.memref_squeeze %304 : memref<1x!tpu.dma_semaphore, #tpu.memory_space<semaphore_mem>> -> memref<!tpu.dma_semaphore, #tpu.memory_space<semaphore_mem>>
      tpu.wait_dma2 semaphore(%305 : memref<!tpu.dma_semaphore, #tpu.memory_space<semaphore_mem>>) src(%302 : memref<1x32xf32, #tpu.memory_space<any>>) dst(%303 : memref<1x32xf32, #tpu.memory_space<vmem>>)
      %c1_i32_193 = arith.constant 1 : i32
      %c0_i32_194 = arith.constant 0 : i32
      %c0_i32_195 = arith.constant 0 : i32
      %306 = tpu.memref_slice %arg8[%c0_i32_194, %c0_i32_195] : memref<32x32xf32, #tpu.memory_space<any>> -> memref<1x32xf32, #tpu.memory_space<any>>
      %c0_i32_196 = arith.constant 0 : i32
      %c0_i32_197 = arith.constant 0 : i32
      %307 = tpu.memref_slice %arg13[%c0_i32_196, %c0_i32_197] : memref<72x32xf32, #tpu.memory_space<vmem>> -> memref<1x32xf32, #tpu.memory_space<vmem>>
      %308 = tpu.memref_slice %arg14[%c1_i32_193] : memref<2x!tpu.dma_semaphore, #tpu.memory_space<semaphore_mem>> -> memref<1x!tpu.dma_semaphore, #tpu.memory_space<semaphore_mem>>
      %309 = tpu.memref_squeeze %308 : memref<1x!tpu.dma_semaphore, #tpu.memory_space<semaphore_mem>> -> memref<!tpu.dma_semaphore, #tpu.memory_space<semaphore_mem>>
      tpu.wait_dma2 semaphore(%309 : memref<!tpu.dma_semaphore, #tpu.memory_space<semaphore_mem>>) src(%306 : memref<1x32xf32, #tpu.memory_space<any>>) dst(%307 : memref<1x32xf32, #tpu.memory_space<vmem>>)
      %c1_i32_198 = arith.constant 1 : i32
      %c0_i32_199 = arith.constant 0 : i32
      %c0_i32_200 = arith.constant 0 : i32
      %310 = tpu.memref_slice %arg8[%c0_i32_199, %c0_i32_200] : memref<32x32xf32, #tpu.memory_space<any>> -> memref<1x32xf32, #tpu.memory_space<any>>
      %c0_i32_201 = arith.constant 0 : i32
      %c0_i32_202 = arith.constant 0 : i32
      %311 = tpu.memref_slice %arg13[%c0_i32_201, %c0_i32_202] : memref<72x32xf32, #tpu.memory_space<vmem>> -> memref<1x32xf32, #tpu.memory_space<vmem>>
      %312 = tpu.memref_slice %arg14[%c1_i32_198] : memref<2x!tpu.dma_semaphore, #tpu.memory_space<semaphore_mem>> -> memref<1x!tpu.dma_semaphore, #tpu.memory_space<semaphore_mem>>
      %313 = tpu.memref_squeeze %312 : memref<1x!tpu.dma_semaphore, #tpu.memory_space<semaphore_mem>> -> memref<!tpu.dma_semaphore, #tpu.memory_space<semaphore_mem>>
      tpu.wait_dma2 semaphore(%313 : memref<!tpu.dma_semaphore, #tpu.memory_space<semaphore_mem>>) src(%310 : memref<1x32xf32, #tpu.memory_space<any>>) dst(%311 : memref<1x32xf32, #tpu.memory_space<vmem>>)
      %c1_i32_203 = arith.constant 1 : i32
      %c0_i32_204 = arith.constant 0 : i32
      %c0_i32_205 = arith.constant 0 : i32
      %314 = tpu.memref_slice %arg8[%c0_i32_204, %c0_i32_205] : memref<32x32xf32, #tpu.memory_space<any>> -> memref<1x32xf32, #tpu.memory_space<any>>
      %c0_i32_206 = arith.constant 0 : i32
      %c0_i32_207 = arith.constant 0 : i32
      %315 = tpu.memref_slice %arg13[%c0_i32_206, %c0_i32_207] : memref<72x32xf32, #tpu.memory_space<vmem>> -> memref<1x32xf32, #tpu.memory_space<vmem>>
      %316 = tpu.memref_slice %arg14[%c1_i32_203] : memref<2x!tpu.dma_semaphore, #tpu.memory_space<semaphore_mem>> -> memref<1x!tpu.dma_semaphore, #tpu.memory_space<semaphore_mem>>
      %317 = tpu.memref_squeeze %316 : memref<1x!tpu.dma_semaphore, #tpu.memory_space<semaphore_mem>> -> memref<!tpu.dma_semaphore, #tpu.memory_space<semaphore_mem>>
      tpu.wait_dma2 semaphore(%317 : memref<!tpu.dma_semaphore, #tpu.memory_space<semaphore_mem>>) src(%314 : memref<1x32xf32, #tpu.memory_space<any>>) dst(%315 : memref<1x32xf32, #tpu.memory_space<vmem>>)
    }
    %4 = tpu.iota {dimensions = array<i32: 0>} : vector<8x1xi32>
    %5 = vector.broadcast %0 : i32 to vector<8x1xi32>
    %6 = arith.addi %5, %4 : vector<8x1xi32>
    %c8_i32_9 = arith.constant 8 : i32
    %7 = vector.broadcast %c8_i32_9 : i32 to vector<8x1xi32>
    %8 = arith.cmpi slt, %6, %7 : vector<8x1xi32>
    %c0 = arith.constant 0 : index
    %c0_10 = arith.constant 0 : index
    %9 = vector.load %arg10[%c0, %c0_10] : memref<8x32xf32, #tpu.memory_space<vmem>>, vector<8x32xf32>
    %cst = arith.constant 0.000000e+00 : f32
    %10 = vector.broadcast %cst : f32 to vector<8x1xf32>
    %c0_11 = arith.constant 0 : index
    %c0_12 = arith.constant 0 : index
    %11 = vector.load %arg11[%c0_11, %c0_12] : memref<72x32xf32, #tpu.memory_space<vmem>>, vector<8x32xf32>
    %12 = arith.mulf %11, %9 : vector<8x32xf32>
    %cst_13 = arith.constant dense<0.000000e+00> : vector<8xf32>
    %13 = vector.multi_reduction <add>, %12, %cst_13 [1] : vector<8x32xf32> to vector<8xf32>
    %14 = vector.shape_cast %13 : vector<8xf32> to vector<8x1xf32>
    %cst_14 = arith.constant -1.000000e+01 : f32
    %cst_15 = arith.constant 1.000000e+01 : f32
    %15 = vector.broadcast %cst_14 : f32 to vector<8x1xf32>
    %16 = arith.maximumf %15, %14 : vector<8x1xf32>
    %17 = vector.broadcast %cst_15 : f32 to vector<8x1xf32>
    %18 = arith.minimumf %17, %16 : vector<8x1xf32>
    %cst_16 = arith.constant 0.000000e+00 : f32
    %19 = vector.broadcast %cst_16 : f32 to vector<8x1xf32>
    %20 = arith.subf %19, %18 : vector<8x1xf32>
    %21 = math.exp %20 : vector<8x1xf32>
    %22 = math.log1p %21 : vector<8x1xf32>
    %23 = arith.addf %10, %22 : vector<8x1xf32>
    %c8 = arith.constant 8 : index
    %c0_17 = arith.constant 0 : index
    %24 = vector.load %arg11[%c8, %c0_17] : memref<72x32xf32, #tpu.memory_space<vmem>>, vector<8x32xf32>
    %25 = arith.mulf %24, %9 : vector<8x32xf32>
    %cst_18 = arith.constant dense<0.000000e+00> : vector<8xf32>
    %26 = vector.multi_reduction <add>, %25, %cst_18 [1] : vector<8x32xf32> to vector<8xf32>
    %27 = vector.shape_cast %26 : vector<8xf32> to vector<8x1xf32>
    %cst_19 = arith.constant -1.000000e+01 : f32
    %cst_20 = arith.constant 1.000000e+01 : f32
    %28 = vector.broadcast %cst_19 : f32 to vector<8x1xf32>
    %29 = arith.maximumf %28, %27 : vector<8x1xf32>
    %30 = vector.broadcast %cst_20 : f32 to vector<8x1xf32>
    %31 = arith.minimumf %30, %29 : vector<8x1xf32>
    %32 = math.exp %31 : vector<8x1xf32>
    %33 = math.log1p %32 : vector<8x1xf32>
    %34 = arith.addf %23, %33 : vector<8x1xf32>
    %c16 = arith.constant 16 : index
    %c0_21 = arith.constant 0 : index
    %35 = vector.load %arg11[%c16, %c0_21] : memref<72x32xf32, #tpu.memory_space<vmem>>, vector<8x32xf32>
    %36 = arith.mulf %35, %9 : vector<8x32xf32>
    %cst_22 = arith.constant dense<0.000000e+00> : vector<8xf32>
    %37 = vector.multi_reduction <add>, %36, %cst_22 [1] : vector<8x32xf32> to vector<8xf32>
    %38 = vector.shape_cast %37 : vector<8xf32> to vector<8x1xf32>
    %cst_23 = arith.constant -1.000000e+01 : f32
    %cst_24 = arith.constant 1.000000e+01 : f32
    %39 = vector.broadcast %cst_23 : f32 to vector<8x1xf32>
    %40 = arith.maximumf %39, %38 : vector<8x1xf32>
    %41 = vector.broadcast %cst_24 : f32 to vector<8x1xf32>
    %42 = arith.minimumf %41, %40 : vector<8x1xf32>
    %43 = math.exp %42 : vector<8x1xf32>
    %44 = math.log1p %43 : vector<8x1xf32>
    %45 = arith.addf %34, %44 : vector<8x1xf32>
    %c24 = arith.constant 24 : index
    %c0_25 = arith.constant 0 : index
    %46 = vector.load %arg11[%c24, %c0_25] : memref<72x32xf32, #tpu.memory_space<vmem>>, vector<8x32xf32>
    %47 = arith.mulf %46, %9 : vector<8x32xf32>
    %cst_26 = arith.constant dense<0.000000e+00> : vector<8xf32>
    %48 = vector.multi_reduction <add>, %47, %cst_26 [1] : vector<8x32xf32> to vector<8xf32>
    %49 = vector.shape_cast %48 : vector<8xf32> to vector<8x1xf32>
    %cst_27 = arith.constant -1.000000e+01 : f32
    %cst_28 = arith.constant 1.000000e+01 : f32
    %50 = vector.broadcast %cst_27 : f32 to vector<8x1xf32>
    %51 = arith.maximumf %50, %49 : vector<8x1xf32>
    %52 = vector.broadcast %cst_28 : f32 to vector<8x1xf32>
    %53 = arith.minimumf %52, %51 : vector<8x1xf32>
    %54 = math.exp %53 : vector<8x1xf32>
    %55 = math.log1p %54 : vector<8x1xf32>
    %56 = arith.addf %45, %55 : vector<8x1xf32>
    %c32 = arith.constant 32 : index
    %c0_29 = arith.constant 0 : index
    %57 = vector.load %arg11[%c32, %c0_29] : memref<72x32xf32, #tpu.memory_space<vmem>>, vector<8x32xf32>
    %58 = arith.mulf %57, %9 : vector<8x32xf32>
    %cst_30 = arith.constant dense<0.000000e+00> : vector<8xf32>
    %59 = vector.multi_reduction <add>, %58, %cst_30 [1] : vector<8x32xf32> to vector<8xf32>
    %60 = vector.shape_cast %59 : vector<8xf32> to vector<8x1xf32>
    %cst_31 = arith.constant -1.000000e+01 : f32
    %cst_32 = arith.constant 1.000000e+01 : f32
    %61 = vector.broadcast %cst_31 : f32 to vector<8x1xf32>
    %62 = arith.maximumf %61, %60 : vector<8x1xf32>
    %63 = vector.broadcast %cst_32 : f32 to vector<8x1xf32>
    %64 = arith.minimumf %63, %62 : vector<8x1xf32>
    %65 = math.exp %64 : vector<8x1xf32>
    %66 = math.log1p %65 : vector<8x1xf32>
    %67 = arith.addf %56, %66 : vector<8x1xf32>
    %c40 = arith.constant 40 : index
    %c0_33 = arith.constant 0 : index
    %68 = vector.load %arg11[%c40, %c0_33] : memref<72x32xf32, #tpu.memory_space<vmem>>, vector<8x32xf32>
    %69 = arith.mulf %68, %9 : vector<8x32xf32>
    %cst_34 = arith.constant dense<0.000000e+00> : vector<8xf32>
    %70 = vector.multi_reduction <add>, %69, %cst_34 [1] : vector<8x32xf32> to vector<8xf32>
    %71 = vector.shape_cast %70 : vector<8xf32> to vector<8x1xf32>
    %cst_35 = arith.constant -1.000000e+01 : f32
    %cst_36 = arith.constant 1.000000e+01 : f32
    %72 = vector.broadcast %cst_35 : f32 to vector<8x1xf32>
    %73 = arith.maximumf %72, %71 : vector<8x1xf32>
    %74 = vector.broadcast %cst_36 : f32 to vector<8x1xf32>
    %75 = arith.minimumf %74, %73 : vector<8x1xf32>
    %76 = math.exp %75 : vector<8x1xf32>
    %77 = math.log1p %76 : vector<8x1xf32>
    %78 = arith.addf %67, %77 : vector<8x1xf32>
    %c48 = arith.constant 48 : index
    %c0_37 = arith.constant 0 : index
    %79 = vector.load %arg11[%c48, %c0_37] : memref<72x32xf32, #tpu.memory_space<vmem>>, vector<8x32xf32>
    %80 = arith.mulf %79, %9 : vector<8x32xf32>
    %cst_38 = arith.constant dense<0.000000e+00> : vector<8xf32>
    %81 = vector.multi_reduction <add>, %80, %cst_38 [1] : vector<8x32xf32> to vector<8xf32>
    %82 = vector.shape_cast %81 : vector<8xf32> to vector<8x1xf32>
    %cst_39 = arith.constant -1.000000e+01 : f32
    %cst_40 = arith.constant 1.000000e+01 : f32
    %83 = vector.broadcast %cst_39 : f32 to vector<8x1xf32>
    %84 = arith.maximumf %83, %82 : vector<8x1xf32>
    %85 = vector.broadcast %cst_40 : f32 to vector<8x1xf32>
    %86 = arith.minimumf %85, %84 : vector<8x1xf32>
    %87 = math.exp %86 : vector<8x1xf32>
    %88 = math.log1p %87 : vector<8x1xf32>
    %89 = arith.addf %78, %88 : vector<8x1xf32>
    %c56 = arith.constant 56 : index
    %c0_41 = arith.constant 0 : index
    %90 = vector.load %arg11[%c56, %c0_41] : memref<72x32xf32, #tpu.memory_space<vmem>>, vector<8x32xf32>
    %91 = arith.mulf %90, %9 : vector<8x32xf32>
    %cst_42 = arith.constant dense<0.000000e+00> : vector<8xf32>
    %92 = vector.multi_reduction <add>, %91, %cst_42 [1] : vector<8x32xf32> to vector<8xf32>
    %93 = vector.shape_cast %92 : vector<8xf32> to vector<8x1xf32>
    %cst_43 = arith.constant -1.000000e+01 : f32
    %cst_44 = arith.constant 1.000000e+01 : f32
    %94 = vector.broadcast %cst_43 : f32 to vector<8x1xf32>
    %95 = arith.maximumf %94, %93 : vector<8x1xf32>
    %96 = vector.broadcast %cst_44 : f32 to vector<8x1xf32>
    %97 = arith.minimumf %96, %95 : vector<8x1xf32>
    %98 = math.exp %97 : vector<8x1xf32>
    %99 = math.log1p %98 : vector<8x1xf32>
    %100 = arith.addf %89, %99 : vector<8x1xf32>
    %c64 = arith.constant 64 : index
    %c0_45 = arith.constant 0 : index
    %101 = vector.load %arg11[%c64, %c0_45] : memref<72x32xf32, #tpu.memory_space<vmem>>, vector<8x32xf32>
    %102 = arith.mulf %101, %9 : vector<8x32xf32>
    %cst_46 = arith.constant dense<0.000000e+00> : vector<8xf32>
    %103 = vector.multi_reduction <add>, %102, %cst_46 [1] : vector<8x32xf32> to vector<8xf32>
    %104 = vector.shape_cast %103 : vector<8xf32> to vector<8x1xf32>
    %cst_47 = arith.constant -1.000000e+01 : f32
    %cst_48 = arith.constant 1.000000e+01 : f32
    %105 = vector.broadcast %cst_47 : f32 to vector<8x1xf32>
    %106 = arith.maximumf %105, %104 : vector<8x1xf32>
    %107 = vector.broadcast %cst_48 : f32 to vector<8x1xf32>
    %108 = arith.minimumf %107, %106 : vector<8x1xf32>
    %109 = math.exp %108 : vector<8x1xf32>
    %110 = math.log1p %109 : vector<8x1xf32>
    %111 = arith.addf %100, %110 : vector<8x1xf32>
    %cst_49 = arith.constant 0.000000e+00 : f32
    %112 = vector.broadcast %cst_49 : f32 to vector<8x1xf32>
    %113 = arith.select %8, %111, %112 : vector<8x1xi1>, vector<8x1xf32>
    %114 = vector.shape_cast %113 : vector<8x1xf32> to vector<1x8x1xf32>
    %cst_50 = arith.constant dense<0.000000e+00> : vector<1xf32>
    %115 = vector.multi_reduction <add>, %114, %cst_50 [1, 2] : vector<1x8x1xf32> to vector<1xf32>
    %116 = vector.shape_cast %115 : vector<1xf32> to vector<1x1x1xf32>
    %117 = vector.extract %116[0, 0, 0] : f32 from vector<1x1x1xf32>
    %c0_51 = arith.constant 0 : index
    %c0_52 = arith.constant 0 : index
    %118 = vector.load %arg12[%c0_51, %c0_52] : memref<8x32xf32, #tpu.memory_space<vmem>>, vector<8x32xf32>
    %cst_53 = arith.constant 0.000000e+00 : f32
    %119 = vector.broadcast %cst_53 : f32 to vector<8x1xf32>
    %c0_54 = arith.constant 0 : index
    %c0_55 = arith.constant 0 : index
    %120 = vector.load %arg13[%c0_54, %c0_55] : memref<72x32xf32, #tpu.memory_space<vmem>>, vector<8x32xf32>
    %121 = arith.mulf %120, %118 : vector<8x32xf32>
    %cst_56 = arith.constant dense<0.000000e+00> : vector<8xf32>
    %122 = vector.multi_reduction <add>, %121, %cst_56 [1] : vector<8x32xf32> to vector<8xf32>
    %123 = vector.shape_cast %122 : vector<8xf32> to vector<8x1xf32>
    %cst_57 = arith.constant -1.000000e+01 : f32
    %cst_58 = arith.constant 1.000000e+01 : f32
    %124 = vector.broadcast %cst_57 : f32 to vector<8x1xf32>
    %125 = arith.maximumf %124, %123 : vector<8x1xf32>
    %126 = vector.broadcast %cst_58 : f32 to vector<8x1xf32>
    %127 = arith.minimumf %126, %125 : vector<8x1xf32>
    %cst_59 = arith.constant 0.000000e+00 : f32
    %128 = vector.broadcast %cst_59 : f32 to vector<8x1xf32>
    %129 = arith.subf %128, %127 : vector<8x1xf32>
    %130 = math.exp %129 : vector<8x1xf32>
    %131 = math.log1p %130 : vector<8x1xf32>
    %132 = arith.addf %119, %131 : vector<8x1xf32>
    %c8_60 = arith.constant 8 : index
    %c0_61 = arith.constant 0 : index
    %133 = vector.load %arg13[%c8_60, %c0_61] : memref<72x32xf32, #tpu.memory_space<vmem>>, vector<8x32xf32>
    %134 = arith.mulf %133, %118 : vector<8x32xf32>
    %cst_62 = arith.constant dense<0.000000e+00> : vector<8xf32>
    %135 = vector.multi_reduction <add>, %134, %cst_62 [1] : vector<8x32xf32> to vector<8xf32>
    %136 = vector.shape_cast %135 : vector<8xf32> to vector<8x1xf32>
    %cst_63 = arith.constant -1.000000e+01 : f32
    %cst_64 = arith.constant 1.000000e+01 : f32
    %137 = vector.broadcast %cst_63 : f32 to vector<8x1xf32>
    %138 = arith.maximumf %137, %136 : vector<8x1xf32>
    %139 = vector.broadcast %cst_64 : f32 to vector<8x1xf32>
    %140 = arith.minimumf %139, %138 : vector<8x1xf32>
    %141 = math.exp %140 : vector<8x1xf32>
    %142 = math.log1p %141 : vector<8x1xf32>
    %143 = arith.addf %132, %142 : vector<8x1xf32>
    %c16_65 = arith.constant 16 : index
    %c0_66 = arith.constant 0 : index
    %144 = vector.load %arg13[%c16_65, %c0_66] : memref<72x32xf32, #tpu.memory_space<vmem>>, vector<8x32xf32>
    %145 = arith.mulf %144, %118 : vector<8x32xf32>
    %cst_67 = arith.constant dense<0.000000e+00> : vector<8xf32>
    %146 = vector.multi_reduction <add>, %145, %cst_67 [1] : vector<8x32xf32> to vector<8xf32>
    %147 = vector.shape_cast %146 : vector<8xf32> to vector<8x1xf32>
    %cst_68 = arith.constant -1.000000e+01 : f32
    %cst_69 = arith.constant 1.000000e+01 : f32
    %148 = vector.broadcast %cst_68 : f32 to vector<8x1xf32>
    %149 = arith.maximumf %148, %147 : vector<8x1xf32>
    %150 = vector.broadcast %cst_69 : f32 to vector<8x1xf32>
    %151 = arith.minimumf %150, %149 : vector<8x1xf32>
    %152 = math.exp %151 : vector<8x1xf32>
    %153 = math.log1p %152 : vector<8x1xf32>
    %154 = arith.addf %143, %153 : vector<8x1xf32>
    %c24_70 = arith.constant 24 : index
    %c0_71 = arith.constant 0 : index
    %155 = vector.load %arg13[%c24_70, %c0_71] : memref<72x32xf32, #tpu.memory_space<vmem>>, vector<8x32xf32>
    %156 = arith.mulf %155, %118 : vector<8x32xf32>
    %cst_72 = arith.constant dense<0.000000e+00> : vector<8xf32>
    %157 = vector.multi_reduction <add>, %156, %cst_72 [1] : vector<8x32xf32> to vector<8xf32>
    %158 = vector.shape_cast %157 : vector<8xf32> to vector<8x1xf32>
    %cst_73 = arith.constant -1.000000e+01 : f32
    %cst_74 = arith.constant 1.000000e+01 : f32
    %159 = vector.broadcast %cst_73 : f32 to vector<8x1xf32>
    %160 = arith.maximumf %159, %158 : vector<8x1xf32>
    %161 = vector.broadcast %cst_74 : f32 to vector<8x1xf32>
    %162 = arith.minimumf %161, %160 : vector<8x1xf32>
    %163 = math.exp %162 : vector<8x1xf32>
    %164 = math.log1p %163 : vector<8x1xf32>
    %165 = arith.addf %154, %164 : vector<8x1xf32>
    %c32_75 = arith.constant 32 : index
    %c0_76 = arith.constant 0 : index
    %166 = vector.load %arg13[%c32_75, %c0_76] : memref<72x32xf32, #tpu.memory_space<vmem>>, vector<8x32xf32>
    %167 = arith.mulf %166, %118 : vector<8x32xf32>
    %cst_77 = arith.constant dense<0.000000e+00> : vector<8xf32>
    %168 = vector.multi_reduction <add>, %167, %cst_77 [1] : vector<8x32xf32> to vector<8xf32>
    %169 = vector.shape_cast %168 : vector<8xf32> to vector<8x1xf32>
    %cst_78 = arith.constant -1.000000e+01 : f32
    %cst_79 = arith.constant 1.000000e+01 : f32
    %170 = vector.broadcast %cst_78 : f32 to vector<8x1xf32>
    %171 = arith.maximumf %170, %169 : vector<8x1xf32>
    %172 = vector.broadcast %cst_79 : f32 to vector<8x1xf32>
    %173 = arith.minimumf %172, %171 : vector<8x1xf32>
    %174 = math.exp %173 : vector<8x1xf32>
    %175 = math.log1p %174 : vector<8x1xf32>
    %176 = arith.addf %165, %175 : vector<8x1xf32>
    %c40_80 = arith.constant 40 : index
    %c0_81 = arith.constant 0 : index
    %177 = vector.load %arg13[%c40_80, %c0_81] : memref<72x32xf32, #tpu.memory_space<vmem>>, vector<8x32xf32>
    %178 = arith.mulf %177, %118 : vector<8x32xf32>
    %cst_82 = arith.constant dense<0.000000e+00> : vector<8xf32>
    %179 = vector.multi_reduction <add>, %178, %cst_82 [1] : vector<8x32xf32> to vector<8xf32>
    %180 = vector.shape_cast %179 : vector<8xf32> to vector<8x1xf32>
    %cst_83 = arith.constant -1.000000e+01 : f32
    %cst_84 = arith.constant 1.000000e+01 : f32
    %181 = vector.broadcast %cst_83 : f32 to vector<8x1xf32>
    %182 = arith.maximumf %181, %180 : vector<8x1xf32>
    %183 = vector.broadcast %cst_84 : f32 to vector<8x1xf32>
    %184 = arith.minimumf %183, %182 : vector<8x1xf32>
    %185 = math.exp %184 : vector<8x1xf32>
    %186 = math.log1p %185 : vector<8x1xf32>
    %187 = arith.addf %176, %186 : vector<8x1xf32>
    %c48_85 = arith.constant 48 : index
    %c0_86 = arith.constant 0 : index
    %188 = vector.load %arg13[%c48_85, %c0_86] : memref<72x32xf32, #tpu.memory_space<vmem>>, vector<8x32xf32>
    %189 = arith.mulf %188, %118 : vector<8x32xf32>
    %cst_87 = arith.constant dense<0.000000e+00> : vector<8xf32>
    %190 = vector.multi_reduction <add>, %189, %cst_87 [1] : vector<8x32xf32> to vector<8xf32>
    %191 = vector.shape_cast %190 : vector<8xf32> to vector<8x1xf32>
    %cst_88 = arith.constant -1.000000e+01 : f32
    %cst_89 = arith.constant 1.000000e+01 : f32
    %192 = vector.broadcast %cst_88 : f32 to vector<8x1xf32>
    %193 = arith.maximumf %192, %191 : vector<8x1xf32>
    %194 = vector.broadcast %cst_89 : f32 to vector<8x1xf32>
    %195 = arith.minimumf %194, %193 : vector<8x1xf32>
    %196 = math.exp %195 : vector<8x1xf32>
    %197 = math.log1p %196 : vector<8x1xf32>
    %198 = arith.addf %187, %197 : vector<8x1xf32>
    %c56_90 = arith.constant 56 : index
    %c0_91 = arith.constant 0 : index
    %199 = vector.load %arg13[%c56_90, %c0_91] : memref<72x32xf32, #tpu.memory_space<vmem>>, vector<8x32xf32>
    %200 = arith.mulf %199, %118 : vector<8x32xf32>
    %cst_92 = arith.constant dense<0.000000e+00> : vector<8xf32>
    %201 = vector.multi_reduction <add>, %200, %cst_92 [1] : vector<8x32xf32> to vector<8xf32>
    %202 = vector.shape_cast %201 : vector<8xf32> to vector<8x1xf32>
    %cst_93 = arith.constant -1.000000e+01 : f32
    %cst_94 = arith.constant 1.000000e+01 : f32
    %203 = vector.broadcast %cst_93 : f32 to vector<8x1xf32>
    %204 = arith.maximumf %203, %202 : vector<8x1xf32>
    %205 = vector.broadcast %cst_94 : f32 to vector<8x1xf32>
    %206 = arith.minimumf %205, %204 : vector<8x1xf32>
    %207 = math.exp %206 : vector<8x1xf32>
    %208 = math.log1p %207 : vector<8x1xf32>
    %209 = arith.addf %198, %208 : vector<8x1xf32>
    %c64_95 = arith.constant 64 : index
    %c0_96 = arith.constant 0 : index
    %210 = vector.load %arg13[%c64_95, %c0_96] : memref<72x32xf32, #tpu.memory_space<vmem>>, vector<8x32xf32>
    %211 = arith.mulf %210, %118 : vector<8x32xf32>
    %cst_97 = arith.constant dense<0.000000e+00> : vector<8xf32>
    %212 = vector.multi_reduction <add>, %211, %cst_97 [1] : vector<8x32xf32> to vector<8xf32>
    %213 = vector.shape_cast %212 : vector<8xf32> to vector<8x1xf32>
    %cst_98 = arith.constant -1.000000e+01 : f32
    %cst_99 = arith.constant 1.000000e+01 : f32
    %214 = vector.broadcast %cst_98 : f32 to vector<8x1xf32>
    %215 = arith.maximumf %214, %213 : vector<8x1xf32>
    %216 = vector.broadcast %cst_99 : f32 to vector<8x1xf32>
    %217 = arith.minimumf %216, %215 : vector<8x1xf32>
    %218 = math.exp %217 : vector<8x1xf32>
    %219 = math.log1p %218 : vector<8x1xf32>
    %220 = arith.addf %209, %219 : vector<8x1xf32>
    %cst_100 = arith.constant 0.000000e+00 : f32
    %221 = vector.broadcast %cst_100 : f32 to vector<8x1xf32>
    %222 = arith.select %8, %220, %221 : vector<8x1xi1>, vector<8x1xf32>
    %223 = vector.shape_cast %222 : vector<8x1xf32> to vector<1x8x1xf32>
    %cst_101 = arith.constant dense<0.000000e+00> : vector<1xf32>
    %224 = vector.multi_reduction <add>, %223, %cst_101 [1, 2] : vector<1x8x1xf32> to vector<1xf32>
    %225 = vector.shape_cast %224 : vector<1xf32> to vector<1x1x1xf32>
    %226 = vector.extract %225[0, 0, 0] : f32 from vector<1x1x1xf32>
    %227 = tpu.iota {dimensions = array<i32: 2>} : vector<1x1x128xi32>
    %c0_i32_102 = arith.constant 0 : i32
    %228 = vector.broadcast %c0_i32_102 : i32 to vector<1x1x128xi32>
    %229 = arith.cmpi eq, %227, %228 : vector<1x1x128xi32>
    %c1_i32_103 = arith.constant 1 : i32
    %230 = vector.broadcast %c1_i32_103 : i32 to vector<1x1x128xi32>
    %231 = arith.cmpi eq, %227, %230 : vector<1x1x128xi32>
    %cst_104 = arith.constant 0.000000e+00 : f32
    %232 = vector.broadcast %226 : f32 to vector<1x1x128xf32>
    %233 = vector.broadcast %cst_104 : f32 to vector<1x1x128xf32>
    %234 = arith.select %231, %232, %233 : vector<1x1x128xi1>, vector<1x1x128xf32>
    %235 = vector.broadcast %117 : f32 to vector<1x1x128xf32>
    %236 = arith.select %229, %235, %234 : vector<1x1x128xi1>, vector<1x1x128xf32>
    %c0_105 = arith.constant 0 : index
    %c0_106 = arith.constant 0 : index
    %c0_107 = arith.constant 0 : index
    %237 = vector.load %arg9[%c0_105, %c0_106, %c0_107] : memref<1x1x128xf32, #tpu.memory_space<vmem>>, vector<1x1x128xf32>
    tpu.vector_store %arg9[%c0_105, %c0_106, %c0_107], %236 {strides = array<i32>} : memref<1x1x128xf32, #tpu.memory_space<vmem>>, vector<1x1x128xf32>,
    return
  }
  func.func @transform_4(%arg0: i32, %arg1: memref<8xi32, #tpu.memory_space<smem>>, %arg2: memref<72xi32, #tpu.memory_space<smem>>, %arg3: memref<8xi32, #tpu.memory_space<smem>>, %arg4: memref<72xi32, #tpu.memory_space<smem>>) -> (i32, i32, i32) {
    %c0_i32 = arith.constant 0 : i32
    %c0_i32_0 = arith.constant 0 : i32
    %c0_i32_1 = arith.constant 0 : i32
    return %arg0, %c0_i32, %c0_i32_0 : i32, i32, i32
  }
}

</mosaic_0001>

<llo_original>
// kernel: tpu_custom_call.1
$region0: #{tpu_custom_call.1}
  #allocation0 [shape = 'u32[]', space=smem, size = 0x4, offset = 0x4, fixed_abs, tag = 'smem constant byte address 0x4 - core index']
  #allocation1 [shape = 'u32[72,128]{1,0:T(1,128)}', space=vmem, size = 0x9000, scoped, tag = 'internal scratch']
  #allocation2 [shape = 'f32[8,32]{1,0:T(8,128)}', space=vmem, size = 0x1000, scoped, tag = 'scratch operand']
  #allocation3 [shape = 'f32[72,32]{1,0:T(8,128)}', space=vmem, size = 0x9000, scoped, tag = 'scratch operand']
  #allocation4 [shape = 'f32[8,32]{1,0:T(8,128)}', space=vmem, size = 0x1000, scoped, tag = 'scratch operand']
  #allocation5 [shape = 'f32[72,32]{1,0:T(8,128)}', space=vmem, size = 0x9000, scoped, tag = 'scratch operand']
  #allocation6 [shape = 's32[2]{0}', space=sflag, size = 0x8, scoped, tag = 'scratch operand']
  #allocation7 [shape = 's32[1]{0}', space=sflag, size = 0x4, scoped, tag = 'scoped memory for tpu_custom_call.1']
  #allocation8 [shape = 'u8[512]{0}', space=smem, size = 0x200, scoped, tag = 'prefetched SMEM operand 0']
  #allocation9 [shape = 'u8[512]{0}', space=smem, size = 0x200, scoped, tag = 'prefetched SMEM operand 1']
  #allocation10 [shape = 'u8[512]{0}', space=smem, size = 0x200, scoped, tag = 'prefetched SMEM operand 2']
  #allocation11 [shape = 'u8[512]{0}', space=smem, size = 0x200, scoped, tag = 'prefetched SMEM operand 3']
  #allocation14 [shape = 's32[]', space=sflag, size = 0x4, offset = 0, fixed_abs, tag = 'sflag constant byte address 0x0 - dummy sync flag']
  #allocation15 [shape = 's32[]', space=sflag, size = 0x4, offset = 0, fixed_abs, tag = 'sflag constant byte address 0x0 - dummy sync flag']
  #allocation16 [shape = 's32[]', space=sflag, size = 0x4, offset = 0, fixed_abs, tag = 'sflag constant byte address 0x0 - dummy sync flag']
  #allocation17 [shape = 's32[]', space=sflag, size = 0x4, offset = 0, fixed_abs, tag = 'sflag constant byte address 0x0 - dummy sync flag']
  #allocation18 [shape = 's32[]', space=sflag, size = 0x4, offset = 0, fixed_abs, tag = 'sflag constant byte address 0x0 - dummy sync flag']
  #allocation19 [shape = 's32[]', space=sflag, size = 0x4, offset = 0, fixed_abs, tag = 'sflag constant byte address 0x0 - dummy sync flag']
  #allocation20 [shape = 's32[]', space=sflag, size = 0x4, offset = 0, fixed_abs, tag = 'sflag constant byte address 0x0 - dummy sync flag']
  #allocation21 [shape = 's32[]', space=sflag, size = 0x4, offset = 0, fixed_abs, tag = 'sflag constant byte address 0x0 - dummy sync flag']
  #allocation22 [shape = 's32[]', space=sflag, size = 0x4, offset = 0, fixed_abs, tag = 'sflag constant byte address 0x0 - dummy sync flag']
  #allocation23 [shape = 's32[]', space=sflag, size = 0x4, offset = 0, fixed_abs, tag = 'sflag constant byte address 0x0 - dummy sync flag']
  #allocation24 [shape = 's32[]', space=sflag, size = 0x4, offset = 0, fixed_abs, tag = 'sflag constant byte address 0x0 - dummy sync flag']
  #allocation25 [shape = 's32[]', space=sflag, size = 0x4, offset = 0, fixed_abs, tag = 'sflag constant byte address 0x0 - dummy sync flag']
  #allocation26 [shape = 's32[]', space=sflag, size = 0x4, offset = 0, fixed_abs, tag = 'sflag constant byte address 0x0 - dummy sync flag']
  #allocation27 [shape = 's32[]', space=sflag, size = 0x4, offset = 0, fixed_abs, tag = 'sflag constant byte address 0x0 - dummy sync flag']
  #allocation28 [shape = 's32[]', space=sflag, size = 0x4, offset = 0, fixed_abs, tag = 'sflag constant byte address 0x0 - dummy sync flag']
  #allocation29 [shape = 's32[]', space=sflag, size = 0x4, offset = 0, fixed_abs, tag = 'sflag constant byte address 0x0 - dummy sync flag']
  #allocation30 [shape = 's32[]', space=sflag, size = 0x4, offset = 0, fixed_abs, tag = 'sflag constant byte address 0x0 - dummy sync flag']
  #allocation31 [shape = 's32[]', space=sflag, size = 0x4, offset = 0, fixed_abs, tag = 'sflag constant byte address 0x0 - dummy sync flag']
  #allocation32 [shape = 's32[]', space=sflag, size = 0x4, offset = 0, fixed_abs, tag = 'sflag constant byte address 0x0 - dummy sync flag']
  #allocation33 [shape = 's32[]', space=sflag, size = 0x4, offset = 0, fixed_abs, tag = 'sflag constant byte address 0x0 - dummy sync flag']
  %s0 = inlined_call_operand.vmem [shape: s32[8], index: 0, kind: input, shape index: {}]
  %s1 = inlined_call_operand.vmem [shape: s32[72], index: 1, kind: input, shape index: {}]
  %s2 = inlined_call_operand.vmem [shape: s32[8], index: 2, kind: input, shape index: {}]
  %s3 = inlined_call_operand.vmem [shape: s32[72], index: 3, kind: input, shape index: {}]
  %s4 = inlined_call_operand.vmem [shape: f32[64,32], index: 4, kind: input, shape index: {}]
  %s5 = inlined_call_operand.vmem [shape: f32[64,32], index: 5, kind: input, shape index: {}]
  %s6 = inlined_call_operand.vmem [shape: f32[32,32], index: 6, kind: input, shape index: {}]
  %s7 = inlined_call_operand.vmem [shape: f32[32,32], index: 7, kind: input, shape index: {}]
  %s8 = inlined_call_operand.hbm [shape: f32[1,1,128], index: 8, kind: output, shape index: {}]
  %s9 = sld [smem:[#allocation0]]
  $region624: #{tpu_custom_call.1} parent=0
    _
  %s11 = ssub.s32 1, %s9
  %s12 = scalar_select 0, %s11, %s9
  %s14 = sshll.u32 %s0, 4
  %s15 = int_to_ptr.vmem [resolvable:$true] %s14
  %17 = dma.vmem_to_smem %s15, 16, [#allocation8], [#allocation7]
  %s19 = sshll.u32 %s1, 4
  %s20 = int_to_ptr.vmem [resolvable:$true] %s19
  %22 = dma.vmem_to_smem %s20, 16, [#allocation9], [#allocation7]
  %s24 = sshll.u32 %s2, 4
  %s25 = int_to_ptr.vmem [resolvable:$true] %s24
  %27 = dma.vmem_to_smem %s25, 16, [#allocation10], [#allocation7]
  %s29 = sshll.u32 %s3, 4
  %s30 = int_to_ptr.vmem [resolvable:$true] %s29
  %32 = dma.vmem_to_smem %s30, 16, [#allocation11], [#allocation7]
  %34 = dma.done [#allocation7], 64
  %35 = sfence
  $region1: #{tpu_custom_call.1} parent=0
    #allocation12 [shape = 'u8[512]{0}', space=vmem, size = 0x400, scoped, tag = 'output window, operand 0, single buffered']
    #allocation13 [shape = 's32[1]{0}', space=sflag, size = 0x4, scoped, tag = 'scoped memory for tpu_custom_call.1']
    %36 = vsyncpa [#allocation13], 0
    %s37 = smul.u32 0, 8
    loop: start=0, step=1, limit=8
    $region2: #{tpu_custom_call.1} parent=1 // loop_pre_header
      _
    $region3: #{tpu_custom_call.1} parent=1 // loop_header
      %s39 = sphi 0, %s43
      %p40 = scmp.ge.s32.totalorder %s39, 8
    $region4: #{tpu_custom_call.1} parent=1 // loop_header_branch
      %42 = sbr.rel (%p40) target = $region8
    $region5: #{tpu_custom_call.1} parent=1 // loop_body
      %s44 = sadd.s32 %s37, %s39
      %s45 = sld [smem:[#allocation8 + %s44]]
      %s46 = scalar_lea.vmem %s4, %s45
      %s47 = scalar_lea.vmem [#allocation2], %s39
      // Predicated region
      $region9: #{tpu_custom_call.1} parent=5 // pred_check
        _
      $region10: #{tpu_custom_call.1} parent=5 // pred_check_branch
        %49 = sbr.rel target = $region12
      $region11: #{tpu_custom_call.1} parent=5 // pred_region
        // Predicated region
        $region24: #{tpu_custom_call.1} parent=11 // pred_check
          _
        $region25: #{tpu_custom_call.1} parent=11 // pred_check_branch
          %65 = sbr.rel (0) target = $region27
        $region26: #{tpu_custom_call.1} parent=11 // pred_region
          %s67 = ssub.s32 2, 1
          loop: start=0, step=1, limit=1
          $region28: #{tpu_custom_call.1} parent=26 // loop_pre_header
            _
          $region29: #{tpu_custom_call.1} parent=26 // loop_header
            %s69 = sphi 0, %s73
            %p70 = scmp.ge.s32.totalorder %s69, 1
            %s74 = sphi %s46, %s46
            %s75 = sphi %s47, %s47
          $region30: #{tpu_custom_call.1} parent=26 // loop_header_branch
            %72 = sbr.rel (%p70) target = $region34
          $region31: #{tpu_custom_call.1} parent=26 // loop_body
            %v76 = vld [vmem:[%s74] sm:%s67]
            %77 = vst [vmem:[%s75] sm:%s67] %v76
          $region32: #{tpu_custom_call.1} parent=26 // loop_footer
            %s73 = sadd.s32 1, %s69
          $region33: #{tpu_custom_call.1} parent=26 // loop_footer_branch
            %68 = sbr.rel target = $region29
          $region34: #{tpu_custom_call.1} parent=26 // loop_exit
            _
        $region27: #{tpu_custom_call.1} parent=11 // pred_fallthru
          _
      $region12: #{tpu_custom_call.1} parent=5 // pred_fallthru
        _
      // Predicated region
      $region13: #{tpu_custom_call.1} parent=5 // pred_check
        _
      $region14: #{tpu_custom_call.1} parent=5 // pred_check_branch
        %51 = sbr.rel (0) target = $region16
      $region15: #{tpu_custom_call.1} parent=5 // pred_region
        %s53 = ssub.s32 2, 1
        loop: start=0, step=1, limit=1
        $region17: #{tpu_custom_call.1} parent=15 // loop_pre_header
          _
        $region18: #{tpu_custom_call.1} parent=15 // loop_header
          %s55 = sphi 0, %s59
          %p56 = scmp.ge.s32.totalorder %s55, 1
          %s60 = sphi %s46, %s46
          %s61 = sphi %s47, %s47
        $region19: #{tpu_custom_call.1} parent=15 // loop_header_branch
          %58 = sbr.rel (%p56) target = $region23
        $region20: #{tpu_custom_call.1} parent=15 // loop_body
          %v62 = vld [vmem:[%s60] sm:%s53]
          %63 = vst [vmem:[%s61] sm:%s53] %v62
        $region21: #{tpu_custom_call.1} parent=15 // loop_footer
          %s59 = sadd.s32 1, %s55
        $region22: #{tpu_custom_call.1} parent=15 // loop_footer_branch
          %54 = sbr.rel target = $region18
        $region23: #{tpu_custom_call.1} parent=15 // loop_exit
          _
      $region16: #{tpu_custom_call.1} parent=5 // pred_fallthru
        _
      // Predicated region
      $region35: #{tpu_custom_call.1} parent=5 // pred_check
        _
      $region36: #{tpu_custom_call.1} parent=5 // pred_check_branch
        %80 = sbr.rel (0) target = $region38
      $region37: #{tpu_custom_call.1} parent=5 // pred_region
        %81 = vsyncadd [#allocation6], 16
      $region38: #{tpu_custom_call.1} parent=5 // pred_fallthru
        _
      %s82 = smul.u32 %s44, 9
      %s83 = sld [smem:[#allocation9 + %s82]]
      %s84 = scalar_lea.vmem %s5, %s83
      %s85 = scalar_lea.vmem [#allocation3], %s39
      // Predicated region
      $region39: #{tpu_custom_call.1} parent=5 // pred_check
        _
      $region40: #{tpu_custom_call.1} parent=5 // pred_check_branch
        %87 = sbr.rel target = $region42
      $region41: #{tpu_custom_call.1} parent=5 // pred_region
        // Predicated region
        $region54: #{tpu_custom_call.1} parent=41 // pred_check
          _
        $region55: #{tpu_custom_call.1} parent=41 // pred_check_branch
          %103 = sbr.rel (0) target = $region57
        $region56: #{tpu_custom_call.1} parent=41 // pred_region
          %s105 = ssub.s32 2, 1
          loop: start=0, step=1, limit=1
          $region58: #{tpu_custom_call.1} parent=56 // loop_pre_header
            _
          $region59: #{tpu_custom_call.1} parent=56 // loop_header
            %s107 = sphi 0, %s111
            %p108 = scmp.ge.s32.totalorder %s107, 1
            %s112 = sphi %s84, %s84
            %s113 = sphi %s85, %s85
          $region60: #{tpu_custom_call.1} parent=56 // loop_header_branch
            %110 = sbr.rel (%p108) target = $region64
          $region61: #{tpu_custom_call.1} parent=56 // loop_body
            %v114 = vld [vmem:[%s112] sm:%s105]
            %115 = vst [vmem:[%s113] sm:%s105] %v114
          $region62: #{tpu_custom_call.1} parent=56 // loop_footer
            %s111 = sadd.s32 1, %s107
          $region63: #{tpu_custom_call.1} parent=56 // loop_footer_branch
            %106 = sbr.rel target = $region59
          $region64: #{tpu_custom_call.1} parent=56 // loop_exit
            _
        $region57: #{tpu_custom_call.1} parent=41 // pred_fallthru
          _
      $region42: #{tpu_custom_call.1} parent=5 // pred_fallthru
        _
      // Predicated region
      $region43: #{tpu_custom_call.1} parent=5 // pred_check
        _
      $region44: #{tpu_custom_call.1} parent=5 // pred_check_branch
        %89 = sbr.rel (0) target = $region46
      $region45: #{tpu_custom_call.1} parent=5 // pred_region
        %s91 = ssub.s32 2, 1
        loop: start=0, step=1, limit=1
        $region47: #{tpu_custom_call.1} parent=45 // loop_pre_header
          _
        $region48: #{tpu_custom_call.1} parent=45 // loop_header
          %s93 = sphi 0, %s97
          %p94 = scmp.ge.s32.totalorder %s93, 1
          %s98 = sphi %s84, %s84
          %s99 = sphi %s85, %s85
        $region49: #{tpu_custom_call.1} parent=45 // loop_header_branch
          %96 = sbr.rel (%p94) target = $region53
        $region50: #{tpu_custom_call.1} parent=45 // loop_body
          %v100 = vld [vmem:[%s98] sm:%s91]
          %101 = vst [vmem:[%s99] sm:%s91] %v100
        $region51: #{tpu_custom_call.1} parent=45 // loop_footer
          %s97 = sadd.s32 1, %s93
        $region52: #{tpu_custom_call.1} parent=45 // loop_footer_branch
          %92 = sbr.rel target = $region48
        $region53: #{tpu_custom_call.1} parent=45 // loop_exit
          _
      $region46: #{tpu_custom_call.1} parent=5 // pred_fallthru
        _
      // Predicated region
      $region65: #{tpu_custom_call.1} parent=5 // pred_check
        _
      $region66: #{tpu_custom_call.1} parent=5 // pred_check_branch
        %118 = sbr.rel (0) target = $region68
      $region67: #{tpu_custom_call.1} parent=5 // pred_region
        %119 = vsyncadd [#allocation6], 16
      $region68: #{tpu_custom_call.1} parent=5 // pred_fallthru
        _
      %s120 = sadd.s32 %s82, 1
      %s121 = sld [smem:[#allocation9 + %s120]]
      %s122 = sadd.s32 %s39, 8
      %s123 = scalar_lea.vmem %s5, %s121
      %s124 = scalar_lea.vmem [#allocation3], %s122
      // Predicated region
      $region69: #{tpu_custom_call.1} parent=5 // pred_check
        _
      $region70: #{tpu_custom_call.1} parent=5 // pred_check_branch
        %126 = sbr.rel target = $region72
      $region71: #{tpu_custom_call.1} parent=5 // pred_region
        // Predicated region
        $region84: #{tpu_custom_call.1} parent=71 // pred_check
          _
        $region85: #{tpu_custom_call.1} parent=71 // pred_check_branch
          %142 = sbr.rel (0) target = $region87
        $region86: #{tpu_custom_call.1} parent=71 // pred_region
          %s144 = ssub.s32 2, 1
          loop: start=0, step=1, limit=1
          $region88: #{tpu_custom_call.1} parent=86 // loop_pre_header
            _
          $region89: #{tpu_custom_call.1} parent=86 // loop_header
            %s146 = sphi 0, %s150
            %p147 = scmp.ge.s32.totalorder %s146, 1
            %s151 = sphi %s123, %s123
            %s152 = sphi %s124, %s124
          $region90: #{tpu_custom_call.1} parent=86 // loop_header_branch
            %149 = sbr.rel (%p147) target = $region94
          $region91: #{tpu_custom_call.1} parent=86 // loop_body
            %v153 = vld [vmem:[%s151] sm:%s144]
            %154 = vst [vmem:[%s152] sm:%s144] %v153
          $region92: #{tpu_custom_call.1} parent=86 // loop_footer
            %s150 = sadd.s32 1, %s146
          $region93: #{tpu_custom_call.1} parent=86 // loop_footer_branch
            %145 = sbr.rel target = $region89
          $region94: #{tpu_custom_call.1} parent=86 // loop_exit
            _
        $region87: #{tpu_custom_call.1} parent=71 // pred_fallthru
          _
      $region72: #{tpu_custom_call.1} parent=5 // pred_fallthru
        _
      // Predicated region
      $region73: #{tpu_custom_call.1} parent=5 // pred_check
        _
      $region74: #{tpu_custom_call.1} parent=5 // pred_check_branch
        %128 = sbr.rel (0) target = $region76
      $region75: #{tpu_custom_call.1} parent=5 // pred_region
        %s130 = ssub.s32 2, 1
        loop: start=0, step=1, limit=1
        $region77: #{tpu_custom_call.1} parent=75 // loop_pre_header
          _
        $region78: #{tpu_custom_call.1} parent=75 // loop_header
          %s132 = sphi 0, %s136
          %p133 = scmp.ge.s32.totalorder %s132, 1
          %s137 = sphi %s123, %s123
          %s138 = sphi %s124, %s124
        $region79: #{tpu_custom_call.1} parent=75 // loop_header_branch
          %135 = sbr.rel (%p133) target = $region83
        $region80: #{tpu_custom_call.1} parent=75 // loop_body
          %v139 = vld [vmem:[%s137] sm:%s130]
          %140 = vst [vmem:[%s138] sm:%s130] %v139
        $region81: #{tpu_custom_call.1} parent=75 // loop_footer
          %s136 = sadd.s32 1, %s132
        $region82: #{tpu_custom_call.1} parent=75 // loop_footer_branch
          %131 = sbr.rel target = $region78
        $region83: #{tpu_custom_call.1} parent=75 // loop_exit
          _
      $region76: #{tpu_custom_call.1} parent=5 // pred_fallthru
        _
      // Predicated region
      $region95: #{tpu_custom_call.1} parent=5 // pred_check
        _
      $region96: #{tpu_custom_call.1} parent=5 // pred_check_branch
        %157 = sbr.rel (0) target = $region98
      $region97: #{tpu_custom_call.1} parent=5 // pred_region
        %158 = vsyncadd [#allocation6], 16
      $region98: #{tpu_custom_call.1} parent=5 // pred_fallthru
        _
      %s159 = sadd.s32 %s82, 2
      %s160 = sld [smem:[#allocation9 + %s159]]
      %s161 = sadd.s32 %s39, 16
      %s162 = scalar_lea.vmem %s5, %s160
      %s163 = scalar_lea.vmem [#allocation3], %s161
      // Predicated region
      $region99: #{tpu_custom_call.1} parent=5 // pred_check
        _
      $region100: #{tpu_custom_call.1} parent=5 // pred_check_branch
        %165 = sbr.rel target = $region102
      $region101: #{tpu_custom_call.1} parent=5 // pred_region
        // Predicated region
        $region114: #{tpu_custom_call.1} parent=101 // pred_check
          _
        $region115: #{tpu_custom_call.1} parent=101 // pred_check_branch
          %181 = sbr.rel (0) target = $region117
        $region116: #{tpu_custom_call.1} parent=101 // pred_region
          %s183 = ssub.s32 2, 1
          loop: start=0, step=1, limit=1
          $region118: #{tpu_custom_call.1} parent=116 // loop_pre_header
            _
          $region119: #{tpu_custom_call.1} parent=116 // loop_header
            %s185 = sphi 0, %s189
            %p186 = scmp.ge.s32.totalorder %s185, 1
            %s190 = sphi %s162, %s162
            %s191 = sphi %s163, %s163
          $region120: #{tpu_custom_call.1} parent=116 // loop_header_branch
            %188 = sbr.rel (%p186) target = $region124
          $region121: #{tpu_custom_call.1} parent=116 // loop_body
            %v192 = vld [vmem:[%s190] sm:%s183]
            %193 = vst [vmem:[%s191] sm:%s183] %v192
          $region122: #{tpu_custom_call.1} parent=116 // loop_footer
            %s189 = sadd.s32 1, %s185
          $region123: #{tpu_custom_call.1} parent=116 // loop_footer_branch
            %184 = sbr.rel target = $region119
          $region124: #{tpu_custom_call.1} parent=116 // loop_exit
            _
        $region117: #{tpu_custom_call.1} parent=101 // pred_fallthru
          _
      $region102: #{tpu_custom_call.1} parent=5 // pred_fallthru
        _
      // Predicated region
      $region103: #{tpu_custom_call.1} parent=5 // pred_check
        _
      $region104: #{tpu_custom_call.1} parent=5 // pred_check_branch
        %167 = sbr.rel (0) target = $region106
      $region105: #{tpu_custom_call.1} parent=5 // pred_region
        %s169 = ssub.s32 2, 1
        loop: start=0, step=1, limit=1
        $region107: #{tpu_custom_call.1} parent=105 // loop_pre_header
          _
        $region108: #{tpu_custom_call.1} parent=105 // loop_header
          %s171 = sphi 0, %s175
          %p172 = scmp.ge.s32.totalorder %s171, 1
          %s176 = sphi %s162, %s162
          %s177 = sphi %s163, %s163
        $region109: #{tpu_custom_call.1} parent=105 // loop_header_branch
          %174 = sbr.rel (%p172) target = $region113
        $region110: #{tpu_custom_call.1} parent=105 // loop_body
          %v178 = vld [vmem:[%s176] sm:%s169]
          %179 = vst [vmem:[%s177] sm:%s169] %v178
        $region111: #{tpu_custom_call.1} parent=105 // loop_footer
          %s175 = sadd.s32 1, %s171
        $region112: #{tpu_custom_call.1} parent=105 // loop_footer_branch
          %170 = sbr.rel target = $region108
        $region113: #{tpu_custom_call.1} parent=105 // loop_exit
          _
      $region106: #{tpu_custom_call.1} parent=5 // pred_fallthru
        _
      // Predicated region
      $region125: #{tpu_custom_call.1} parent=5 // pred_check
        _
      $region126: #{tpu_custom_call.1} parent=5 // pred_check_branch
        %196 = sbr.rel (0) target = $region128
      $region127: #{tpu_custom_call.1} parent=5 // pred_region
        %197 = vsyncadd [#allocation6], 16
      $region128: #{tpu_custom_call.1} parent=5 // pred_fallthru
        _
      %s198 = sadd.s32 %s82, 3
      %s199 = sld [smem:[#allocation9 + %s198]]
      %s200 = sadd.s32 %s39, 24
      %s201 = scalar_lea.vmem %s5, %s199
      %s202 = scalar_lea.vmem [#allocation3], %s200
      // Predicated region
      $region129: #{tpu_custom_call.1} parent=5 // pred_check
        _
      $region130: #{tpu_custom_call.1} parent=5 // pred_check_branch
        %204 = sbr.rel target = $region132
      $region131: #{tpu_custom_call.1} parent=5 // pred_region
        // Predicated region
        $region144: #{tpu_custom_call.1} parent=131 // pred_check
          _
        $region145: #{tpu_custom_call.1} parent=131 // pred_check_branch
          %220 = sbr.rel (0) target = $region147
        $region146: #{tpu_custom_call.1} parent=131 // pred_region
          %s222 = ssub.s32 2, 1
          loop: start=0, step=1, limit=1
          $region148: #{tpu_custom_call.1} parent=146 // loop_pre_header
            _
          $region149: #{tpu_custom_call.1} parent=146 // loop_header
            %s224 = sphi 0, %s228
            %p225 = scmp.ge.s32.totalorder %s224, 1
            %s229 = sphi %s201, %s201
            %s230 = sphi %s202, %s202
          $region150: #{tpu_custom_call.1} parent=146 // loop_header_branch
            %227 = sbr.rel (%p225) target = $region154
          $region151: #{tpu_custom_call.1} parent=146 // loop_body
            %v231 = vld [vmem:[%s229] sm:%s222]
            %232 = vst [vmem:[%s230] sm:%s222] %v231
          $region152: #{tpu_custom_call.1} parent=146 // loop_footer
            %s228 = sadd.s32 1, %s224
          $region153: #{tpu_custom_call.1} parent=146 // loop_footer_branch
            %223 = sbr.rel target = $region149
          $region154: #{tpu_custom_call.1} parent=146 // loop_exit
            _
        $region147: #{tpu_custom_call.1} parent=131 // pred_fallthru
          _
      $region132: #{tpu_custom_call.1} parent=5 // pred_fallthru
        _
      // Predicated region
      $region133: #{tpu_custom_call.1} parent=5 // pred_check
        _
      $region134: #{tpu_custom_call.1} parent=5 // pred_check_branch
        %206 = sbr.rel (0) target = $region136
      $region135: #{tpu_custom_call.1} parent=5 // pred_region
        %s208 = ssub.s32 2, 1
        loop: start=0, step=1, limit=1
        $region137: #{tpu_custom_call.1} parent=135 // loop_pre_header
          _
        $region138: #{tpu_custom_call.1} parent=135 // loop_header
          %s210 = sphi 0, %s214
          %p211 = scmp.ge.s32.totalorder %s210, 1
          %s215 = sphi %s201, %s201
          %s216 = sphi %s202, %s202
        $region139: #{tpu_custom_call.1} parent=135 // loop_header_branch
          %213 = sbr.rel (%p211) target = $region143
        $region140: #{tpu_custom_call.1} parent=135 // loop_body
          %v217 = vld [vmem:[%s215] sm:%s208]
          %218 = vst [vmem:[%s216] sm:%s208] %v217
        $region141: #{tpu_custom_call.1} parent=135 // loop_footer
          %s214 = sadd.s32 1, %s210
        $region142: #{tpu_custom_call.1} parent=135 // loop_footer_branch
          %209 = sbr.rel target = $region138
        $region143: #{tpu_custom_call.1} parent=135 // loop_exit
          _
      $region136: #{tpu_custom_call.1} parent=5 // pred_fallthru
        _
      // Predicated region
      $region155: #{tpu_custom_call.1} parent=5 // pred_check
        _
      $region156: #{tpu_custom_call.1} parent=5 // pred_check_branch
        %235 = sbr.rel (0) target = $region158
      $region157: #{tpu_custom_call.1} parent=5 // pred_region
        %236 = vsyncadd [#allocation6], 16
      $region158: #{tpu_custom_call.1} parent=5 // pred_fallthru
        _
      %s237 = sadd.s32 %s82, 4
      %s238 = sld [smem:[#allocation9 + %s237]]
      %s239 = sadd.s32 %s39, 32
      %s240 = scalar_lea.vmem %s5, %s238
      %s241 = scalar_lea.vmem [#allocation3], %s239
      // Predicated region
      $region159: #{tpu_custom_call.1} parent=5 // pred_check
        _
      $region160: #{tpu_custom_call.1} parent=5 // pred_check_branch
        %243 = sbr.rel target = $region162
      $region161: #{tpu_custom_call.1} parent=5 // pred_region
        // Predicated region
        $region174: #{tpu_custom_call.1} parent=161 // pred_check
          _
        $region175: #{tpu_custom_call.1} parent=161 // pred_check_branch
          %259 = sbr.rel (0) target = $region177
        $region176: #{tpu_custom_call.1} parent=161 // pred_region
          %s261 = ssub.s32 2, 1
          loop: start=0, step=1, limit=1
          $region178: #{tpu_custom_call.1} parent=176 // loop_pre_header
            _
          $region179: #{tpu_custom_call.1} parent=176 // loop_header
            %s263 = sphi 0, %s267
            %p264 = scmp.ge.s32.totalorder %s263, 1
            %s268 = sphi %s240, %s240
            %s269 = sphi %s241, %s241
          $region180: #{tpu_custom_call.1} parent=176 // loop_header_branch
            %266 = sbr.rel (%p264) target = $region184
          $region181: #{tpu_custom_call.1} parent=176 // loop_body
            %v270 = vld [vmem:[%s268] sm:%s261]
            %271 = vst [vmem:[%s269] sm:%s261] %v270
          $region182: #{tpu_custom_call.1} parent=176 // loop_footer
            %s267 = sadd.s32 1, %s263
          $region183: #{tpu_custom_call.1} parent=176 // loop_footer_branch
            %262 = sbr.rel target = $region179
          $region184: #{tpu_custom_call.1} parent=176 // loop_exit
            _
        $region177: #{tpu_custom_call.1} parent=161 // pred_fallthru
          _
      $region162: #{tpu_custom_call.1} parent=5 // pred_fallthru
        _
      // Predicated region
      $region163: #{tpu_custom_call.1} parent=5 // pred_check
        _
      $region164: #{tpu_custom_call.1} parent=5 // pred_check_branch
        %245 = sbr.rel (0) target = $region166
      $region165: #{tpu_custom_call.1} parent=5 // pred_region
        %s247 = ssub.s32 2, 1
        loop: start=0, step=1, limit=1
        $region167: #{tpu_custom_call.1} parent=165 // loop_pre_header
          _
        $region168: #{tpu_custom_call.1} parent=165 // loop_header
          %s249 = sphi 0, %s253
          %p250 = scmp.ge.s32.totalorder %s249, 1
          %s254 = sphi %s240, %s240
          %s255 = sphi %s241, %s241
        $region169: #{tpu_custom_call.1} parent=165 // loop_header_branch
          %252 = sbr.rel (%p250) target = $region173
        $region170: #{tpu_custom_call.1} parent=165 // loop_body
          %v256 = vld [vmem:[%s254] sm:%s247]
          %257 = vst [vmem:[%s255] sm:%s247] %v256
        $region171: #{tpu_custom_call.1} parent=165 // loop_footer
          %s253 = sadd.s32 1, %s249
        $region172: #{tpu_custom_call.1} parent=165 // loop_footer_branch
          %248 = sbr.rel target = $region168
        $region173: #{tpu_custom_call.1} parent=165 // loop_exit
          _
      $region166: #{tpu_custom_call.1} parent=5 // pred_fallthru
        _
      // Predicated region
      $region185: #{tpu_custom_call.1} parent=5 // pred_check
        _
      $region186: #{tpu_custom_call.1} parent=5 // pred_check_branch
        %274 = sbr.rel (0) target = $region188
      $region187: #{tpu_custom_call.1} parent=5 // pred_region
        %275 = vsyncadd [#allocation6], 16
      $region188: #{tpu_custom_call.1} parent=5 // pred_fallthru
        _
      %s276 = sadd.s32 %s82, 5
      %s277 = sld [smem:[#allocation9 + %s276]]
      %s278 = sadd.s32 %s39, 40
      %s279 = scalar_lea.vmem %s5, %s277
      %s280 = scalar_lea.vmem [#allocation3], %s278
      // Predicated region
      $region189: #{tpu_custom_call.1} parent=5 // pred_check
        _
      $region190: #{tpu_custom_call.1} parent=5 // pred_check_branch
        %282 = sbr.rel target = $region192
      $region191: #{tpu_custom_call.1} parent=5 // pred_region
        // Predicated region
        $region204: #{tpu_custom_call.1} parent=191 // pred_check
          _
        $region205: #{tpu_custom_call.1} parent=191 // pred_check_branch
          %298 = sbr.rel (0) target = $region207
        $region206: #{tpu_custom_call.1} parent=191 // pred_region
          %s300 = ssub.s32 2, 1
          loop: start=0, step=1, limit=1
          $region208: #{tpu_custom_call.1} parent=206 // loop_pre_header
            _
          $region209: #{tpu_custom_call.1} parent=206 // loop_header
            %s302 = sphi 0, %s306
            %p303 = scmp.ge.s32.totalorder %s302, 1
            %s307 = sphi %s279, %s279
            %s308 = sphi %s280, %s280
          $region210: #{tpu_custom_call.1} parent=206 // loop_header_branch
            %305 = sbr.rel (%p303) target = $region214
          $region211: #{tpu_custom_call.1} parent=206 // loop_body
            %v309 = vld [vmem:[%s307] sm:%s300]
            %310 = vst [vmem:[%s308] sm:%s300] %v309
          $region212: #{tpu_custom_call.1} parent=206 // loop_footer
            %s306 = sadd.s32 1, %s302
          $region213: #{tpu_custom_call.1} parent=206 // loop_footer_branch
            %301 = sbr.rel target = $region209
          $region214: #{tpu_custom_call.1} parent=206 // loop_exit
            _
        $region207: #{tpu_custom_call.1} parent=191 // pred_fallthru
          _
      $region192: #{tpu_custom_call.1} parent=5 // pred_fallthru
        _
      // Predicated region
      $region193: #{tpu_custom_call.1} parent=5 // pred_check
        _
      $region194: #{tpu_custom_call.1} parent=5 // pred_check_branch
        %284 = sbr.rel (0) target = $region196
      $region195: #{tpu_custom_call.1} parent=5 // pred_region
        %s286 = ssub.s32 2, 1
        loop: start=0, step=1, limit=1
        $region197: #{tpu_custom_call.1} parent=195 // loop_pre_header
          _
        $region198: #{tpu_custom_call.1} parent=195 // loop_header
          %s288 = sphi 0, %s292
          %p289 = scmp.ge.s32.totalorder %s288, 1
          %s293 = sphi %s279, %s279
          %s294 = sphi %s280, %s280
        $region199: #{tpu_custom_call.1} parent=195 // loop_header_branch
          %291 = sbr.rel (%p289) target = $region203
        $region200: #{tpu_custom_call.1} parent=195 // loop_body
          %v295 = vld [vmem:[%s293] sm:%s286]
          %296 = vst [vmem:[%s294] sm:%s286] %v295
        $region201: #{tpu_custom_call.1} parent=195 // loop_footer
          %s292 = sadd.s32 1, %s288
        $region202: #{tpu_custom_call.1} parent=195 // loop_footer_branch
          %287 = sbr.rel target = $region198
        $region203: #{tpu_custom_call.1} parent=195 // loop_exit
          _
      $region196: #{tpu_custom_call.1} parent=5 // pred_fallthru
        _
      // Predicated region
      $region215: #{tpu_custom_call.1} parent=5 // pred_check
        _
      $region216: #{tpu_custom_call.1} parent=5 // pred_check_branch
        %313 = sbr.rel (0) target = $region218
      $region217: #{tpu_custom_call.1} parent=5 // pred_region
        %314 = vsyncadd [#allocation6], 16
      $region218: #{tpu_custom_call.1} parent=5 // pred_fallthru
        _
      %s315 = sadd.s32 %s82, 6
      %s316 = sld [smem:[#allocation9 + %s315]]
      %s317 = sadd.s32 %s39, 48
      %s318 = scalar_lea.vmem %s5, %s316
      %s319 = scalar_lea.vmem [#allocation3], %s317
      // Predicated region
      $region219: #{tpu_custom_call.1} parent=5 // pred_check
        _
      $region220: #{tpu_custom_call.1} parent=5 // pred_check_branch
        %321 = sbr.rel target = $region222
      $region221: #{tpu_custom_call.1} parent=5 // pred_region
        // Predicated region
        $region234: #{tpu_custom_call.1} parent=221 // pred_check
          _
        $region235: #{tpu_custom_call.1} parent=221 // pred_check_branch
          %337 = sbr.rel (0) target = $region237
        $region236: #{tpu_custom_call.1} parent=221 // pred_region
          %s339 = ssub.s32 2, 1
          loop: start=0, step=1, limit=1
          $region238: #{tpu_custom_call.1} parent=236 // loop_pre_header
            _
          $region239: #{tpu_custom_call.1} parent=236 // loop_header
            %s341 = sphi 0, %s345
            %p342 = scmp.ge.s32.totalorder %s341, 1
            %s346 = sphi %s318, %s318
            %s347 = sphi %s319, %s319
          $region240: #{tpu_custom_call.1} parent=236 // loop_header_branch
            %344 = sbr.rel (%p342) target = $region244
          $region241: #{tpu_custom_call.1} parent=236 // loop_body
            %v348 = vld [vmem:[%s346] sm:%s339]
            %349 = vst [vmem:[%s347] sm:%s339] %v348
          $region242: #{tpu_custom_call.1} parent=236 // loop_footer
            %s345 = sadd.s32 1, %s341
          $region243: #{tpu_custom_call.1} parent=236 // loop_footer_branch
            %340 = sbr.rel target = $region239
          $region244: #{tpu_custom_call.1} parent=236 // loop_exit
            _
        $region237: #{tpu_custom_call.1} parent=221 // pred_fallthru
          _
      $region222: #{tpu_custom_call.1} parent=5 // pred_fallthru
        _
      // Predicated region
      $region223: #{tpu_custom_call.1} parent=5 // pred_check
        _
      $region224: #{tpu_custom_call.1} parent=5 // pred_check_branch
        %323 = sbr.rel (0) target = $region226
      $region225: #{tpu_custom_call.1} parent=5 // pred_region
        %s325 = ssub.s32 2, 1
        loop: start=0, step=1, limit=1
        $region227: #{tpu_custom_call.1} parent=225 // loop_pre_header
          _
        $region228: #{tpu_custom_call.1} parent=225 // loop_header
          %s327 = sphi 0, %s331
          %p328 = scmp.ge.s32.totalorder %s327, 1
          %s332 = sphi %s318, %s318
          %s333 = sphi %s319, %s319
        $region229: #{tpu_custom_call.1} parent=225 // loop_header_branch
          %330 = sbr.rel (%p328) target = $region233
        $region230: #{tpu_custom_call.1} parent=225 // loop_body
          %v334 = vld [vmem:[%s332] sm:%s325]
          %335 = vst [vmem:[%s333] sm:%s325] %v334
        $region231: #{tpu_custom_call.1} parent=225 // loop_footer
          %s331 = sadd.s32 1, %s327
        $region232: #{tpu_custom_call.1} parent=225 // loop_footer_branch
          %326 = sbr.rel target = $region228
        $region233: #{tpu_custom_call.1} parent=225 // loop_exit
          _
      $region226: #{tpu_custom_call.1} parent=5 // pred_fallthru
        _
      // Predicated region
      $region245: #{tpu_custom_call.1} parent=5 // pred_check
        _
      $region246: #{tpu_custom_call.1} parent=5 // pred_check_branch
        %352 = sbr.rel (0) target = $region248
      $region247: #{tpu_custom_call.1} parent=5 // pred_region
        %353 = vsyncadd [#allocation6], 16
      $region248: #{tpu_custom_call.1} parent=5 // pred_fallthru
        _
      %s354 = sadd.s32 %s82, 7
      %s355 = sld [smem:[#allocation9 + %s354]]
      %s356 = sadd.s32 %s39, 56
      %s357 = scalar_lea.vmem %s5, %s355
      %s358 = scalar_lea.vmem [#allocation3], %s356
      // Predicated region
      $region249: #{tpu_custom_call.1} parent=5 // pred_check
        _
      $region250: #{tpu_custom_call.1} parent=5 // pred_check_branch
        %360 = sbr.rel target = $region252
      $region251: #{tpu_custom_call.1} parent=5 // pred_region
        // Predicated region
        $region264: #{tpu_custom_call.1} parent=251 // pred_check
          _
        $region265: #{tpu_custom_call.1} parent=251 // pred_check_branch
          %376 = sbr.rel (0) target = $region267
        $region266: #{tpu_custom_call.1} parent=251 // pred_region
          %s378 = ssub.s32 2, 1
          loop: start=0, step=1, limit=1
          $region268: #{tpu_custom_call.1} parent=266 // loop_pre_header
            _
          $region269: #{tpu_custom_call.1} parent=266 // loop_header
            %s380 = sphi 0, %s384
            %p381 = scmp.ge.s32.totalorder %s380, 1
            %s385 = sphi %s357, %s357
            %s386 = sphi %s358, %s358
          $region270: #{tpu_custom_call.1} parent=266 // loop_header_branch
            %383 = sbr.rel (%p381) target = $region274
          $region271: #{tpu_custom_call.1} parent=266 // loop_body
            %v387 = vld [vmem:[%s385] sm:%s378]
            %388 = vst [vmem:[%s386] sm:%s378] %v387
          $region272: #{tpu_custom_call.1} parent=266 // loop_footer
            %s384 = sadd.s32 1, %s380
          $region273: #{tpu_custom_call.1} parent=266 // loop_footer_branch
            %379 = sbr.rel target = $region269
          $region274: #{tpu_custom_call.1} parent=266 // loop_exit
            _
        $region267: #{tpu_custom_call.1} parent=251 // pred_fallthru
          _
      $region252: #{tpu_custom_call.1} parent=5 // pred_fallthru
        _
      // Predicated region
      $region253: #{tpu_custom_call.1} parent=5 // pred_check
        _
      $region254: #{tpu_custom_call.1} parent=5 // pred_check_branch
        %362 = sbr.rel (0) target = $region256
      $region255: #{tpu_custom_call.1} parent=5 // pred_region
        %s364 = ssub.s32 2, 1
        loop: start=0, step=1, limit=1
        $region257: #{tpu_custom_call.1} parent=255 // loop_pre_header
          _
        $region258: #{tpu_custom_call.1} parent=255 // loop_header
          %s366 = sphi 0, %s370
          %p367 = scmp.ge.s32.totalorder %s366, 1
          %s371 = sphi %s357, %s357
          %s372 = sphi %s358, %s358
        $region259: #{tpu_custom_call.1} parent=255 // loop_header_branch
          %369 = sbr.rel (%p367) target = $region263
        $region260: #{tpu_custom_call.1} parent=255 // loop_body
          %v373 = vld [vmem:[%s371] sm:%s364]
          %374 = vst [vmem:[%s372] sm:%s364] %v373
        $region261: #{tpu_custom_call.1} parent=255 // loop_footer
          %s370 = sadd.s32 1, %s366
        $region262: #{tpu_custom_call.1} parent=255 // loop_footer_branch
          %365 = sbr.rel target = $region258
        $region263: #{tpu_custom_call.1} parent=255 // loop_exit
          _
      $region256: #{tpu_custom_call.1} parent=5 // pred_fallthru
        _
      // Predicated region
      $region275: #{tpu_custom_call.1} parent=5 // pred_check
        _
      $region276: #{tpu_custom_call.1} parent=5 // pred_check_branch
        %391 = sbr.rel (0) target = $region278
      $region277: #{tpu_custom_call.1} parent=5 // pred_region
        %392 = vsyncadd [#allocation6], 16
      $region278: #{tpu_custom_call.1} parent=5 // pred_fallthru
        _
      %s393 = sadd.s32 %s82, 8
      %s394 = sld [smem:[#allocation9 + %s393]]
      %s395 = sadd.s32 %s39, 64
      %s396 = scalar_lea.vmem %s5, %s394
      %s397 = scalar_lea.vmem [#allocation3], %s395
      // Predicated region
      $region279: #{tpu_custom_call.1} parent=5 // pred_check
        _
      $region280: #{tpu_custom_call.1} parent=5 // pred_check_branch
        %399 = sbr.rel target = $region282
      $region281: #{tpu_custom_call.1} parent=5 // pred_region
        // Predicated region
        $region294: #{tpu_custom_call.1} parent=281 // pred_check
          _
        $region295: #{tpu_custom_call.1} parent=281 // pred_check_branch
          %415 = sbr.rel (0) target = $region297
        $region296: #{tpu_custom_call.1} parent=281 // pred_region
          %s417 = ssub.s32 2, 1
          loop: start=0, step=1, limit=1
          $region298: #{tpu_custom_call.1} parent=296 // loop_pre_header
            _
          $region299: #{tpu_custom_call.1} parent=296 // loop_header
            %s419 = sphi 0, %s423
            %p420 = scmp.ge.s32.totalorder %s419, 1
            %s424 = sphi %s396, %s396
            %s425 = sphi %s397, %s397
          $region300: #{tpu_custom_call.1} parent=296 // loop_header_branch
            %422 = sbr.rel (%p420) target = $region304
          $region301: #{tpu_custom_call.1} parent=296 // loop_body
            %v426 = vld [vmem:[%s424] sm:%s417]
            %427 = vst [vmem:[%s425] sm:%s417] %v426
          $region302: #{tpu_custom_call.1} parent=296 // loop_footer
            %s423 = sadd.s32 1, %s419
          $region303: #{tpu_custom_call.1} parent=296 // loop_footer_branch
            %418 = sbr.rel target = $region299
          $region304: #{tpu_custom_call.1} parent=296 // loop_exit
            _
        $region297: #{tpu_custom_call.1} parent=281 // pred_fallthru
          _
      $region282: #{tpu_custom_call.1} parent=5 // pred_fallthru
        _
      // Predicated region
      $region283: #{tpu_custom_call.1} parent=5 // pred_check
        _
      $region284: #{tpu_custom_call.1} parent=5 // pred_check_branch
        %401 = sbr.rel (0) target = $region286
      $region285: #{tpu_custom_call.1} parent=5 // pred_region
        %s403 = ssub.s32 2, 1
        loop: start=0, step=1, limit=1
        $region287: #{tpu_custom_call.1} parent=285 // loop_pre_header
          _
        $region288: #{tpu_custom_call.1} parent=285 // loop_header
          %s405 = sphi 0, %s409
          %p406 = scmp.ge.s32.totalorder %s405, 1
          %s410 = sphi %s396, %s396
          %s411 = sphi %s397, %s397
        $region289: #{tpu_custom_call.1} parent=285 // loop_header_branch
          %408 = sbr.rel (%p406) target = $region293
        $region290: #{tpu_custom_call.1} parent=285 // loop_body
          %v412 = vld [vmem:[%s410] sm:%s403]
          %413 = vst [vmem:[%s411] sm:%s403] %v412
        $region291: #{tpu_custom_call.1} parent=285 // loop_footer
          %s409 = sadd.s32 1, %s405
        $region292: #{tpu_custom_call.1} parent=285 // loop_footer_branch
          %404 = sbr.rel target = $region288
        $region293: #{tpu_custom_call.1} parent=285 // loop_exit
          _
      $region286: #{tpu_custom_call.1} parent=5 // pred_fallthru
        _
      // Predicated region
      $region305: #{tpu_custom_call.1} parent=5 // pred_check
        _
      $region306: #{tpu_custom_call.1} parent=5 // pred_check_branch
        %430 = sbr.rel (0) target = $region308
      $region307: #{tpu_custom_call.1} parent=5 // pred_region
        %431 = vsyncadd [#allocation6], 16
      $region308: #{tpu_custom_call.1} parent=5 // pred_fallthru
        _
      %s432 = sld [smem:[#allocation10 + %s44]]
      %s433 = scalar_lea.vmem %s6, %s432
      %s434 = scalar_lea.vmem [#allocation4], %s39
      %s435 = scalar_lea.sflag [#allocation6], 1
      // Predicated region
      $region309: #{tpu_custom_call.1} parent=5 // pred_check
        _
      $region310: #{tpu_custom_call.1} parent=5 // pred_check_branch
        %437 = sbr.rel target = $region312
      $region311: #{tpu_custom_call.1} parent=5 // pred_region
        // Predicated region
        $region324: #{tpu_custom_call.1} parent=311 // pred_check
          _
        $region325: #{tpu_custom_call.1} parent=311 // pred_check_branch
          %453 = sbr.rel (0) target = $region327
        $region326: #{tpu_custom_call.1} parent=311 // pred_region
          %s455 = ssub.s32 2, 1
          loop: start=0, step=1, limit=1
          $region328: #{tpu_custom_call.1} parent=326 // loop_pre_header
            _
          $region329: #{tpu_custom_call.1} parent=326 // loop_header
            %s457 = sphi 0, %s461
            %p458 = scmp.ge.s32.totalorder %s457, 1
            %s462 = sphi %s433, %s433
            %s463 = sphi %s434, %s434
          $region330: #{tpu_custom_call.1} parent=326 // loop_header_branch
            %460 = sbr.rel (%p458) target = $region334
          $region331: #{tpu_custom_call.1} parent=326 // loop_body
            %v464 = vld [vmem:[%s462] sm:%s455]
            %465 = vst [vmem:[%s463] sm:%s455] %v464
          $region332: #{tpu_custom_call.1} parent=326 // loop_footer
            %s461 = sadd.s32 1, %s457
          $region333: #{tpu_custom_call.1} parent=326 // loop_footer_branch
            %456 = sbr.rel target = $region329
          $region334: #{tpu_custom_call.1} parent=326 // loop_exit
            _
        $region327: #{tpu_custom_call.1} parent=311 // pred_fallthru
          _
      $region312: #{tpu_custom_call.1} parent=5 // pred_fallthru
        _
      // Predicated region
      $region313: #{tpu_custom_call.1} parent=5 // pred_check
        _
      $region314: #{tpu_custom_call.1} parent=5 // pred_check_branch
        %439 = sbr.rel (0) target = $region316
      $region315: #{tpu_custom_call.1} parent=5 // pred_region
        %s441 = ssub.s32 2, 1
        loop: start=0, step=1, limit=1
        $region317: #{tpu_custom_call.1} parent=315 // loop_pre_header
          _
        $region318: #{tpu_custom_call.1} parent=315 // loop_header
          %s443 = sphi 0, %s447
          %p444 = scmp.ge.s32.totalorder %s443, 1
          %s448 = sphi %s433, %s433
          %s449 = sphi %s434, %s434
        $region319: #{tpu_custom_call.1} parent=315 // loop_header_branch
          %446 = sbr.rel (%p444) target = $region323
        $region320: #{tpu_custom_call.1} parent=315 // loop_body
          %v450 = vld [vmem:[%s448] sm:%s441]
          %451 = vst [vmem:[%s449] sm:%s441] %v450
        $region321: #{tpu_custom_call.1} parent=315 // loop_footer
          %s447 = sadd.s32 1, %s443
        $region322: #{tpu_custom_call.1} parent=315 // loop_footer_branch
          %442 = sbr.rel target = $region318
        $region323: #{tpu_custom_call.1} parent=315 // loop_exit
          _
      $region316: #{tpu_custom_call.1} parent=5 // pred_fallthru
        _
      // Predicated region
      $region335: #{tpu_custom_call.1} parent=5 // pred_check
        _
      $region336: #{tpu_custom_call.1} parent=5 // pred_check_branch
        %468 = sbr.rel (0) target = $region338
      $region337: #{tpu_custom_call.1} parent=5 // pred_region
        %469 = vsyncadd %s435, 16
      $region338: #{tpu_custom_call.1} parent=5 // pred_fallthru
        _
      %s470 = sld [smem:[#allocation11 + %s82]]
      %s471 = scalar_lea.vmem %s7, %s470
      %s472 = scalar_lea.vmem [#allocation5], %s39
      // Predicated region
      $region339: #{tpu_custom_call.1} parent=5 // pred_check
        _
      $region340: #{tpu_custom_call.1} parent=5 // pred_check_branch
        %474 = sbr.rel target = $region342
      $region341: #{tpu_custom_call.1} parent=5 // pred_region
        // Predicated region
        $region354: #{tpu_custom_call.1} parent=341 // pred_check
          _
        $region355: #{tpu_custom_call.1} parent=341 // pred_check_branch
          %490 = sbr.rel (0) target = $region357
        $region356: #{tpu_custom_call.1} parent=341 // pred_region
          %s492 = ssub.s32 2, 1
          loop: start=0, step=1, limit=1
          $region358: #{tpu_custom_call.1} parent=356 // loop_pre_header
            _
          $region359: #{tpu_custom_call.1} parent=356 // loop_header
            %s494 = sphi 0, %s498
            %p495 = scmp.ge.s32.totalorder %s494, 1
            %s499 = sphi %s471, %s471
            %s500 = sphi %s472, %s472
          $region360: #{tpu_custom_call.1} parent=356 // loop_header_branch
            %497 = sbr.rel (%p495) target = $region364
          $region361: #{tpu_custom_call.1} parent=356 // loop_body
            %v501 = vld [vmem:[%s499] sm:%s492]
            %502 = vst [vmem:[%s500] sm:%s492] %v501
          $region362: #{tpu_custom_call.1} parent=356 // loop_footer
            %s498 = sadd.s32 1, %s494
          $region363: #{tpu_custom_call.1} parent=356 // loop_footer_branch
            %493 = sbr.rel target = $region359
          $region364: #{tpu_custom_call.1} parent=356 // loop_exit
            _
        $region357: #{tpu_custom_call.1} parent=341 // pred_fallthru
          _
      $region342: #{tpu_custom_call.1} parent=5 // pred_fallthru
        _
      // Predicated region
      $region343: #{tpu_custom_call.1} parent=5 // pred_check
        _
      $region344: #{tpu_custom_call.1} parent=5 // pred_check_branch
        %476 = sbr.rel (0) target = $region346
      $region345: #{tpu_custom_call.1} parent=5 // pred_region
        %s478 = ssub.s32 2, 1
        loop: start=0, step=1, limit=1
        $region347: #{tpu_custom_call.1} parent=345 // loop_pre_header
          _
        $region348: #{tpu_custom_call.1} parent=345 // loop_header
          %s480 = sphi 0, %s484
          %p481 = scmp.ge.s32.totalorder %s480, 1
          %s485 = sphi %s471, %s471
          %s486 = sphi %s472, %s472
        $region349: #{tpu_custom_call.1} parent=345 // loop_header_branch
          %483 = sbr.rel (%p481) target = $region353
        $region350: #{tpu_custom_call.1} parent=345 // loop_body
          %v487 = vld [vmem:[%s485] sm:%s478]
          %488 = vst [vmem:[%s486] sm:%s478] %v487
        $region351: #{tpu_custom_call.1} parent=345 // loop_footer
          %s484 = sadd.s32 1, %s480
        $region352: #{tpu_custom_call.1} parent=345 // loop_footer_branch
          %479 = sbr.rel target = $region348
        $region353: #{tpu_custom_call.1} parent=345 // loop_exit
          _
      $region346: #{tpu_custom_call.1} parent=5 // pred_fallthru
        _
      // Predicated region
      $region365: #{tpu_custom_call.1} parent=5 // pred_check
        _
      $region366: #{tpu_custom_call.1} parent=5 // pred_check_branch
        %505 = sbr.rel (0) target = $region368
      $region367: #{tpu_custom_call.1} parent=5 // pred_region
        %506 = vsyncadd %s435, 16
      $region368: #{tpu_custom_call.1} parent=5 // pred_fallthru
        _
      %s507 = sld [smem:[#allocation11 + %s120]]
      %s508 = scalar_lea.vmem %s7, %s507
      %s509 = scalar_lea.vmem [#allocation5], %s122
      // Predicated region
      $region369: #{tpu_custom_call.1} parent=5 // pred_check
        _
      $region370: #{tpu_custom_call.1} parent=5 // pred_check_branch
        %511 = sbr.rel target = $region372
      $region371: #{tpu_custom_call.1} parent=5 // pred_region
        // Predicated region
        $region384: #{tpu_custom_call.1} parent=371 // pred_check
          _
        $region385: #{tpu_custom_call.1} parent=371 // pred_check_branch
          %527 = sbr.rel (0) target = $region387
        $region386: #{tpu_custom_call.1} parent=371 // pred_region
          %s529 = ssub.s32 2, 1
          loop: start=0, step=1, limit=1
          $region388: #{tpu_custom_call.1} parent=386 // loop_pre_header
            _
          $region389: #{tpu_custom_call.1} parent=386 // loop_header
            %s531 = sphi 0, %s535
            %p532 = scmp.ge.s32.totalorder %s531, 1
            %s536 = sphi %s508, %s508
            %s537 = sphi %s509, %s509
          $region390: #{tpu_custom_call.1} parent=386 // loop_header_branch
            %534 = sbr.rel (%p532) target = $region394
          $region391: #{tpu_custom_call.1} parent=386 // loop_body
            %v538 = vld [vmem:[%s536] sm:%s529]
            %539 = vst [vmem:[%s537] sm:%s529] %v538
          $region392: #{tpu_custom_call.1} parent=386 // loop_footer
            %s535 = sadd.s32 1, %s531
          $region393: #{tpu_custom_call.1} parent=386 // loop_footer_branch
            %530 = sbr.rel target = $region389
          $region394: #{tpu_custom_call.1} parent=386 // loop_exit
            _
        $region387: #{tpu_custom_call.1} parent=371 // pred_fallthru
          _
      $region372: #{tpu_custom_call.1} parent=5 // pred_fallthru
        _
      // Predicated region
      $region373: #{tpu_custom_call.1} parent=5 // pred_check
        _
      $region374: #{tpu_custom_call.1} parent=5 // pred_check_branch
        %513 = sbr.rel (0) target = $region376
      $region375: #{tpu_custom_call.1} parent=5 // pred_region
        %s515 = ssub.s32 2, 1
        loop: start=0, step=1, limit=1
        $region377: #{tpu_custom_call.1} parent=375 // loop_pre_header
          _
        $region378: #{tpu_custom_call.1} parent=375 // loop_header
          %s517 = sphi 0, %s521
          %p518 = scmp.ge.s32.totalorder %s517, 1
          %s522 = sphi %s508, %s508
          %s523 = sphi %s509, %s509
        $region379: #{tpu_custom_call.1} parent=375 // loop_header_branch
          %520 = sbr.rel (%p518) target = $region383
        $region380: #{tpu_custom_call.1} parent=375 // loop_body
          %v524 = vld [vmem:[%s522] sm:%s515]
          %525 = vst [vmem:[%s523] sm:%s515] %v524
        $region381: #{tpu_custom_call.1} parent=375 // loop_footer
          %s521 = sadd.s32 1, %s517
        $region382: #{tpu_custom_call.1} parent=375 // loop_footer_branch
          %516 = sbr.rel target = $region378
        $region383: #{tpu_custom_call.1} parent=375 // loop_exit
          _
      $region376: #{tpu_custom_call.1} parent=5 // pred_fallthru
        _
      // Predicated region
      $region395: #{tpu_custom_call.1} parent=5 // pred_check
        _
      $region396: #{tpu_custom_call.1} parent=5 // pred_check_branch
        %542 = sbr.rel (0) target = $region398
      $region397: #{tpu_custom_call.1} parent=5 // pred_region
        %543 = vsyncadd %s435, 16
      $region398: #{tpu_custom_call.1} parent=5 // pred_fallthru
        _
      %s544 = sld [smem:[#allocation11 + %s159]]
      %s545 = scalar_lea.vmem %s7, %s544
      %s546 = scalar_lea.vmem [#allocation5], %s161
      // Predicated region
      $region399: #{tpu_custom_call.1} parent=5 // pred_check
        _
      $region400: #{tpu_custom_call.1} parent=5 // pred_check_branch
        %548 = sbr.rel target = $region402
      $region401: #{tpu_custom_call.1} parent=5 // pred_region
        // Predicated region
        $region414: #{tpu_custom_call.1} parent=401 // pred_check
          _
        $region415: #{tpu_custom_call.1} parent=401 // pred_check_branch
          %564 = sbr.rel (0) target = $region417
        $region416: #{tpu_custom_call.1} parent=401 // pred_region
          %s566 = ssub.s32 2, 1
          loop: start=0, step=1, limit=1
          $region418: #{tpu_custom_call.1} parent=416 // loop_pre_header
            _
          $region419: #{tpu_custom_call.1} parent=416 // loop_header
            %s568 = sphi 0, %s572
            %p569 = scmp.ge.s32.totalorder %s568, 1
            %s573 = sphi %s545, %s545
            %s574 = sphi %s546, %s546
          $region420: #{tpu_custom_call.1} parent=416 // loop_header_branch
            %571 = sbr.rel (%p569) target = $region424
          $region421: #{tpu_custom_call.1} parent=416 // loop_body
            %v575 = vld [vmem:[%s573] sm:%s566]
            %576 = vst [vmem:[%s574] sm:%s566] %v575
          $region422: #{tpu_custom_call.1} parent=416 // loop_footer
            %s572 = sadd.s32 1, %s568
          $region423: #{tpu_custom_call.1} parent=416 // loop_footer_branch
            %567 = sbr.rel target = $region419
          $region424: #{tpu_custom_call.1} parent=416 // loop_exit
            _
        $region417: #{tpu_custom_call.1} parent=401 // pred_fallthru
          _
      $region402: #{tpu_custom_call.1} parent=5 // pred_fallthru
        _
      // Predicated region
      $region403: #{tpu_custom_call.1} parent=5 // pred_check
        _
      $region404: #{tpu_custom_call.1} parent=5 // pred_check_branch
        %550 = sbr.rel (0) target = $region406
      $region405: #{tpu_custom_call.1} parent=5 // pred_region
        %s552 = ssub.s32 2, 1
        loop: start=0, step=1, limit=1
        $region407: #{tpu_custom_call.1} parent=405 // loop_pre_header
          _
        $region408: #{tpu_custom_call.1} parent=405 // loop_header
          %s554 = sphi 0, %s558
          %p555 = scmp.ge.s32.totalorder %s554, 1
          %s559 = sphi %s545, %s545
          %s560 = sphi %s546, %s546
        $region409: #{tpu_custom_call.1} parent=405 // loop_header_branch
          %557 = sbr.rel (%p555) target = $region413
        $region410: #{tpu_custom_call.1} parent=405 // loop_body
          %v561 = vld [vmem:[%s559] sm:%s552]
          %562 = vst [vmem:[%s560] sm:%s552] %v561
        $region411: #{tpu_custom_call.1} parent=405 // loop_footer
          %s558 = sadd.s32 1, %s554
        $region412: #{tpu_custom_call.1} parent=405 // loop_footer_branch
          %553 = sbr.rel target = $region408
        $region413: #{tpu_custom_call.1} parent=405 // loop_exit
          _
      $region406: #{tpu_custom_call.1} parent=5 // pred_fallthru
        _
      // Predicated region
      $region425: #{tpu_custom_call.1} parent=5 // pred_check
        _
      $region426: #{tpu_custom_call.1} parent=5 // pred_check_branch
        %579 = sbr.rel (0) target = $region428
      $region427: #{tpu_custom_call.1} parent=5 // pred_region
        %580 = vsyncadd %s435, 16
      $region428: #{tpu_custom_call.1} parent=5 // pred_fallthru
        _
      %s581 = sld [smem:[#allocation11 + %s198]]
      %s582 = scalar_lea.vmem %s7, %s581
      %s583 = scalar_lea.vmem [#allocation5], %s200
      // Predicated region
      $region429: #{tpu_custom_call.1} parent=5 // pred_check
        _
      $region430: #{tpu_custom_call.1} parent=5 // pred_check_branch
        %585 = sbr.rel target = $region432
      $region431: #{tpu_custom_call.1} parent=5 // pred_region
        // Predicated region
        $region444: #{tpu_custom_call.1} parent=431 // pred_check
          _
        $region445: #{tpu_custom_call.1} parent=431 // pred_check_branch
          %601 = sbr.rel (0) target = $region447
        $region446: #{tpu_custom_call.1} parent=431 // pred_region
          %s603 = ssub.s32 2, 1
          loop: start=0, step=1, limit=1
          $region448: #{tpu_custom_call.1} parent=446 // loop_pre_header
            _
          $region449: #{tpu_custom_call.1} parent=446 // loop_header
            %s605 = sphi 0, %s609
            %p606 = scmp.ge.s32.totalorder %s605, 1
            %s610 = sphi %s582, %s582
            %s611 = sphi %s583, %s583
          $region450: #{tpu_custom_call.1} parent=446 // loop_header_branch
            %608 = sbr.rel (%p606) target = $region454
          $region451: #{tpu_custom_call.1} parent=446 // loop_body
            %v612 = vld [vmem:[%s610] sm:%s603]
            %613 = vst [vmem:[%s611] sm:%s603] %v612
          $region452: #{tpu_custom_call.1} parent=446 // loop_footer
            %s609 = sadd.s32 1, %s605
          $region453: #{tpu_custom_call.1} parent=446 // loop_footer_branch
            %604 = sbr.rel target = $region449
          $region454: #{tpu_custom_call.1} parent=446 // loop_exit
            _
        $region447: #{tpu_custom_call.1} parent=431 // pred_fallthru
          _
      $region432: #{tpu_custom_call.1} parent=5 // pred_fallthru
        _
      // Predicated region
      $region433: #{tpu_custom_call.1} parent=5 // pred_check
        _
      $region434: #{tpu_custom_call.1} parent=5 // pred_check_branch
        %587 = sbr.rel (0) target = $region436
      $region435: #{tpu_custom_call.1} parent=5 // pred_region
        %s589 = ssub.s32 2, 1
        loop: start=0, step=1, limit=1
        $region437: #{tpu_custom_call.1} parent=435 // loop_pre_header
          _
        $region438: #{tpu_custom_call.1} parent=435 // loop_header
          %s591 = sphi 0, %s595
          %p592 = scmp.ge.s32.totalorder %s591, 1
          %s596 = sphi %s582, %s582
          %s597 = sphi %s583, %s583
        $region439: #{tpu_custom_call.1} parent=435 // loop_header_branch
          %594 = sbr.rel (%p592) target = $region443
        $region440: #{tpu_custom_call.1} parent=435 // loop_body
          %v598 = vld [vmem:[%s596] sm:%s589]
          %599 = vst [vmem:[%s597] sm:%s589] %v598
        $region441: #{tpu_custom_call.1} parent=435 // loop_footer
          %s595 = sadd.s32 1, %s591
        $region442: #{tpu_custom_call.1} parent=435 // loop_footer_branch
          %590 = sbr.rel target = $region438
        $region443: #{tpu_custom_call.1} parent=435 // loop_exit
          _
      $region436: #{tpu_custom_call.1} parent=5 // pred_fallthru
        _
      // Predicated region
      $region455: #{tpu_custom_call.1} parent=5 // pred_check
        _
      $region456: #{tpu_custom_call.1} parent=5 // pred_check_branch
        %616 = sbr.rel (0) target = $region458
      $region457: #{tpu_custom_call.1} parent=5 // pred_region
        %617 = vsyncadd %s435, 16
      $region458: #{tpu_custom_call.1} parent=5 // pred_fallthru
        _
      %s618 = sld [smem:[#allocation11 + %s237]]
      %s619 = scalar_lea.vmem %s7, %s618
      %s620 = scalar_lea.vmem [#allocation5], %s239
      // Predicated region
      $region459: #{tpu_custom_call.1} parent=5 // pred_check
        _
      $region460: #{tpu_custom_call.1} parent=5 // pred_check_branch
        %622 = sbr.rel target = $region462
      $region461: #{tpu_custom_call.1} parent=5 // pred_region
        // Predicated region
        $region474: #{tpu_custom_call.1} parent=461 // pred_check
          _
        $region475: #{tpu_custom_call.1} parent=461 // pred_check_branch
          %638 = sbr.rel (0) target = $region477
        $region476: #{tpu_custom_call.1} parent=461 // pred_region
          %s640 = ssub.s32 2, 1
          loop: start=0, step=1, limit=1
          $region478: #{tpu_custom_call.1} parent=476 // loop_pre_header
            _
          $region479: #{tpu_custom_call.1} parent=476 // loop_header
            %s642 = sphi 0, %s646
            %p643 = scmp.ge.s32.totalorder %s642, 1
            %s647 = sphi %s619, %s619
            %s648 = sphi %s620, %s620
          $region480: #{tpu_custom_call.1} parent=476 // loop_header_branch
            %645 = sbr.rel (%p643) target = $region484
          $region481: #{tpu_custom_call.1} parent=476 // loop_body
            %v649 = vld [vmem:[%s647] sm:%s640]
            %650 = vst [vmem:[%s648] sm:%s640] %v649
          $region482: #{tpu_custom_call.1} parent=476 // loop_footer
            %s646 = sadd.s32 1, %s642
          $region483: #{tpu_custom_call.1} parent=476 // loop_footer_branch
            %641 = sbr.rel target = $region479
          $region484: #{tpu_custom_call.1} parent=476 // loop_exit
            _
        $region477: #{tpu_custom_call.1} parent=461 // pred_fallthru
          _
      $region462: #{tpu_custom_call.1} parent=5 // pred_fallthru
        _
      // Predicated region
      $region463: #{tpu_custom_call.1} parent=5 // pred_check
        _
      $region464: #{tpu_custom_call.1} parent=5 // pred_check_branch
        %624 = sbr.rel (0) target = $region466
      $region465: #{tpu_custom_call.1} parent=5 // pred_region
        %s626 = ssub.s32 2, 1
        loop: start=0, step=1, limit=1
        $region467: #{tpu_custom_call.1} parent=465 // loop_pre_header
          _
        $region468: #{tpu_custom_call.1} parent=465 // loop_header
          %s628 = sphi 0, %s632
          %p629 = scmp.ge.s32.totalorder %s628, 1
          %s633 = sphi %s619, %s619
          %s634 = sphi %s620, %s620
        $region469: #{tpu_custom_call.1} parent=465 // loop_header_branch
          %631 = sbr.rel (%p629) target = $region473
        $region470: #{tpu_custom_call.1} parent=465 // loop_body
          %v635 = vld [vmem:[%s633] sm:%s626]
          %636 = vst [vmem:[%s634] sm:%s626] %v635
        $region471: #{tpu_custom_call.1} parent=465 // loop_footer
          %s632 = sadd.s32 1, %s628
        $region472: #{tpu_custom_call.1} parent=465 // loop_footer_branch
          %627 = sbr.rel target = $region468
        $region473: #{tpu_custom_call.1} parent=465 // loop_exit
          _
      $region466: #{tpu_custom_call.1} parent=5 // pred_fallthru
        _
      // Predicated region
      $region485: #{tpu_custom_call.1} parent=5 // pred_check
        _
      $region486: #{tpu_custom_call.1} parent=5 // pred_check_branch
        %653 = sbr.rel (0) target = $region488
      $region487: #{tpu_custom_call.1} parent=5 // pred_region
        %654 = vsyncadd %s435, 16
      $region488: #{tpu_custom_call.1} parent=5 // pred_fallthru
        _
      %s655 = sld [smem:[#allocation11 + %s276]]
      %s656 = scalar_lea.vmem %s7, %s655
      %s657 = scalar_lea.vmem [#allocation5], %s278
      // Predicated region
      $region489: #{tpu_custom_call.1} parent=5 // pred_check
        _
      $region490: #{tpu_custom_call.1} parent=5 // pred_check_branch
        %659 = sbr.rel target = $region492
      $region491: #{tpu_custom_call.1} parent=5 // pred_region
        // Predicated region
        $region504: #{tpu_custom_call.1} parent=491 // pred_check
          _
        $region505: #{tpu_custom_call.1} parent=491 // pred_check_branch
          %675 = sbr.rel (0) target = $region507
        $region506: #{tpu_custom_call.1} parent=491 // pred_region
          %s677 = ssub.s32 2, 1
          loop: start=0, step=1, limit=1
          $region508: #{tpu_custom_call.1} parent=506 // loop_pre_header
            _
          $region509: #{tpu_custom_call.1} parent=506 // loop_header
            %s679 = sphi 0, %s683
            %p680 = scmp.ge.s32.totalorder %s679, 1
            %s684 = sphi %s656, %s656
            %s685 = sphi %s657, %s657
          $region510: #{tpu_custom_call.1} parent=506 // loop_header_branch
            %682 = sbr.rel (%p680) target = $region514
          $region511: #{tpu_custom_call.1} parent=506 // loop_body
            %v686 = vld [vmem:[%s684] sm:%s677]
            %687 = vst [vmem:[%s685] sm:%s677] %v686
          $region512: #{tpu_custom_call.1} parent=506 // loop_footer
            %s683 = sadd.s32 1, %s679
          $region513: #{tpu_custom_call.1} parent=506 // loop_footer_branch
            %678 = sbr.rel target = $region509
          $region514: #{tpu_custom_call.1} parent=506 // loop_exit
            _
        $region507: #{tpu_custom_call.1} parent=491 // pred_fallthru
          _
      $region492: #{tpu_custom_call.1} parent=5 // pred_fallthru
        _
      // Predicated region
      $region493: #{tpu_custom_call.1} parent=5 // pred_check
        _
      $region494: #{tpu_custom_call.1} parent=5 // pred_check_branch
        %661 = sbr.rel (0) target = $region496
      $region495: #{tpu_custom_call.1} parent=5 // pred_region
        %s663 = ssub.s32 2, 1
        loop: start=0, step=1, limit=1
        $region497: #{tpu_custom_call.1} parent=495 // loop_pre_header
          _
        $region498: #{tpu_custom_call.1} parent=495 // loop_header
          %s665 = sphi 0, %s669
          %p666 = scmp.ge.s32.totalorder %s665, 1
          %s670 = sphi %s656, %s656
          %s671 = sphi %s657, %s657
        $region499: #{tpu_custom_call.1} parent=495 // loop_header_branch
          %668 = sbr.rel (%p666) target = $region503
        $region500: #{tpu_custom_call.1} parent=495 // loop_body
          %v672 = vld [vmem:[%s670] sm:%s663]
          %673 = vst [vmem:[%s671] sm:%s663] %v672
        $region501: #{tpu_custom_call.1} parent=495 // loop_footer
          %s669 = sadd.s32 1, %s665
        $region502: #{tpu_custom_call.1} parent=495 // loop_footer_branch
          %664 = sbr.rel target = $region498
        $region503: #{tpu_custom_call.1} parent=495 // loop_exit
          _
      $region496: #{tpu_custom_call.1} parent=5 // pred_fallthru
        _
      // Predicated region
      $region515: #{tpu_custom_call.1} parent=5 // pred_check
        _
      $region516: #{tpu_custom_call.1} parent=5 // pred_check_branch
        %690 = sbr.rel (0) target = $region518
      $region517: #{tpu_custom_call.1} parent=5 // pred_region
        %691 = vsyncadd %s435, 16
      $region518: #{tpu_custom_call.1} parent=5 // pred_fallthru
        _
      %s692 = sld [smem:[#allocation11 + %s315]]
      %s693 = scalar_lea.vmem %s7, %s692
      %s694 = scalar_lea.vmem [#allocation5], %s317
      // Predicated region
      $region519: #{tpu_custom_call.1} parent=5 // pred_check
        _
      $region520: #{tpu_custom_call.1} parent=5 // pred_check_branch
        %696 = sbr.rel target = $region522
      $region521: #{tpu_custom_call.1} parent=5 // pred_region
        // Predicated region
        $region534: #{tpu_custom_call.1} parent=521 // pred_check
          _
        $region535: #{tpu_custom_call.1} parent=521 // pred_check_branch
          %712 = sbr.rel (0) target = $region537
        $region536: #{tpu_custom_call.1} parent=521 // pred_region
          %s714 = ssub.s32 2, 1
          loop: start=0, step=1, limit=1
          $region538: #{tpu_custom_call.1} parent=536 // loop_pre_header
            _
          $region539: #{tpu_custom_call.1} parent=536 // loop_header
            %s716 = sphi 0, %s720
            %p717 = scmp.ge.s32.totalorder %s716, 1
            %s721 = sphi %s693, %s693
            %s722 = sphi %s694, %s694
          $region540: #{tpu_custom_call.1} parent=536 // loop_header_branch
            %719 = sbr.rel (%p717) target = $region544
          $region541: #{tpu_custom_call.1} parent=536 // loop_body
            %v723 = vld [vmem:[%s721] sm:%s714]
            %724 = vst [vmem:[%s722] sm:%s714] %v723
          $region542: #{tpu_custom_call.1} parent=536 // loop_footer
            %s720 = sadd.s32 1, %s716
          $region543: #{tpu_custom_call.1} parent=536 // loop_footer_branch
            %715 = sbr.rel target = $region539
          $region544: #{tpu_custom_call.1} parent=536 // loop_exit
            _
        $region537: #{tpu_custom_call.1} parent=521 // pred_fallthru
          _
      $region522: #{tpu_custom_call.1} parent=5 // pred_fallthru
        _
      // Predicated region
      $region523: #{tpu_custom_call.1} parent=5 // pred_check
        _
      $region524: #{tpu_custom_call.1} parent=5 // pred_check_branch
        %698 = sbr.rel (0) target = $region526
      $region525: #{tpu_custom_call.1} parent=5 // pred_region
        %s700 = ssub.s32 2, 1
        loop: start=0, step=1, limit=1
        $region527: #{tpu_custom_call.1} parent=525 // loop_pre_header
          _
        $region528: #{tpu_custom_call.1} parent=525 // loop_header
          %s702 = sphi 0, %s706
          %p703 = scmp.ge.s32.totalorder %s702, 1
          %s707 = sphi %s693, %s693
          %s708 = sphi %s694, %s694
        $region529: #{tpu_custom_call.1} parent=525 // loop_header_branch
          %705 = sbr.rel (%p703) target = $region533
        $region530: #{tpu_custom_call.1} parent=525 // loop_body
          %v709 = vld [vmem:[%s707] sm:%s700]
          %710 = vst [vmem:[%s708] sm:%s700] %v709
        $region531: #{tpu_custom_call.1} parent=525 // loop_footer
          %s706 = sadd.s32 1, %s702
        $region532: #{tpu_custom_call.1} parent=525 // loop_footer_branch
          %701 = sbr.rel target = $region528
        $region533: #{tpu_custom_call.1} parent=525 // loop_exit
          _
      $region526: #{tpu_custom_call.1} parent=5 // pred_fallthru
        _
      // Predicated region
      $region545: #{tpu_custom_call.1} parent=5 // pred_check
        _
      $region546: #{tpu_custom_call.1} parent=5 // pred_check_branch
        %727 = sbr.rel (0) target = $region548
      $region547: #{tpu_custom_call.1} parent=5 // pred_region
        %728 = vsyncadd %s435, 16
      $region548: #{tpu_custom_call.1} parent=5 // pred_fallthru
        _
      %s729 = sld [smem:[#allocation11 + %s354]]
      %s730 = scalar_lea.vmem %s7, %s729
      %s731 = scalar_lea.vmem [#allocation5], %s356
      // Predicated region
      $region549: #{tpu_custom_call.1} parent=5 // pred_check
        _
      $region550: #{tpu_custom_call.1} parent=5 // pred_check_branch
        %733 = sbr.rel target = $region552
      $region551: #{tpu_custom_call.1} parent=5 // pred_region
        // Predicated region
        $region564: #{tpu_custom_call.1} parent=551 // pred_check
          _
        $region565: #{tpu_custom_call.1} parent=551 // pred_check_branch
          %749 = sbr.rel (0) target = $region567
        $region566: #{tpu_custom_call.1} parent=551 // pred_region
          %s751 = ssub.s32 2, 1
          loop: start=0, step=1, limit=1
          $region568: #{tpu_custom_call.1} parent=566 // loop_pre_header
            _
          $region569: #{tpu_custom_call.1} parent=566 // loop_header
            %s753 = sphi 0, %s757
            %p754 = scmp.ge.s32.totalorder %s753, 1
            %s758 = sphi %s730, %s730
            %s759 = sphi %s731, %s731
          $region570: #{tpu_custom_call.1} parent=566 // loop_header_branch
            %756 = sbr.rel (%p754) target = $region574
          $region571: #{tpu_custom_call.1} parent=566 // loop_body
            %v760 = vld [vmem:[%s758] sm:%s751]
            %761 = vst [vmem:[%s759] sm:%s751] %v760
          $region572: #{tpu_custom_call.1} parent=566 // loop_footer
            %s757 = sadd.s32 1, %s753
          $region573: #{tpu_custom_call.1} parent=566 // loop_footer_branch
            %752 = sbr.rel target = $region569
          $region574: #{tpu_custom_call.1} parent=566 // loop_exit
            _
        $region567: #{tpu_custom_call.1} parent=551 // pred_fallthru
          _
      $region552: #{tpu_custom_call.1} parent=5 // pred_fallthru
        _
      // Predicated region
      $region553: #{tpu_custom_call.1} parent=5 // pred_check
        _
      $region554: #{tpu_custom_call.1} parent=5 // pred_check_branch
        %735 = sbr.rel (0) target = $region556
      $region555: #{tpu_custom_call.1} parent=5 // pred_region
        %s737 = ssub.s32 2, 1
        loop: start=0, step=1, limit=1
        $region557: #{tpu_custom_call.1} parent=555 // loop_pre_header
          _
        $region558: #{tpu_custom_call.1} parent=555 // loop_header
          %s739 = sphi 0, %s743
          %p740 = scmp.ge.s32.totalorder %s739, 1
          %s744 = sphi %s730, %s730
          %s745 = sphi %s731, %s731
        $region559: #{tpu_custom_call.1} parent=555 // loop_header_branch
          %742 = sbr.rel (%p740) target = $region563
        $region560: #{tpu_custom_call.1} parent=555 // loop_body
          %v746 = vld [vmem:[%s744] sm:%s737]
          %747 = vst [vmem:[%s745] sm:%s737] %v746
        $region561: #{tpu_custom_call.1} parent=555 // loop_footer
          %s743 = sadd.s32 1, %s739
        $region562: #{tpu_custom_call.1} parent=555 // loop_footer_branch
          %738 = sbr.rel target = $region558
        $region563: #{tpu_custom_call.1} parent=555 // loop_exit
          _
      $region556: #{tpu_custom_call.1} parent=5 // pred_fallthru
        _
      // Predicated region
      $region575: #{tpu_custom_call.1} parent=5 // pred_check
        _
      $region576: #{tpu_custom_call.1} parent=5 // pred_check_branch
        %764 = sbr.rel (0) target = $region578
      $region577: #{tpu_custom_call.1} parent=5 // pred_region
        %765 = vsyncadd %s435, 16
      $region578: #{tpu_custom_call.1} parent=5 // pred_fallthru
        _
      %s766 = sld [smem:[#allocation11 + %s393]]
      %s767 = scalar_lea.vmem %s7, %s766
      %s768 = scalar_lea.vmem [#allocation5], %s395
      // Predicated region
      $region579: #{tpu_custom_call.1} parent=5 // pred_check
        _
      $region580: #{tpu_custom_call.1} parent=5 // pred_check_branch
        %770 = sbr.rel target = $region582
      $region581: #{tpu_custom_call.1} parent=5 // pred_region
        // Predicated region
        $region594: #{tpu_custom_call.1} parent=581 // pred_check
          _
        $region595: #{tpu_custom_call.1} parent=581 // pred_check_branch
          %786 = sbr.rel (0) target = $region597
        $region596: #{tpu_custom_call.1} parent=581 // pred_region
          %s788 = ssub.s32 2, 1
          loop: start=0, step=1, limit=1
          $region598: #{tpu_custom_call.1} parent=596 // loop_pre_header
            _
          $region599: #{tpu_custom_call.1} parent=596 // loop_header
            %s790 = sphi 0, %s794
            %p791 = scmp.ge.s32.totalorder %s790, 1
            %s795 = sphi %s767, %s767
            %s796 = sphi %s768, %s768
          $region600: #{tpu_custom_call.1} parent=596 // loop_header_branch
            %793 = sbr.rel (%p791) target = $region604
          $region601: #{tpu_custom_call.1} parent=596 // loop_body
            %v797 = vld [vmem:[%s795] sm:%s788]
            %798 = vst [vmem:[%s796] sm:%s788] %v797
          $region602: #{tpu_custom_call.1} parent=596 // loop_footer
            %s794 = sadd.s32 1, %s790
          $region603: #{tpu_custom_call.1} parent=596 // loop_footer_branch
            %789 = sbr.rel target = $region599
          $region604: #{tpu_custom_call.1} parent=596 // loop_exit
            _
        $region597: #{tpu_custom_call.1} parent=581 // pred_fallthru
          _
      $region582: #{tpu_custom_call.1} parent=5 // pred_fallthru
        _
      // Predicated region
      $region583: #{tpu_custom_call.1} parent=5 // pred_check
        _
      $region584: #{tpu_custom_call.1} parent=5 // pred_check_branch
        %772 = sbr.rel (0) target = $region586
      $region585: #{tpu_custom_call.1} parent=5 // pred_region
        %s774 = ssub.s32 2, 1
        loop: start=0, step=1, limit=1
        $region587: #{tpu_custom_call.1} parent=585 // loop_pre_header
          _
        $region588: #{tpu_custom_call.1} parent=585 // loop_header
          %s776 = sphi 0, %s780
          %p777 = scmp.ge.s32.totalorder %s776, 1
          %s781 = sphi %s767, %s767
          %s782 = sphi %s768, %s768
        $region589: #{tpu_custom_call.1} parent=585 // loop_header_branch
          %779 = sbr.rel (%p777) target = $region593
        $region590: #{tpu_custom_call.1} parent=585 // loop_body
          %v783 = vld [vmem:[%s781] sm:%s774]
          %784 = vst [vmem:[%s782] sm:%s774] %v783
        $region591: #{tpu_custom_call.1} parent=585 // loop_footer
          %s780 = sadd.s32 1, %s776
        $region592: #{tpu_custom_call.1} parent=585 // loop_footer_branch
          %775 = sbr.rel target = $region588
        $region593: #{tpu_custom_call.1} parent=585 // loop_exit
          _
      $region586: #{tpu_custom_call.1} parent=5 // pred_fallthru
        _
      // Predicated region
      $region605: #{tpu_custom_call.1} parent=5 // pred_check
        _
      $region606: #{tpu_custom_call.1} parent=5 // pred_check_branch
        %801 = sbr.rel (0) target = $region608
      $region607: #{tpu_custom_call.1} parent=5 // pred_region
        %802 = vsyncadd %s435, 16
      $region608: #{tpu_custom_call.1} parent=5 // pred_fallthru
        _
    $region6: #{tpu_custom_call.1} parent=1 // loop_footer
      %s43 = sadd.s32 1, %s39
    $region7: #{tpu_custom_call.1} parent=1 // loop_footer_branch
      %38 = sbr.rel target = $region3
    $region8: #{tpu_custom_call.1} parent=1 // loop_exit
      _
    loop: start=0, step=1, limit=8
    $region609: #{tpu_custom_call.1} parent=1 // loop_pre_header
      _
    $region610: #{tpu_custom_call.1} parent=1 // loop_header
      %s804 = sphi 0, %s808
      %p805 = scmp.ge.s32.totalorder %s804, 8
    $region611: #{tpu_custom_call.1} parent=1 // loop_header_branch
      %807 = sbr.rel (%p805) target = $region615
    $region612: #{tpu_custom_call.1} parent=1 // loop_body
      %s809 = smul.u32 1, 1
      %s810 = sshll.u32 %s809, 4
      %811 = dma.done [#allocation6], %s810
      %s812 = sshll.u32 %s809, 4
      %813 = dma.done [#allocation6], %s812
      %s814 = sshll.u32 %s809, 4
      %815 = dma.done [#allocation6], %s814
      %s816 = sshll.u32 %s809, 4
      %817 = dma.done [#allocation6], %s816
      %s818 = sshll.u32 %s809, 4
      %819 = dma.done [#allocation6], %s818
      %s820 = sshll.u32 %s809, 4
      %821 = dma.done [#allocation6], %s820
      %s822 = sshll.u32 %s809, 4
      %823 = dma.done [#allocation6], %s822
      %s824 = sshll.u32 %s809, 4
      %825 = dma.done [#allocation6], %s824
      %s826 = sshll.u32 %s809, 4
      %827 = dma.done [#allocation6], %s826
      %s828 = sshll.u32 %s809, 4
      %829 = dma.done [#allocation6], %s828
      %s830 = scalar_lea.sflag [#allocation6], 1
      %s831 = sshll.u32 %s809, 4
      %832 = dma.done %s830, %s831
      %s833 = sshll.u32 %s809, 4
      %834 = dma.done %s830, %s833
      %s835 = sshll.u32 %s809, 4
      %836 = dma.done %s830, %s835
      %s837 = sshll.u32 %s809, 4
      %838 = dma.done %s830, %s837
      %s839 = sshll.u32 %s809, 4
      %840 = dma.done %s830, %s839
      %s841 = sshll.u32 %s809, 4
      %842 = dma.done %s830, %s841
      %s843 = sshll.u32 %s809, 4
      %844 = dma.done %s830, %s843
      %s845 = sshll.u32 %s809, 4
      %846 = dma.done %s830, %s845
      %s847 = sshll.u32 %s809, 4
      %848 = dma.done %s830, %s847
      %s849 = sshll.u32 %s809, 4
      %850 = dma.done %s830, %s849
    $region613: #{tpu_custom_call.1} parent=1 // loop_footer
      %s808 = sadd.s32 1, %s804
    $region614: #{tpu_custom_call.1} parent=1 // loop_footer_branch
      %803 = sbr.rel target = $region610
    $region615: #{tpu_custom_call.1} parent=1 // loop_exit
      _
    %v851 = vlaneseq
    %v852 = vshrl.u32 %v851, 7
    %v853 = vstv %s37
    %v854 = vadd.s32 %v853, %v852
    %vm855 = vcmp.lt.s32.totalorder %v854, 8
    %v856 = vld [vmem:[#allocation2] sm:$0xff]
    %v857 = vld [vmem:[#allocation3] sm:$0xff]
    %v858 = vmul.f32 %v857, %v856
    %vm859 = vcmask 261120
    %v860 = vsel %vm859, %v858, 0.0
    %861 = vadd.xlane.f32.xlu0 %v860
    %v862 = vpop.xlane.xlu0 %861
    %v863 = vmax.f32 %v862, -10.0
    %v864 = vmin.f32 %v863, 10.0
    %v865 = vsub.f32 0.0, %v864
    %v866 = vmul.f32 %v865, 1.442695
    %v867 = vpow.pop %v866
    %v868 = vadd.f32 %v867, 1.0
    %v869 = vlog2.pop %v868
    %v870 = vmul.f32 %v869, 0.6931472
    %v871 = vmul.f32 -0.5, %v867
    %v872 = vadd.f32 %v871, 1.0
    %v873 = vmul.f32 %v872, %v867
    %v874 = vand.u32 2147483647, %v867
    %vm875 = vcmp.lt.f32.partialorder %v874, 0.0004427343
    %v876 = vsel %vm875, %v873, %v870
    %v877 = vadd.f32 %v876, 0.0
    %v878 = vld [vmem:[#allocation3 + $0x8] sm:$0xff]
    %v879 = vmul.f32 %v878, %v856
    %v880 = vsel %vm859, %v879, 0.0
    %881 = vadd.xlane.f32.xlu0 %v880
    %v882 = vpop.xlane.xlu0 %881
    %v883 = vmax.f32 %v882, -10.0
    %v884 = vmin.f32 %v883, 10.0
    %v885 = vmul.f32 %v884, 1.442695
    %v886 = vpow.pop %v885
    %v887 = vadd.f32 %v886, 1.0
    %v888 = vlog2.pop %v887
    %v889 = vmul.f32 %v888, 0.6931472
    %v890 = vmul.f32 -0.5, %v886
    %v891 = vadd.f32 %v890, 1.0
    %v892 = vmul.f32 %v891, %v886
    %v893 = vand.u32 2147483647, %v886
    %vm894 = vcmp.lt.f32.partialorder %v893, 0.0004427343
    %v895 = vsel %vm894, %v892, %v889
    %v896 = vadd.f32 %v877, %v895
    %v897 = vld [vmem:[#allocation3 + $0x10] sm:$0xff]
    %v898 = vmul.f32 %v897, %v856
    %v899 = vsel %vm859, %v898, 0.0
    %900 = vadd.xlane.f32.xlu0 %v899
    %v901 = vpop.xlane.xlu0 %900
    %v902 = vmax.f32 %v901, -10.0
    %v903 = vmin.f32 %v902, 10.0
    %v904 = vmul.f32 %v903, 1.442695
    %v905 = vpow.pop %v904
    %v906 = vadd.f32 %v905, 1.0
    %v907 = vlog2.pop %v906
    %v908 = vmul.f32 %v907, 0.6931472
    %v909 = vmul.f32 -0.5, %v905
    %v910 = vadd.f32 %v909, 1.0
    %v911 = vmul.f32 %v910, %v905
    %v912 = vand.u32 2147483647, %v905
    %vm913 = vcmp.lt.f32.partialorder %v912, 0.0004427343
    %v914 = vsel %vm913, %v911, %v908
    %v915 = vadd.f32 %v896, %v914
    %v916 = vld [vmem:[#allocation3 + $0x18] sm:$0xff]
    %v917 = vmul.f32 %v916, %v856
    %v918 = vsel %vm859, %v917, 0.0
    %919 = vadd.xlane.f32.xlu0 %v918
    %v920 = vpop.xlane.xlu0 %919
    %v921 = vmax.f32 %v920, -10.0
    %v922 = vmin.f32 %v921, 10.0
    %v923 = vmul.f32 %v922, 1.442695
    %v924 = vpow.pop %v923
    %v925 = vadd.f32 %v924, 1.0
    %v926 = vlog2.pop %v925
    %v927 = vmul.f32 %v926, 0.6931472
    %v928 = vmul.f32 -0.5, %v924
    %v929 = vadd.f32 %v928, 1.0
    %v930 = vmul.f32 %v929, %v924
    %v931 = vand.u32 2147483647, %v924
    %vm932 = vcmp.lt.f32.partialorder %v931, 0.0004427343
    %v933 = vsel %vm932, %v930, %v927
    %v934 = vadd.f32 %v915, %v933
    %v935 = vld [vmem:[#allocation3 + $0x20] sm:$0xff]
    %v936 = vmul.f32 %v935, %v856
    %v937 = vsel %vm859, %v936, 0.0
    %938 = vadd.xlane.f32.xlu0 %v937
    %v939 = vpop.xlane.xlu0 %938
    %v940 = vmax.f32 %v939, -10.0
    %v941 = vmin.f32 %v940, 10.0
    %v942 = vmul.f32 %v941, 1.442695
    %v943 = vpow.pop %v942
    %v944 = vadd.f32 %v943, 1.0
    %v945 = vlog2.pop %v944
    %v946 = vmul.f32 %v945, 0.6931472
    %v947 = vmul.f32 -0.5, %v943
    %v948 = vadd.f32 %v947, 1.0
    %v949 = vmul.f32 %v948, %v943
    %v950 = vand.u32 2147483647, %v943
    %vm951 = vcmp.lt.f32.partialorder %v950, 0.0004427343
    %v952 = vsel %vm951, %v949, %v946
    %v953 = vadd.f32 %v934, %v952
    %v954 = vld [vmem:[#allocation3 + $0x28] sm:$0xff]
    %v955 = vmul.f32 %v954, %v856
    %v956 = vsel %vm859, %v955, 0.0
    %957 = vadd.xlane.f32.xlu0 %v956
    %v958 = vpop.xlane.xlu0 %957
    %v959 = vmax.f32 %v958, -10.0
    %v960 = vmin.f32 %v959, 10.0
    %v961 = vmul.f32 %v960, 1.442695
    %v962 = vpow.pop %v961
    %v963 = vadd.f32 %v962, 1.0
    %v964 = vlog2.pop %v963
    %v965 = vmul.f32 %v964, 0.6931472
    %v966 = vmul.f32 -0.5, %v962
    %v967 = vadd.f32 %v966, 1.0
    %v968 = vmul.f32 %v967, %v962
    %v969 = vand.u32 2147483647, %v962
    %vm970 = vcmp.lt.f32.partialorder %v969, 0.0004427343
    %v971 = vsel %vm970, %v968, %v965
    %v972 = vadd.f32 %v953, %v971
    %v973 = vld [vmem:[#allocation3 + $0x30] sm:$0xff]
    %v974 = vmul.f32 %v973, %v856
    %v975 = vsel %vm859, %v974, 0.0
    %976 = vadd.xlane.f32.xlu0 %v975
    %v977 = vpop.xlane.xlu0 %976
    %v978 = vmax.f32 %v977, -10.0
    %v979 = vmin.f32 %v978, 10.0
    %v980 = vmul.f32 %v979, 1.442695
    %v981 = vpow.pop %v980
    %v982 = vadd.f32 %v981, 1.0
    %v983 = vlog2.pop %v982
    %v984 = vmul.f32 %v983, 0.6931472
    %v985 = vmul.f32 -0.5, %v981
    %v986 = vadd.f32 %v985, 1.0
    %v987 = vmul.f32 %v986, %v981
    %v988 = vand.u32 2147483647, %v981
    %vm989 = vcmp.lt.f32.partialorder %v988, 0.0004427343
    %v990 = vsel %vm989, %v987, %v984
    %v991 = vadd.f32 %v972, %v990
    %v992 = vld [vmem:[#allocation3 + $0x38] sm:$0xff]
    %v993 = vmul.f32 %v992, %v856
    %v994 = vsel %vm859, %v993, 0.0
    %995 = vadd.xlane.f32.xlu0 %v994
    %v996 = vpop.xlane.xlu0 %995
    %v997 = vmax.f32 %v996, -10.0
    %v998 = vmin.f32 %v997, 10.0
    %v999 = vmul.f32 %v998, 1.442695
    %v1000 = vpow.pop %v999
    %v1001 = vadd.f32 %v1000, 1.0
    %v1002 = vlog2.pop %v1001
    %v1003 = vmul.f32 %v1002, 0.6931472
    %v1004 = vmul.f32 -0.5, %v1000
    %v1005 = vadd.f32 %v1004, 1.0
    %v1006 = vmul.f32 %v1005, %v1000
    %v1007 = vand.u32 2147483647, %v1000
    %vm1008 = vcmp.lt.f32.partialorder %v1007, 0.0004427343
    %v1009 = vsel %vm1008, %v1006, %v1003
    %v1010 = vadd.f32 %v991, %v1009
    %v1011 = vld [vmem:[#allocation3 + $0x40] sm:$0xff]
    %v1012 = vmul.f32 %v1011, %v856
    %v1013 = vsel %vm859, %v1012, 0.0
    %1014 = vadd.xlane.f32.xlu0 %v1013
    %v1015 = vpop.xlane.xlu0 %1014
    %v1016 = vmax.f32 %v1015, -10.0
    %v1017 = vmin.f32 %v1016, 10.0
    %v1018 = vmul.f32 %v1017, 1.442695
    %v1019 = vpow.pop %v1018
    %v1020 = vadd.f32 %v1019, 1.0
    %v1021 = vlog2.pop %v1020
    %v1022 = vmul.f32 %v1021, 0.6931472
    %v1023 = vmul.f32 -0.5, %v1019
    %v1024 = vadd.f32 %v1023, 1.0
    %v1025 = vmul.f32 %v1024, %v1019
    %v1026 = vand.u32 2147483647, %v1019
    %vm1027 = vcmp.lt.f32.partialorder %v1026, 0.0004427343
    %v1028 = vsel %vm1027, %v1025, %v1022
    %v1029 = vadd.f32 %v1010, %v1028
    %v1030 = vsel %vm855, %v1029, 0.0
    %vm1031 = vcmask 7168
    %v1032 = vsel %vm1031, %v1030, 0.0
    %1033 = vadd.xlane.f32.xlu0 %v1032
    %v1034 = vpop.xlane.xlu0 %1033
    %v1035 = vrot.slane %v1034, 4
    %v1036 = vadd.f32 %v1034, %v1035
    %v1037 = vrot.slane %v1036, 2
    %v1038 = vadd.f32 %v1036, %v1037
    %v1039 = vrot.slane %v1038, 1
    %v1040 = vadd.f32 %v1038, %v1039
    %s1041 = vtos %v1040
    %v1042 = vld [vmem:[#allocation4] sm:$0xff]
    %v1043 = vld [vmem:[#allocation5] sm:$0xff]
    %v1044 = vmul.f32 %v1043, %v1042
    %v1045 = vsel %vm859, %v1044, 0.0
    %1046 = vadd.xlane.f32.xlu0 %v1045
    %v1047 = vpop.xlane.xlu0 %1046
    %v1048 = vmax.f32 %v1047, -10.0
    %v1049 = vmin.f32 %v1048, 10.0
    %v1050 = vsub.f32 0.0, %v1049
    %v1051 = vmul.f32 %v1050, 1.442695
    %v1052 = vpow.pop %v1051
    %v1053 = vadd.f32 %v1052, 1.0
    %v1054 = vlog2.pop %v1053
    %v1055 = vmul.f32 %v1054, 0.6931472
    %v1056 = vmul.f32 -0.5, %v1052
    %v1057 = vadd.f32 %v1056, 1.0
    %v1058 = vmul.f32 %v1057, %v1052
    %v1059 = vand.u32 2147483647, %v1052
    %vm1060 = vcmp.lt.f32.partialorder %v1059, 0.0004427343
    %v1061 = vsel %vm1060, %v1058, %v1055
    %v1062 = vadd.f32 %v1061, 0.0
    %v1063 = vld [vmem:[#allocation5 + $0x8] sm:$0xff]
    %v1064 = vmul.f32 %v1063, %v1042
    %v1065 = vsel %vm859, %v1064, 0.0
    %1066 = vadd.xlane.f32.xlu0 %v1065
    %v1067 = vpop.xlane.xlu0 %1066
    %v1068 = vmax.f32 %v1067, -10.0
    %v1069 = vmin.f32 %v1068, 10.0
    %v1070 = vmul.f32 %v1069, 1.442695
    %v1071 = vpow.pop %v1070
    %v1072 = vadd.f32 %v1071, 1.0
    %v1073 = vlog2.pop %v1072
    %v1074 = vmul.f32 %v1073, 0.6931472
    %v1075 = vmul.f32 -0.5, %v1071
    %v1076 = vadd.f32 %v1075, 1.0
    %v1077 = vmul.f32 %v1076, %v1071
    %v1078 = vand.u32 2147483647, %v1071
    %vm1079 = vcmp.lt.f32.partialorder %v1078, 0.0004427343
    %v1080 = vsel %vm1079, %v1077, %v1074
    %v1081 = vadd.f32 %v1062, %v1080
    %v1082 = vld [vmem:[#allocation5 + $0x10] sm:$0xff]
    %v1083 = vmul.f32 %v1082, %v1042
    %v1084 = vsel %vm859, %v1083, 0.0
    %1085 = vadd.xlane.f32.xlu0 %v1084
    %v1086 = vpop.xlane.xlu0 %1085
    %v1087 = vmax.f32 %v1086, -10.0
    %v1088 = vmin.f32 %v1087, 10.0
    %v1089 = vmul.f32 %v1088, 1.442695
    %v1090 = vpow.pop %v1089
    %v1091 = vadd.f32 %v1090, 1.0
    %v1092 = vlog2.pop %v1091
    %v1093 = vmul.f32 %v1092, 0.6931472
    %v1094 = vmul.f32 -0.5, %v1090
    %v1095 = vadd.f32 %v1094, 1.0
    %v1096 = vmul.f32 %v1095, %v1090
    %v1097 = vand.u32 2147483647, %v1090
    %vm1098 = vcmp.lt.f32.partialorder %v1097, 0.0004427343
    %v1099 = vsel %vm1098, %v1096, %v1093
    %v1100 = vadd.f32 %v1081, %v1099
    %v1101 = vld [vmem:[#allocation5 + $0x18] sm:$0xff]
    %v1102 = vmul.f32 %v1101, %v1042
    %v1103 = vsel %vm859, %v1102, 0.0
    %1104 = vadd.xlane.f32.xlu0 %v1103
    %v1105 = vpop.xlane.xlu0 %1104
    %v1106 = vmax.f32 %v1105, -10.0
    %v1107 = vmin.f32 %v1106, 10.0
    %v1108 = vmul.f32 %v1107, 1.442695
    %v1109 = vpow.pop %v1108
    %v1110 = vadd.f32 %v1109, 1.0
    %v1111 = vlog2.pop %v1110
    %v1112 = vmul.f32 %v1111, 0.6931472
    %v1113 = vmul.f32 -0.5, %v1109
    %v1114 = vadd.f32 %v1113, 1.0
    %v1115 = vmul.f32 %v1114, %v1109
    %v1116 = vand.u32 2147483647, %v1109
    %vm1117 = vcmp.lt.f32.partialorder %v1116, 0.0004427343
    %v1118 = vsel %vm1117, %v1115, %v1112
    %v1119 = vadd.f32 %v1100, %v1118
    %v1120 = vld [vmem:[#allocation5 + $0x20] sm:$0xff]
    %v1121 = vmul.f32 %v1120, %v1042
    %v1122 = vsel %vm859, %v1121, 0.0
    %1123 = vadd.xlane.f32.xlu0 %v1122
    %v1124 = vpop.xlane.xlu0 %1123
    %v1125 = vmax.f32 %v1124, -10.0
    %v1126 = vmin.f32 %v1125, 10.0
    %v1127 = vmul.f32 %v1126, 1.442695
    %v1128 = vpow.pop %v1127
    %v1129 = vadd.f32 %v1128, 1.0
    %v1130 = vlog2.pop %v1129
    %v1131 = vmul.f32 %v1130, 0.6931472
    %v1132 = vmul.f32 -0.5, %v1128
    %v1133 = vadd.f32 %v1132, 1.0
    %v1134 = vmul.f32 %v1133, %v1128
    %v1135 = vand.u32 2147483647, %v1128
    %vm1136 = vcmp.lt.f32.partialorder %v1135, 0.0004427343
    %v1137 = vsel %vm1136, %v1134, %v1131
    %v1138 = vadd.f32 %v1119, %v1137
    %v1139 = vld [vmem:[#allocation5 + $0x28] sm:$0xff]
    %v1140 = vmul.f32 %v1139, %v1042
    %v1141 = vsel %vm859, %v1140, 0.0
    %1142 = vadd.xlane.f32.xlu0 %v1141
    %v1143 = vpop.xlane.xlu0 %1142
    %v1144 = vmax.f32 %v1143, -10.0
    %v1145 = vmin.f32 %v1144, 10.0
    %v1146 = vmul.f32 %v1145, 1.442695
    %v1147 = vpow.pop %v1146
    %v1148 = vadd.f32 %v1147, 1.0
    %v1149 = vlog2.pop %v1148
    %v1150 = vmul.f32 %v1149, 0.6931472
    %v1151 = vmul.f32 -0.5, %v1147
    %v1152 = vadd.f32 %v1151, 1.0
    %v1153 = vmul.f32 %v1152, %v1147
    %v1154 = vand.u32 2147483647, %v1147
    %vm1155 = vcmp.lt.f32.partialorder %v1154, 0.0004427343
    %v1156 = vsel %vm1155, %v1153, %v1150
    %v1157 = vadd.f32 %v1138, %v1156
    %v1158 = vld [vmem:[#allocation5 + $0x30] sm:$0xff]
    %v1159 = vmul.f32 %v1158, %v1042
    %v1160 = vsel %vm859, %v1159, 0.0
    %1161 = vadd.xlane.f32.xlu0 %v1160
    %v1162 = vpop.xlane.xlu0 %1161
    %v1163 = vmax.f32 %v1162, -10.0
    %v1164 = vmin.f32 %v1163, 10.0
    %v1165 = vmul.f32 %v1164, 1.442695
    %v1166 = vpow.pop %v1165
    %v1167 = vadd.f32 %v1166, 1.0
    %v1168 = vlog2.pop %v1167
    %v1169 = vmul.f32 %v1168, 0.6931472
    %v1170 = vmul.f32 -0.5, %v1166
    %v1171 = vadd.f32 %v1170, 1.0
    %v1172 = vmul.f32 %v1171, %v1166
    %v1173 = vand.u32 2147483647, %v1166
    %vm1174 = vcmp.lt.f32.partialorder %v1173, 0.0004427343
    %v1175 = vsel %vm1174, %v1172, %v1169
    %v1176 = vadd.f32 %v1157, %v1175
    %v1177 = vld [vmem:[#allocation5 + $0x38] sm:$0xff]
    %v1178 = vmul.f32 %v1177, %v1042
    %v1179 = vsel %vm859, %v1178, 0.0
    %1180 = vadd.xlane.f32.xlu0 %v1179
    %v1181 = vpop.xlane.xlu0 %1180
    %v1182 = vmax.f32 %v1181, -10.0
    %v1183 = vmin.f32 %v1182, 10.0
    %v1184 = vmul.f32 %v1183, 1.442695
    %v1185 = vpow.pop %v1184
    %v1186 = vadd.f32 %v1185, 1.0
    %v1187 = vlog2.pop %v1186
    %v1188 = vmul.f32 %v1187, 0.6931472
    %v1189 = vmul.f32 -0.5, %v1185
    %v1190 = vadd.f32 %v1189, 1.0
    %v1191 = vmul.f32 %v1190, %v1185
    %v1192 = vand.u32 2147483647, %v1185
    %vm1193 = vcmp.lt.f32.partialorder %v1192, 0.0004427343
    %v1194 = vsel %vm1193, %v1191, %v1188
    %v1195 = vadd.f32 %v1176, %v1194
    %v1196 = vld [vmem:[#allocation5 + $0x40] sm:$0xff]
    %v1197 = vmul.f32 %v1196, %v1042
    %v1198 = vsel %vm859, %v1197, 0.0
    %1199 = vadd.xlane.f32.xlu0 %v1198
    %v1200 = vpop.xlane.xlu0 %1199
    %v1201 = vmax.f32 %v1200, -10.0
    %v1202 = vmin.f32 %v1201, 10.0
    %v1203 = vmul.f32 %v1202, 1.442695
    %v1204 = vpow.pop %v1203
    %v1205 = vadd.f32 %v1204, 1.0
    %v1206 = vlog2.pop %v1205
    %v1207 = vmul.f32 %v1206, 0.6931472
    %v1208 = vmul.f32 -0.5, %v1204
    %v1209 = vadd.f32 %v1208, 1.0
    %v1210 = vmul.f32 %v1209, %v1204
    %v1211 = vand.u32 2147483647, %v1204
    %vm1212 = vcmp.lt.f32.partialorder %v1211, 0.0004427343
    %v1213 = vsel %vm1212, %v1210, %v1207
    %v1214 = vadd.f32 %v1195, %v1213
    %v1215 = vsel %vm855, %v1214, 0.0
    %v1216 = vsel %vm1031, %v1215, 0.0
    %1217 = vadd.xlane.f32.xlu0 %v1216
    %v1218 = vpop.xlane.xlu0 %1217
    %v1219 = vrot.slane %v1218, 4
    %v1220 = vadd.f32 %v1218, %v1219
    %v1221 = vrot.slane %v1220, 2
    %v1222 = vadd.f32 %v1220, %v1221
    %v1223 = vrot.slane %v1222, 1
    %v1224 = vadd.f32 %v1222, %v1223
    %s1225 = vtos %v1224
    %v1226 = vlaneseq
    %v1227 = vand.u32 %v1226, 127
    %vm1228 = vcmp.eq.s32.totalorder %v1227, 0
    %vm1229 = vcmp.eq.s32.totalorder %v1227, 1
    %v1230 = vstv %s1225
    %v1231 = vsel %vm1229, %v1230, 0.0
    %v1232 = vstv %s1041
    %v1233 = vsel %vm1228, %v1232, %v1231
    %1234 = vst [vmem:[#allocation12] sm:$0x1] %v1233
    // Predicated region
    $region616: #{tpu_custom_call.1} parent=1 // pred_check
      _
    $region617: #{tpu_custom_call.1} parent=1 // pred_check_branch
      %1236 = sbr.rel (0) target = $region619
    $region618: #{tpu_custom_call.1} parent=1 // pred_region
      %1238 = vsyncadd [#allocation13], 0
      %s1240 = sshll.u32 [#allocation12], 4
      %s1241 = int_to_ptr.vmem [resolvable:$true] %s1240
      %s1242 = sshll.u32 %s8, 4
      %s1243 = int_to_ptr.hbm [resolvable:$true] %s1242
      %1245 = dma.vmem_to_hbm [thread:$0]  %s1241, 16, %s1243, [#allocation13]
    $region619: #{tpu_custom_call.1} parent=1 // pred_fallthru
      _
    // Predicated region
    $region620: #{tpu_custom_call.1} parent=1 // pred_check
      _
    $region621: #{tpu_custom_call.1} parent=1 // pred_check_branch
      %1247 = sbr.rel (0) target = $region623
    $region622: #{tpu_custom_call.1} parent=1 // pred_region
      %1249 = dma.done [#allocation13], 16
    $region623: #{tpu_custom_call.1} parent=1 // pred_fallthru
      _
    %1250 = vsyncpa [#allocation13], 1
  %1251 = vsyncmov [#allocation6]
  %s1252 = vpop.sfrf %1251
  %p1253 = scmp.eq.s32.totalorder %s1252, 0
  %p1254 = pneg %p1253
  %1256 = shalt.err (%p1254)
  %s1257 = scalar_lea.sflag [#allocation6], 1
  %1258 = vsyncmov %s1257
  %s1259 = vpop.sfrf %1258
  %p1260 = scmp.eq.s32.totalorder %s1259, 0
  %p1261 = pneg %p1260
  %1263 = shalt.err (%p1261)

</llo_original>
